<compile_context>
chip_gen: v5e
topology: v5e:2x2
jax: 0.10.0
libtpu: 0.0.40
codegen_flags: <defaults>
</compile_context>

<pallas_src>
import functools

import jax
import jax.numpy as jnp
from jax.experimental import pallas as pl
from jax.experimental.pallas import tpu as pltpu

EPS = 1e-5       # BatchNorm3d default eps
LANE = 128       # pad output-channel dims to multiples of this


# --------------------------------------------------------------------------
# generation-aware budgets
# --------------------------------------------------------------------------
def _vmem_limit_bytes():
    # ~70% of physical VMEM, capped at 100 MiB (v5e/v6e: 128 MiB -> ~90 MiB;
    # v7x: 64 MiB -> ~45 MiB).
    try:
        cap = int(pltpu.get_tpu_info().vmem_capacity_bytes)
    except Exception:
        cap = 128 * 1024 * 1024
    return min(int(cap * 0.7), 100 * 1024 * 1024)


_VMEM_LIMIT = _vmem_limit_bytes()
_ROW_TILE_CAP = 1024 if _VMEM_LIMIT >= 64 * 1024 * 1024 else 512


# --------------------------------------------------------------------------
# small helpers
# --------------------------------------------------------------------------
def _ceil_to(x, m):
    return ((x + m - 1) // m) * m


def _pad_axis(a, axis, target):
    pad = target - a.shape[axis]
    if pad == 0:
        return a
    cfg = [(0, 0)] * a.ndim
    cfg[axis] = (0, pad)
    return jnp.pad(a, cfg)


def _pad_last(a, target):
    return _pad_axis(a, a.ndim - 1, target)


def _choose_tile(m, cap=None):
    """Largest row tile (multiple of 8, <= cap) dividing m; otherwise pad rows."""
    if cap is None:
        cap = _ROW_TILE_CAP
    for t in (2048, 1024, 512, 256, 128, 64, 32, 16, 8):
        if t <= cap and m % t == 0:
            return t, 0
    t = min(cap, 256)
    return t, (-m) % t


def _cparams(semantics):
    return pltpu.CompilerParams(dimension_semantics=semantics,
                                vmem_limit_bytes=_VMEM_LIMIT)


# --------------------------------------------------------------------------
# Kernel 1: BN1 statistics (tiled, per-tile partials, lane-densified)
# --------------------------------------------------------------------------
def _bn_stats_kernel(x_ref, sum_ref, sumsq_ref):
    x = x_ref[...]
    sum_ref[...] = jnp.sum(x, axis=0, keepdims=True)
    sumsq_ref[...] = jnp.sum(x * x, axis=0, keepdims=True)


def bn_stats(x2d):
    m_true, c = x2d.shape

    # Lane-densify when c << 128: fold rows into lanes so the reduction runs on
    # full vregs; the per-lane-group partials are combined in XLA below.
    fold = 1
    if c <= 64 and 128 % c == 0 and m_true % (128 // c) == 0:
        fold = 128 // c
    xf = x2d.reshape(m_true // fold, fold * c) if fold > 1 else x2d
    m_rows, cf = xf.shape

    tm, pad = _choose_tile(m_rows)
    if pad:
        # zero rows add nothing to sum / sumsq; divide by the true count below
        xf = jnp.pad(xf, ((0, pad), (0, 0)))
    m = m_rows + pad
    nt = m // tm

    s, ss = pl.pallas_call(
        _bn_stats_kernel,
        out_shape=(jax.ShapeDtypeStruct((nt, 1, cf), jnp.float32),
                   jax.ShapeDtypeStruct((nt, 1, cf), jnp.float32)),
        grid=(nt,),
        in_specs=[pl.BlockSpec((tm, cf), lambda i: (i, 0))],
        out_specs=(pl.BlockSpec((None, 1, cf), lambda i: (i, 0, 0)),
                   pl.BlockSpec((None, 1, cf), lambda i: (i, 0, 0))),
        compiler_params=_cparams(("parallel",)),
    )(xf)
    s = jnp.sum(s, axis=0)          # (1, cf)
    ss = jnp.sum(ss, axis=0)
    if fold > 1:
        s = jnp.sum(s.reshape(fold, c), axis=0, keepdims=True)
        ss = jnp.sum(ss.reshape(fold, c), axis=0, keepdims=True)
    inv = 1.0 / float(m_true)
    mean = s * inv
    var = jnp.maximum(ss * inv - mean * mean, 0.0)
    return mean, var


# --------------------------------------------------------------------------
# Kernel 2: BN1-affine + ReLU + conv1 (1x1x1, stride) + fused BN2 partial stats
# --------------------------------------------------------------------------
def _conv1_fused_kernel(x_ref, scale_ref, shift_ref, w_ref, b_ref,
                        y_ref, sum_ref, sumsq_ref, *, tm, valid_rows, masked):
    a = jnp.maximum(x_ref[...] * scale_ref[...] + shift_ref[...], 0.0)
    y = jnp.dot(a.astype(jnp.bfloat16), w_ref[...],
                preferred_element_type=jnp.float32) + b_ref[...]
    y_ref[...] = y
    if masked:   # exclude padded tail rows from the fused BN2 statistics
        row = (jax.lax.broadcasted_iota(jnp.int32, y.shape, 0)
               + pl.program_id(0) * tm)
        y = jnp.where(row < valid_rows, y, 0.0)
    sum_ref[...] = jnp.sum(y, axis=0, keepdims=True)
    sumsq_ref[...] = jnp.sum(y * y, axis=0, keepdims=True)


def conv1_fused(x2d, scale, shift, w_bf16, b):
    m_true, cin = x2d.shape
    cout = w_bf16.shape[1]
    tm, pad = _choose_tile(m_true)
    if pad:
        x2d = jnp.pad(x2d, ((0, pad), (0, 0)))
    m = m_true + pad
    nt = m // tm
    kernel = functools.partial(_conv1_fused_kernel, tm=tm,
                               valid_rows=m_true, masked=bool(pad))
    y, s, ss = pl.pallas_call(
        kernel,
        out_shape=(jax.ShapeDtypeStruct((m, cout), jnp.float32),
                   jax.ShapeDtypeStruct((nt, 1, cout), jnp.float32),
                   jax.ShapeDtypeStruct((nt, 1, cout), jnp.float32)),
        grid=(nt,),
        in_specs=[pl.BlockSpec((tm, cin), lambda i: (i, 0)),
                  pl.BlockSpec((1, cin), lambda i: (0, 0)),
                  pl.BlockSpec((1, cin), lambda i: (0, 0)),
                  pl.BlockSpec((cin, cout), lambda i: (0, 0)),
                  pl.BlockSpec((1, cout), lambda i: (0, 0))],
        out_specs=(pl.BlockSpec((tm, cout), lambda i: (i, 0)),
                   pl.BlockSpec((None, 1, cout), lambda i: (i, 0, 0)),
                   pl.BlockSpec((None, 1, cout), lambda i: (i, 0, 0))),
        # per-tile BN2 partials -> fully parallel grid (v7x megacore friendly)
        compiler_params=_cparams(("parallel",)),
    )(x2d, scale, shift, w_bf16, b)
    if pad:
        y = y[:m_true]
    return y, jnp.sum(s, axis=0), jnp.sum(ss, axis=0)


# --------------------------------------------------------------------------
# Kernel 3: BN2-affine + ReLU + conv2 (3x3x3, pad=1); 3 wide-K MXU matmuls per
#           output plane (no materialized im2col in HBM) + fused BN3 partials
# --------------------------------------------------------------------------
def _conv2_fused_kernel(p0_ref, p1_ref, p2_ref, scale_ref, shift_ref, w_ref,
                        b_ref, y_ref, sum_ref, sumsq_ref, *, ho, wo):
    di = pl.program_id(1)
    n_d = pl.num_programs(1)                 # number of output depth planes
    hp, wp, c = p0_ref.shape

    # Spatial border mask: conv zero-padding applies to relu(bn2(y1)), not to y1,
    # so the padded ring (zeros in y1p) must be forced to zero AFTER affine+ReLU.
    hh = jax.lax.broadcasted_iota(jnp.int32, (hp, wp), 0)
    ww = jax.lax.broadcasted_iota(jnp.int32, (hp, wp), 1)
    interior = jnp.logical_and(jnp.logical_and(hh > 0, hh < hp - 1),
                               jnp.logical_and(ww > 0, ww < wp - 1))
    interior = interior.astype(jnp.float32)[:, :, None]

    scale = scale_ref[...].reshape(1, 1, c)
    shift = shift_ref[...].reshape(1, 1, c)

    y_ref[...] = jnp.zeros_like(y_ref)
    for kd, p_ref in enumerate((p0_ref, p1_ref, p2_ref)):
        dg = di + kd                          # depth index in the padded volume

        @pl.when(jnp.logical_and(dg >= 1, dg <= n_d))   # skip all-pad depth planes
        def _(p_ref=p_ref, kd=kd):
            a = jnp.maximum(p_ref[...] * scale + shift, 0.0) * interior
            # one wide-K matmul per depth tap: concat the 9 (kh,kw) shifted
            # windows along the lane dim -> (ho*wo, 9*c) bf16 operand.
            wins = [a[kh:kh + ho, kw:kw + wo, :].reshape(ho * wo, c)
                    for kh in range(3) for kw in range(3)]
            opnd = jnp.concatenate(wins, axis=-1).astype(jnp.bfloat16)
            y_ref[...] += jnp.dot(opnd, w_ref[kd],
                                  preferred_element_type=jnp.float32)

    y = y_ref[...] + b_ref[...]
    y_ref[...] = y
    sum_ref[...] = jnp.sum(y, axis=0, keepdims=True)
    sumsq_ref[...] = jnp.sum(y * y, axis=0, keepdims=True)


def conv2_fused(y1_padded, scale, shift, w_bf16, b, n, do, ho, wo):
    """y1_padded: (n*(do+2), ho+2, wo+2, c), spatially/depth zero-padded y1 (the
    pad ring is masked / skipped inside the kernel).  w_bf16: (3, 9*c, f)."""
    dp, hp, wp = do + 2, ho + 2, wo + 2
    c = y1_padded.shape[-1]
    f = w_bf16.shape[-1]
    assert (ho * wo) % 8 == 0, "output plane row count must be a multiple of 8"
    # TODO(synk): add a row-padded fallback for ho*wo not divisible by 8.

    def plane_spec(kd):
        return pl.BlockSpec((None, hp, wp, c),
                            lambda ni, di, kd=kd, dp=dp: (ni * dp + di + kd, 0, 0, 0))

    kernel = functools.partial(_conv2_fused_kernel, ho=ho, wo=wo)
    y2, s, ss = pl.pallas_call(
        kernel,
        out_shape=(jax.ShapeDtypeStruct((n * do * ho * wo, f), jnp.float32),
                   jax.ShapeDtypeStruct((n * do, 1, f), jnp.float32),
                   jax.ShapeDtypeStruct((n * do, 1, f), jnp.float32)),
        grid=(n, do),
        in_specs=[plane_spec(0), plane_spec(1), plane_spec(2),
                  pl.BlockSpec((1, c), lambda ni, di: (0, 0)),
                  pl.BlockSpec((1, c), lambda ni, di: (0, 0)),
                  pl.BlockSpec((3, 9 * c, f), lambda ni, di: (0, 0, 0)),
                  pl.BlockSpec((1, f), lambda ni, di: (0, 0))],
        out_specs=(pl.BlockSpec((ho * wo, f),
                                lambda ni, di, do=do: (ni * do + di, 0)),
                   pl.BlockSpec((None, 1, f),
                                lambda ni, di, do=do: (ni * do + di, 0, 0)),
                   pl.BlockSpec((None, 1, f),
                                lambda ni, di, do=do: (ni * do + di, 0, 0))),
        # per-(n,d) BN3 partials -> both grid axes parallel (v7x megacore)
        compiler_params=_cparams(("parallel", "parallel")),
    )(y1_padded, y1_padded, y1_padded, scale, shift, w_bf16, b)
    return y2, jnp.sum(s, axis=0), jnp.sum(ss, axis=0)


# --------------------------------------------------------------------------
# Kernel 4: BN3-affine + ReLU + conv3 (1x1x1) + shortcut + residual add
# --------------------------------------------------------------------------
def _final_conv_sc_kernel(y_ref, scale_ref, shift_ref, w3_ref, xs_ref, wsc_ref,
                          b_ref, o_ref):
    a = jnp.maximum(y_ref[...] * scale_ref[...] + shift_ref[...], 0.0)
    o_ref[...] = (jnp.dot(a.astype(jnp.bfloat16), w3_ref[...],
                          preferred_element_type=jnp.float32)
                  + jnp.dot(xs_ref[...].astype(jnp.bfloat16), wsc_ref[...],
                            preferred_element_type=jnp.float32)
                  + b_ref[...])


def _final_identity_kernel(y_ref, scale_ref, shift_ref, w3_ref, b_ref, xs_ref,
                           o_ref):
    a = jnp.maximum(y_ref[...] * scale_ref[...] + shift_ref[...], 0.0)
    o_ref[...] = (jnp.dot(a.astype(jnp.bfloat16), w3_ref[...],
                          preferred_element_type=jnp.float32)
                  + b_ref[...] + xs_ref[...])


def final_conv_shortcut(y2d, scale, shift, w3_bf16, xs2d, wsc_bf16, bias):
    m_true, cmid = y2d.shape
    cin = xs2d.shape[1]
    c4 = w3_bf16.shape[1]
    tm, pad = _choose_tile(m_true)
    if pad:
        y2d = jnp.pad(y2d, ((0, pad), (0, 0)))
        xs2d = jnp.pad(xs2d, ((0, pad), (0, 0)))
    m = m_true + pad
    out = pl.pallas_call(
        _final_conv_sc_kernel,
        out_shape=jax.ShapeDtypeStruct((m, c4), jnp.float32),
        grid=(m // tm,),
        in_specs=[pl.BlockSpec((tm, cmid), lambda i: (i, 0)),
                  pl.BlockSpec((1, cmid), lambda i: (0, 0)),
                  pl.BlockSpec((1, cmid), lambda i: (0, 0)),
                  pl.BlockSpec((cmid, c4), lambda i: (0, 0)),
                  pl.BlockSpec((tm, cin), lambda i: (i, 0)),
                  pl.BlockSpec((cin, c4), lambda i: (0, 0)),
                  pl.BlockSpec((1, c4), lambda i: (0, 0))],
        out_specs=pl.BlockSpec((tm, c4), lambda i: (i, 0)),
        compiler_params=_cparams(("parallel",)),
    )(y2d, scale, shift, w3_bf16, xs2d, wsc_bf16, bias)
    return out[:m_true] if pad else out


def final_identity(y2d, scale, shift, w3_bf16, b3, xs2d):
    m_true, cmid = y2d.shape
    c4 = w3_bf16.shape[1]
    tm, pad = _choose_tile(m_true)
    if pad:
        y2d = jnp.pad(y2d, ((0, pad), (0, 0)))
        xs2d = jnp.pad(xs2d, ((0, pad), (0, 0)))
    m = m_true + pad
    out = pl.pallas_call(
        _final_identity_kernel,
        out_shape=jax.ShapeDtypeStruct((m, c4), jnp.float32),
        grid=(m // tm,),
        in_specs=[pl.BlockSpec((tm, cmid), lambda i: (i, 0)),
                  pl.BlockSpec((1, cmid), lambda i: (0, 0)),
                  pl.BlockSpec((1, cmid), lambda i: (0, 0)),
                  pl.BlockSpec((cmid, c4), lambda i: (0, 0)),
                  pl.BlockSpec((1, c4), lambda i: (0, 0)),
                  pl.BlockSpec((tm, c4), lambda i: (i, 0))],
        out_specs=pl.BlockSpec((tm, c4), lambda i: (i, 0)),
        compiler_params=_cparams(("parallel",)),
    )(y2d, scale, shift, w3_bf16, b3, xs2d)
    return out[:m_true] if pad else out


# --------------------------------------------------------------------------
# Parameters (PyTorch-module shapes, stored channels-last) and forward wrapper
# --------------------------------------------------------------------------
def init_params(key, in_channels, out_channels, stride):
    c4 = out_channels * 4
    ks = jax.random.split(key, 8)

    def w_init(k, shape, fan_in):
        return jax.random.normal(k, shape, jnp.float32) / jnp.sqrt(float(fan_in))

    p = dict(
        g1=jnp.ones((1, in_channels), jnp.float32),
        b1=jnp.zeros((1, in_channels), jnp.float32),
        g2=jnp.ones((1, out_channels), jnp.float32),
        b2=jnp.zeros((1, out_channels), jnp.float32),
        g3=jnp.ones((1, out_channels), jnp.float32),
        b3=jnp.zeros((1, out_channels), jnp.float32),
        w1=w_init(ks[0], (in_channels, out_channels), in_channels),
        bias1=w_init(ks[1], (1, out_channels), in_channels),
        w2=w_init(ks[2], (3, 3, 3, out_channels, out_channels), 27 * out_channels),
        bias2=w_init(ks[3], (1, out_channels), 27 * out_channels),
        w3=w_init(ks[4], (out_channels, c4), out_channels),
        bias3=w_init(ks[5], (1, c4), out_channels),
    )
    if stride != 1 or in_channels != c4:
        p["wsc"] = w_init(ks[6], (in_channels, c4), in_channels)
        p["biassc"] = w_init(ks[7], (1, c4), in_channels)
    return p


def preact_bottleneck(x_ncdhw, params, stride):
    n, cin, d, h, w = x_ncdhw.shape
    cmid = params["w1"].shape[1]
    c4 = params["w3"].shape[1]
    cmid_p = _ceil_to(cmid, LANE)     # lane-dense intermediate channel width
    c4_p = _ceil_to(c4, LANE)         # lane-dense output channel width

    x = jnp.transpose(x_ncdhw, (0, 2, 3, 4, 1)).astype(jnp.float32)   # NDHWC
    x2d = x.reshape(-1, cin)

    # ---- BN1 statistics (training-mode batch stats over all N,D,H,W) ----
    mean1, var1 = bn_stats(x2d)
    scale1 = params["g1"] / jnp.sqrt(var1 + EPS)
    shift1 = params["b1"] - mean1 * scale1

    # ---- stride subsample (exact for a 1x1x1 conv with stride, no padding) ----
    xs = x[:, ::stride, ::stride, ::stride, :]
    do, ho, wo = xs.shape[1], xs.shape[2], xs.shape[3]
    m_s = n * do * ho * wo
    xs2d = xs.reshape(m_s, cin)

    # ---- lane-pad parameters (padded channels stay exactly zero end-to-end);
    #      weights pre-cast to bf16 (MXU-native), biases / BN params stay f32 ----
    w1p = _pad_last(params["w1"], cmid_p).astype(jnp.bfloat16)
    b1p = _pad_last(params["bias1"], cmid_p)
    g2p = _pad_last(params["g2"], cmid_p)
    be2p = _pad_last(params["b2"], cmid_p)
    w2p = _pad_last(_pad_axis(params["w2"], 3, cmid_p), cmid_p)
    w2p = w2p.reshape(3, 9 * cmid_p, cmid_p).astype(jnp.bfloat16)
    b2p = _pad_last(params["bias2"], cmid_p)
    g3p = _pad_last(params["g3"], cmid_p)
    be3p = _pad_last(params["b3"], cmid_p)
    w3p = _pad_last(_pad_axis(params["w3"], 0, cmid_p), c4_p).astype(jnp.bfloat16)
    b3p = _pad_last(params["bias3"], c4_p)

    # ---- conv1: fused BN1-affine + ReLU + 1x1x1 conv (+ BN2 partial sums) ----
    y1, s2, ss2 = conv1_fused(xs2d, scale1, shift1, w1p, b1p)
    mean2 = s2 / float(m_s)
    var2 = jnp.maximum(ss2 / float(m_s) - mean2 * mean2, 0.0)
    scale2 = g2p / jnp.sqrt(var2 + EPS)
    shift2 = be2p - mean2 * scale2

    # ---- conv2: fused BN2-affine + ReLU + 3x3x3 conv (wide-K in-kernel taps) ----
    # TODO(synk): write conv1's output directly into this padded layout to save an
    #             extra HBM write+read of y1.
    y1p = jnp.pad(y1.reshape(n, do, ho, wo, cmid_p),
                  ((0, 0), (1, 1), (1, 1), (1, 1), (0, 0)))
    y1p = y1p.reshape(n * (do + 2), ho + 2, wo + 2, cmid_p)
    y2, s3, ss3 = conv2_fused(y1p, scale2, shift2, w2p, b2p, n, do, ho, wo)
    mean3 = s3 / float(m_s)
    var3 = jnp.maximum(ss3 / float(m_s) - mean3 * mean3, 0.0)
    scale3 = g3p / jnp.sqrt(var3 + EPS)
    shift3 = be3p - mean3 * scale3

    # ---- conv3 (1x1x1) + shortcut + residual add ----
    if "wsc" in params:
        wscp = _pad_last(params["wsc"], c4_p).astype(jnp.bfloat16)
        bscp = _pad_last(params["biassc"], c4_p)
        out2d = final_conv_shortcut(y2, scale3, shift3, w3p, xs2d, wscp,
                                    b3p + bscp)
    else:
        assert cin == c4, "identity shortcut requires in_channels == 4*out_channels"
        xs_id = _pad_last(xs2d, c4_p) if c4_p != c4 else xs2d
        out2d = final_identity(y2, scale3, shift3, w3p, b3p, xs_id)

    out = out2d.reshape(n, do, ho, wo, c4_p)[..., :c4]
    return jnp.transpose(out, (0, 4, 1, 2, 3))           # back to NCDHW


# --------------------------------------------------------------------------
# Pure-JAX reference (for a correctness check of the Pallas path)
# --------------------------------------------------------------------------
def reference_forward(x_ncdhw, params, stride):
    def bn_relu(x5, g, b):
        mean = jnp.mean(x5, axis=(0, 1, 2, 3), keepdims=True)
        var = jnp.var(x5, axis=(0, 1, 2, 3), keepdims=True)
        y = (x5 - mean) / jnp.sqrt(var + EPS)
        y = y * g.reshape(1, 1, 1, 1, -1) + b.reshape(1, 1, 1, 1, -1)
        return jax.nn.relu(y)

    x5 = jnp.transpose(x_ncdhw, (0, 2, 3, 4, 1))
    a1 = bn_relu(x5, params["g1"], params["b1"])
    y1 = jnp.einsum("ndhwc,cf->ndhwf",
                    a1[:, ::stride, ::stride, ::stride, :], params["w1"],
                    precision="highest") + params["bias1"].reshape(1, 1, 1, 1, -1)
    a2 = bn_relu(y1, params["g2"], params["b2"])
    y2 = jax.lax.conv_general_dilated(
        a2, params["w2"], window_strides=(1, 1, 1), padding=[(1, 1)] * 3,
        dimension_numbers=("NDHWC", "DHWIO", "NDHWC"),
        precision=jax.lax.Precision.HIGHEST)
    y2 = y2 + params["bias2"].reshape(1, 1, 1, 1, -1)
    a3 = bn_relu(y2, params["g3"], params["b3"])
    y3 = jnp.einsum("ndhwc,cf->ndhwf", a3, params["w3"],
                    precision="highest") + params["bias3"].reshape(1, 1, 1, 1, -1)
    if "wsc" in params:
        sc = jnp.einsum("ndhwc,cf->ndhwf",
                        x5[:, ::stride, ::stride, ::stride, :], params["wsc"],
                        precision="highest")
        sc = sc + params["biassc"].reshape(1, 1, 1, 1, -1)
    else:
        sc = x5[:, ::stride, ::stride, ::stride, :]
    return jnp.transpose(y3 + sc, (0, 4, 1, 2, 3))


# --------------------------------------------------------------------------
if __name__ == "__main__":
    key = jax.random.PRNGKey(0)
    k_x, k_p, k_x2, k_p2 = jax.random.split(key, 4)

    # Case 1: conv shortcut (stride=2, in_channels != 4*out_channels)
    N, CIN, D, H, W = 2, 8, 8, 8, 8
    OUT_CHANNELS, STRIDE = 4, 2
    x = jax.random.normal(k_x, (N, CIN, D, H, W), jnp.float32)
    params = init_params(k_p, CIN, OUT_CHANNELS, STRIDE)
    fwd = jax.jit(functools.partial(preact_bottleneck, stride=STRIDE))
    y = fwd(x, params)
    jax.block_until_ready(y)
    assert y.shape == (N, OUT_CHANNELS * 4, D // STRIDE, H // STRIDE, W // STRIDE)
    y_ref = reference_forward(x, params, STRIDE)
    err1 = float(jnp.max(jnp.abs(y - y_ref)))
    assert jnp.allclose(y, y_ref, rtol=5e-2, atol=5e-2), err1

    # Case 2: identity shortcut (stride=1, in_channels == 4*out_channels)
    CIN2, STRIDE2 = 16, 1
    x2 = jax.random.normal(k_x2, (N, CIN2, D, H, W), jnp.float32)
    params2 = init_params(k_p2, CIN2, OUT_CHANNELS, STRIDE2)
    fwd2 = jax.jit(functools.partial(preact_bottleneck, stride=STRIDE2))
    y2 = fwd2(x2, params2)
    jax.block_until_ready(y2)
    assert y2.shape == (N, OUT_CHANNELS * 4, D, H, W)
    y2_ref = reference_forward(x2, params2, STRIDE2)
    err2 = float(jnp.max(jnp.abs(y2 - y2_ref)))
    assert jnp.allclose(y2, y2_ref, rtol=5e-2, atol=5e-2), err2

    print("KERNEL_OK")
</pallas_src>

<mosaic_0001>
module attributes {stable_mosaic.version = 11 : i64} {
  func.func @_bn_stats_kernel(%arg0: i32, %arg1: memref<64x128xf32, #tpu.memory_space<vmem>>, %arg2: memref<1x1x128xf32, #tpu.memory_space<vmem>>, %arg3: memref<1x1x128xf32, #tpu.memory_space<vmem>>) attributes {dimension_semantics = [#tpu.dimension_semantics<parallel>], iteration_bounds = array<i64: 1>, scalar_prefetch = 0 : i64, scratch_operands = 0 : i64, tpu.core_type = #tpu.core_type<tc>, window_params = [{transform_indices = @transform_0, window_bounds = array<i64: 64, 128>}, {transform_indices = @transform_1, window_bounds = array<i64: 1, 1, 128>}, {transform_indices = @transform_2, window_bounds = array<i64: 1, 1, 128>}]} {
    %c0 = arith.constant 0 : index
    %c0_0 = arith.constant 0 : index
    %0 = vector.load %arg1[%c0, %c0_0] : memref<64x128xf32, #tpu.memory_space<vmem>>, vector<64x128xf32>
    %cst = arith.constant dense<0.000000e+00> : vector<128xf32>
    %1 = vector.multi_reduction <add>, %0, %cst [0] : vector<64x128xf32> to vector<128xf32>
    %2 = vector.shape_cast %1 : vector<128xf32> to vector<1x128xf32>
    %c0_1 = arith.constant 0 : index
    %c0_2 = arith.constant 0 : index
    %c0_3 = arith.constant 0 : index
    %3 = vector.load %arg2[%c0_1, %c0_2, %c0_3] : memref<1x1x128xf32, #tpu.memory_space<vmem>>, vector<1x1x128xf32>
    %4 = vector.shape_cast %3 : vector<1x1x128xf32> to vector<1x128xf32>
    %5 = vector.shape_cast %2 : vector<1x128xf32> to vector<1x1x128xf32>
    tpu.vector_store %arg2[%c0_1, %c0_2, %c0_3], %5 {strides = array<i32>} : memref<1x1x128xf32, #tpu.memory_space<vmem>>, vector<1x1x128xf32>,
    %6 = arith.mulf %0, %0 : vector<64x128xf32>
    %cst_4 = arith.constant dense<0.000000e+00> : vector<128xf32>
    %7 = vector.multi_reduction <add>, %6, %cst_4 [0] : vector<64x128xf32> to vector<128xf32>
    %8 = vector.shape_cast %7 : vector<128xf32> to vector<1x128xf32>
    %c0_5 = arith.constant 0 : index
    %c0_6 = arith.constant 0 : index
    %c0_7 = arith.constant 0 : index
    %9 = vector.load %arg3[%c0_5, %c0_6, %c0_7] : memref<1x1x128xf32, #tpu.memory_space<vmem>>, vector<1x1x128xf32>
    %10 = vector.shape_cast %9 : vector<1x1x128xf32> to vector<1x128xf32>
    %11 = vector.shape_cast %8 : vector<1x128xf32> to vector<1x1x128xf32>
    tpu.vector_store %arg3[%c0_5, %c0_6, %c0_7], %11 {strides = array<i32>} : memref<1x1x128xf32, #tpu.memory_space<vmem>>, vector<1x1x128xf32>,
    return
  }
  func.func @transform_0(%arg0: i32) -> (i32, i32) {
    %c0_i32 = arith.constant 0 : i32
    %c0_i32_0 = arith.constant 0 : i32
    return %arg0, %c0_i32 : i32, i32
  }
  func.func @transform_1(%arg0: i32) -> (i32, i32, i32) {
    %c0_i32 = arith.constant 0 : i32
    %c0_i32_0 = arith.constant 0 : i32
    %c0_i32_1 = arith.constant 0 : i32
    return %arg0, %c0_i32, %c0_i32_0 : i32, i32, i32
  }
  func.func @transform_2(%arg0: i32) -> (i32, i32, i32) {
    %c0_i32 = arith.constant 0 : i32
    %c0_i32_0 = arith.constant 0 : i32
    %c0_i32_1 = arith.constant 0 : i32
    return %arg0, %c0_i32, %c0_i32_0 : i32, i32, i32
  }
}

module attributes {stable_mosaic.version = 11 : i64} {
  func.func @_conv1_fused_kernel(%arg0: i32, %arg1: memref<128x8xf32, #tpu.memory_space<vmem>>, %arg2: memref<1x8xf32, #tpu.memory_space<vmem>>, %arg3: memref<1x8xf32, #tpu.memory_space<vmem>>, %arg4: memref<8x128xbf16, #tpu.memory_space<vmem>>, %arg5: memref<1x128xf32, #tpu.memory_space<vmem>>, %arg6: memref<128x128xf32, #tpu.memory_space<vmem>>, %arg7: memref<1x1x128xf32, #tpu.memory_space<vmem>>, %arg8: memref<1x1x128xf32, #tpu.memory_space<vmem>>) attributes {dimension_semantics = [#tpu.dimension_semantics<parallel>], iteration_bounds = array<i64: 1>, scalar_prefetch = 0 : i64, scratch_operands = 0 : i64, tpu.core_type = #tpu.core_type<tc>, window_params = [{transform_indices = @transform_0, window_bounds = array<i64: 128, 8>}, {pipeline_mode = #tpu.pipeline_mode<synchronous>, transform_indices = @transform_1, window_bounds = array<i64: 1, 8>}, {pipeline_mode = #tpu.pipeline_mode<synchronous>, transform_indices = @transform_2, window_bounds = array<i64: 1, 8>}, {pipeline_mode = #tpu.pipeline_mode<synchronous>, transform_indices = @transform_3, window_bounds = array<i64: 8, 128>}, {pipeline_mode = #tpu.pipeline_mode<synchronous>, transform_indices = @transform_4, window_bounds = array<i64: 1, 128>}, {transform_indices = @transform_5, window_bounds = array<i64: 128, 128>}, {transform_indices = @transform_6, window_bounds = array<i64: 1, 1, 128>}, {transform_indices = @transform_7, window_bounds = array<i64: 1, 1, 128>}]} {
    %c0 = arith.constant 0 : index
    %c0_0 = arith.constant 0 : index
    %0 = vector.load %arg1[%c0, %c0_0] : memref<128x8xf32, #tpu.memory_space<vmem>>, vector<128x8xf32>
    %c0_1 = arith.constant 0 : index
    %c0_2 = arith.constant 0 : index
    %1 = vector.load %arg2[%c0_1, %c0_2] : memref<1x8xf32, #tpu.memory_space<vmem>>, vector<1x8xf32>
    %2 = vector.broadcast %1 : vector<1x8xf32> to vector<128x8xf32>
    %3 = arith.mulf %0, %2 : vector<128x8xf32>
    %c0_3 = arith.constant 0 : index
    %c0_4 = arith.constant 0 : index
    %4 = vector.load %arg3[%c0_3, %c0_4] : memref<1x8xf32, #tpu.memory_space<vmem>>, vector<1x8xf32>
    %5 = vector.broadcast %4 : vector<1x8xf32> to vector<128x8xf32>
    %6 = arith.addf %3, %5 : vector<128x8xf32>
    %cst = arith.constant 0.000000e+00 : f32
    %7 = vector.broadcast %cst : f32 to vector<128x8xf32>
    %8 = arith.maximumf %6, %7 : vector<128x8xf32>
    %9 = arith.truncf %8 : vector<128x8xf32> to vector<128x8xbf16>
    %c0_5 = arith.constant 0 : index
    %c0_6 = arith.constant 0 : index
    %10 = vector.load %arg4[%c0_5, %c0_6] : memref<8x128xbf16, #tpu.memory_space<vmem>>, vector<8x128xbf16>
    %cst_7 = arith.constant dense<0.000000e+00> : vector<128x128xf32>
    %11 = tpu.matmul %9, %10, %cst_7 {dimension_numbers = #tpu.dot_dimension_numbers<[1], [0], [0], [1], [0, 0, 1, 1], [], []>} : vector<128x8xbf16>, vector<8x128xbf16>, vector<128x128xf32> -> vector<128x128xf32>
    %c0_8 = arith.constant 0 : index
    %c0_9 = arith.constant 0 : index
    %12 = vector.load %arg5[%c0_8, %c0_9] : memref<1x128xf32, #tpu.memory_space<vmem>>, vector<1x128xf32>
    %13 = vector.broadcast %12 : vector<1x128xf32> to vector<128x128xf32>
    %14 = arith.addf %11, %13 : vector<128x128xf32>
    %c0_10 = arith.constant 0 : index
    %c0_11 = arith.constant 0 : index
    %15 = vector.load %arg6[%c0_10, %c0_11] : memref<128x128xf32, #tpu.memory_space<vmem>>, vector<128x128xf32>
    tpu.vector_store %arg6[%c0_10, %c0_11], %14 {strides = array<i32>} : memref<128x128xf32, #tpu.memory_space<vmem>>, vector<128x128xf32>,
    %cst_12 = arith.constant dense<0.000000e+00> : vector<128xf32>
    %16 = vector.multi_reduction <add>, %14, %cst_12 [0] : vector<128x128xf32> to vector<128xf32>
    %17 = vector.shape_cast %16 : vector<128xf32> to vector<1x128xf32>
    %c0_13 = arith.constant 0 : index
    %c0_14 = arith.constant 0 : index
    %c0_15 = arith.constant 0 : index
    %18 = vector.load %arg7[%c0_13, %c0_14, %c0_15] : memref<1x1x128xf32, #tpu.memory_space<vmem>>, vector<1x1x128xf32>
    %19 = vector.shape_cast %18 : vector<1x1x128xf32> to vector<1x128xf32>
    %20 = vector.shape_cast %17 : vector<1x128xf32> to vector<1x1x128xf32>
    tpu.vector_store %arg7[%c0_13, %c0_14, %c0_15], %20 {strides = array<i32>} : memref<1x1x128xf32, #tpu.memory_space<vmem>>, vector<1x1x128xf32>,
    %21 = arith.mulf %14, %14 : vector<128x128xf32>
    %cst_16 = arith.constant dense<0.000000e+00> : vector<128xf32>
    %22 = vector.multi_reduction <add>, %21, %cst_16 [0] : vector<128x128xf32> to vector<128xf32>
    %23 = vector.shape_cast %22 : vector<128xf32> to vector<1x128xf32>
    %c0_17 = arith.constant 0 : index
    %c0_18 = arith.constant 0 : index
    %c0_19 = arith.constant 0 : index
    %24 = vector.load %arg8[%c0_17, %c0_18, %c0_19] : memref<1x1x128xf32, #tpu.memory_space<vmem>>, vector<1x1x128xf32>
    %25 = vector.shape_cast %24 : vector<1x1x128xf32> to vector<1x128xf32>
    %26 = vector.shape_cast %23 : vector<1x128xf32> to vector<1x1x128xf32>
    tpu.vector_store %arg8[%c0_17, %c0_18, %c0_19], %26 {strides = array<i32>} : memref<1x1x128xf32, #tpu.memory_space<vmem>>, vector<1x1x128xf32>,
    return
  }
  func.func @transform_0(%arg0: i32) -> (i32, i32) {
    %c0_i32 = arith.constant 0 : i32
    %c0_i32_0 = arith.constant 0 : i32
    return %arg0, %c0_i32 : i32, i32
  }
  func.func @transform_1(%arg0: i32) -> (i32, i32) {
    %c0_i32 = arith.constant 0 : i32
    %c0_i32_0 = arith.constant 0 : i32
    %c0_i32_1 = arith.constant 0 : i32
    return %c0_i32, %c0_i32_0 : i32, i32
  }
  func.func @transform_2(%arg0: i32) -> (i32, i32) {
    %c0_i32 = arith.constant 0 : i32
    %c0_i32_0 = arith.constant 0 : i32
    %c0_i32_1 = arith.constant 0 : i32
    return %c0_i32, %c0_i32_0 : i32, i32
  }
  func.func @transform_3(%arg0: i32) -> (i32, i32) {
    %c0_i32 = arith.constant 0 : i32
    %c0_i32_0 = arith.constant 0 : i32
    %c0_i32_1 = arith.constant 0 : i32
    return %c0_i32, %c0_i32_0 : i32, i32
  }
  func.func @transform_4(%arg0: i32) -> (i32, i32) {
    %c0_i32 = arith.constant 0 : i32
    %c0_i32_0 = arith.constant 0 : i32
    %c0_i32_1 = arith.constant 0 : i32
    return %c0_i32, %c0_i32_0 : i32, i32
  }
  func.func @transform_5(%arg0: i32) -> (i32, i32) {
    %c0_i32 = arith.constant 0 : i32
    %c0_i32_0 = arith.constant 0 : i32
    return %arg0, %c0_i32 : i32, i32
  }
  func.func @transform_6(%arg0: i32) -> (i32, i32, i32) {
    %c0_i32 = arith.constant 0 : i32
    %c0_i32_0 = arith.constant 0 : i32
    %c0_i32_1 = arith.constant 0 : i32
    return %arg0, %c0_i32, %c0_i32_0 : i32, i32, i32
  }
  func.func @transform_7(%arg0: i32) -> (i32, i32, i32) {
    %c0_i32 = arith.constant 0 : i32
    %c0_i32_0 = arith.constant 0 : i32
    %c0_i32_1 = arith.constant 0 : i32
    return %arg0, %c0_i32, %c0_i32_0 : i32, i32, i32
  }
}

module attributes {stable_mosaic.version = 11 : i64} {
  func.func @_conv2_fused_kernel(%arg0: i32, %arg1: i32, %arg2: memref<1x6x6x128xf32, #tpu.memory_space<vmem>>, %arg3: memref<1x6x6x128xf32, #tpu.memory_space<vmem>>, %arg4: memref<1x6x6x128xf32, #tpu.memory_space<vmem>>, %arg5: memref<1x128xf32, #tpu.memory_space<vmem>>, %arg6: memref<1x128xf32, #tpu.memory_space<vmem>>, %arg7: memref<3x1152x128xbf16, #tpu.memory_space<vmem>>, %arg8: memref<1x128xf32, #tpu.memory_space<vmem>>, %arg9: memref<16x128xf32, #tpu.memory_space<vmem>>, %arg10: memref<1x1x128xf32, #tpu.memory_space<vmem>>, %arg11: memref<1x1x128xf32, #tpu.memory_space<vmem>>) attributes {dimension_semantics = [#tpu.dimension_semantics<parallel>, #tpu.dimension_semantics<parallel>], iteration_bounds = array<i64: 2, 4>, scalar_prefetch = 0 : i64, scratch_operands = 0 : i64, tpu.core_type = #tpu.core_type<tc>, window_params = [{transform_indices = @transform_0, window_bounds = array<i64: 1, 6, 6, 128>}, {transform_indices = @transform_1, window_bounds = array<i64: 1, 6, 6, 128>}, {transform_indices = @transform_2, window_bounds = array<i64: 1, 6, 6, 128>}, {pipeline_mode = #tpu.pipeline_mode<synchronous>, transform_indices = @transform_3, window_bounds = array<i64: 1, 128>}, {pipeline_mode = #tpu.pipeline_mode<synchronous>, transform_indices = @transform_4, window_bounds = array<i64: 1, 128>}, {pipeline_mode = #tpu.pipeline_mode<synchronous>, transform_indices = @transform_5, window_bounds = array<i64: 3, 1152, 128>}, {pipeline_mode = #tpu.pipeline_mode<synchronous>, transform_indices = @transform_6, window_bounds = array<i64: 1, 128>}, {transform_indices = @transform_7, window_bounds = array<i64: 16, 128>}, {transform_indices = @transform_8, window_bounds = array<i64: 1, 1, 128>}, {transform_indices = @transform_9, window_bounds = array<i64: 1, 1, 128>}]} {
    %0 = tpu.iota {dimensions = array<i32: 0>} : vector<6x6xi32>
    %1 = tpu.iota {dimensions = array<i32: 1>} : vector<6x6xi32>
    %c0_i32 = arith.constant 0 : i32
    %2 = vector.broadcast %c0_i32 : i32 to vector<6x6xi32>
    %3 = arith.cmpi sgt, %0, %2 : vector<6x6xi32>
    %c5_i32 = arith.constant 5 : i32
    %4 = vector.broadcast %c5_i32 : i32 to vector<6x6xi32>
    %5 = arith.cmpi slt, %0, %4 : vector<6x6xi32>
    %6 = arith.andi %3, %5 : vector<6x6xi1>
    %c0_i32_0 = arith.constant 0 : i32
    %7 = vector.broadcast %c0_i32_0 : i32 to vector<6x6xi32>
    %8 = arith.cmpi sgt, %1, %7 : vector<6x6xi32>
    %c5_i32_1 = arith.constant 5 : i32
    %9 = vector.broadcast %c5_i32_1 : i32 to vector<6x6xi32>
    %10 = arith.cmpi slt, %1, %9 : vector<6x6xi32>
    %11 = arith.andi %8, %10 : vector<6x6xi1>
    %12 = arith.andi %6, %11 : vector<6x6xi1>
    %13 = arith.extui %12 : vector<6x6xi1> to vector<6x6xi32>
    %14 = arith.sitofp %13 : vector<6x6xi32> to vector<6x6xf32>
    %15 = vector.shape_cast %14 : vector<6x6xf32> to vector<6x6x1xf32>
    %c0 = arith.constant 0 : index
    %c0_2 = arith.constant 0 : index
    %16 = vector.load %arg5[%c0, %c0_2] : memref<1x128xf32, #tpu.memory_space<vmem>>, vector<1x128xf32>
    %17 = vector.shape_cast %16 : vector<1x128xf32> to vector<1x1x128xf32>
    %c0_3 = arith.constant 0 : index
    %c0_4 = arith.constant 0 : index
    %18 = vector.load %arg6[%c0_3, %c0_4] : memref<1x128xf32, #tpu.memory_space<vmem>>, vector<1x128xf32>
    %19 = vector.shape_cast %18 : vector<1x128xf32> to vector<1x1x128xf32>
    %cst = arith.constant 0.000000e+00 : f32
    %20 = vector.broadcast %cst : f32 to vector<16x128xf32>
    %c0_5 = arith.constant 0 : index
    %c0_6 = arith.constant 0 : index
    %21 = vector.load %arg9[%c0_5, %c0_6] : memref<16x128xf32, #tpu.memory_space<vmem>>, vector<16x128xf32>
    tpu.vector_store %arg9[%c0_5, %c0_6], %20 {strides = array<i32>} : memref<16x128xf32, #tpu.memory_space<vmem>>, vector<16x128xf32>,
    %c0_i32_7 = arith.constant 0 : i32
    %22 = arith.addi %arg1, %c0_i32_7 : i32
    %c1_i32 = arith.constant 1 : i32
    %23 = arith.cmpi sge, %22, %c1_i32 : i32
    %c4_i32 = arith.constant 4 : i32
    %24 = arith.cmpi sle, %22, %c4_i32 : i32
    %25 = arith.andi %23, %24 : i1
    %26 = arith.extui %25 : i1 to i32
    %c0_i32_8 = arith.constant 0 : i32
    %27 = arith.cmpi ne, %26, %c0_i32_8 : i32
    scf.if %27 {
      %c0_30 = arith.constant 0 : index
      %c0_31 = arith.constant 0 : index
      %c0_32 = arith.constant 0 : index
      %c0_33 = arith.constant 0 : index
      %56 = vector.load %arg2[%c0_30, %c0_31, %c0_32, %c0_33] : memref<1x6x6x128xf32, #tpu.memory_space<vmem>>, vector<1x6x6x128xf32>
      %57 = vector.shape_cast %56 : vector<1x6x6x128xf32> to vector<6x6x128xf32>
      %58 = vector.broadcast %17 : vector<1x1x128xf32> to vector<6x6x128xf32>
      %59 = arith.mulf %57, %58 : vector<6x6x128xf32>
      %60 = vector.broadcast %19 : vector<1x1x128xf32> to vector<6x6x128xf32>
      %61 = arith.addf %59, %60 : vector<6x6x128xf32>
      %cst_34 = arith.constant 0.000000e+00 : f32
      %62 = vector.broadcast %cst_34 : f32 to vector<6x6x128xf32>
      %63 = arith.maximumf %61, %62 : vector<6x6x128xf32>
      %64 = vector.broadcast %15 : vector<6x6x1xf32> to vector<6x6x128xf32>
      %65 = arith.mulf %63, %64 : vector<6x6x128xf32>
      %66 = vector.extract_strided_slice %65 {offsets = [0, 0, 0], sizes = [4, 4, 128], strides = [1, 1, 1]} : vector<6x6x128xf32> to vector<4x4x128xf32>
      %67 = vector.shape_cast %66 : vector<4x4x128xf32> to vector<16x128xf32>
      %68 = vector.extract_strided_slice %65 {offsets = [0, 1, 0], sizes = [4, 4, 128], strides = [1, 1, 1]} : vector<6x6x128xf32> to vector<4x4x128xf32>
      %69 = vector.shape_cast %68 : vector<4x4x128xf32> to vector<16x128xf32>
      %70 = vector.extract_strided_slice %65 {offsets = [0, 2, 0], sizes = [4, 4, 128], strides = [1, 1, 1]} : vector<6x6x128xf32> to vector<4x4x128xf32>
      %71 = vector.shape_cast %70 : vector<4x4x128xf32> to vector<16x128xf32>
      %72 = vector.extract_strided_slice %65 {offsets = [1, 0, 0], sizes = [4, 4, 128], strides = [1, 1, 1]} : vector<6x6x128xf32> to vector<4x4x128xf32>
      %73 = vector.shape_cast %72 : vector<4x4x128xf32> to vector<16x128xf32>
      %74 = vector.extract_strided_slice %65 {offsets = [1, 1, 0], sizes = [4, 4, 128], strides = [1, 1, 1]} : vector<6x6x128xf32> to vector<4x4x128xf32>
      %75 = vector.shape_cast %74 : vector<4x4x128xf32> to vector<16x128xf32>
      %76 = vector.extract_strided_slice %65 {offsets = [1, 2, 0], sizes = [4, 4, 128], strides = [1, 1, 1]} : vector<6x6x128xf32> to vector<4x4x128xf32>
      %77 = vector.shape_cast %76 : vector<4x4x128xf32> to vector<16x128xf32>
      %78 = vector.extract_strided_slice %65 {offsets = [2, 0, 0], sizes = [4, 4, 128], strides = [1, 1, 1]} : vector<6x6x128xf32> to vector<4x4x128xf32>
      %79 = vector.shape_cast %78 : vector<4x4x128xf32> to vector<16x128xf32>
      %80 = vector.extract_strided_slice %65 {offsets = [2, 1, 0], sizes = [4, 4, 128], strides = [1, 1, 1]} : vector<6x6x128xf32> to vector<4x4x128xf32>
      %81 = vector.shape_cast %80 : vector<4x4x128xf32> to vector<16x128xf32>
      %82 = vector.extract_strided_slice %65 {offsets = [2, 2, 0], sizes = [4, 4, 128], strides = [1, 1, 1]} : vector<6x6x128xf32> to vector<4x4x128xf32>
      %83 = vector.shape_cast %82 : vector<4x4x128xf32> to vector<16x128xf32>
      %84 = tpu.concatenate %67, %69, %71, %73, %75, %77, %79, %81, %83 in 1 : vector<16x128xf32>, vector<16x128xf32>, vector<16x128xf32>, vector<16x128xf32>, vector<16x128xf32>, vector<16x128xf32>, vector<16x128xf32>, vector<16x128xf32>, vector<16x128xf32> -> vector<16x1152xf32>
      %85 = arith.truncf %84 : vector<16x1152xf32> to vector<16x1152xbf16>
      %c0_35 = arith.constant 0 : index
      %c0_36 = arith.constant 0 : index
      %86 = vector.load %arg9[%c0_35, %c0_36] : memref<16x128xf32, #tpu.memory_space<vmem>>, vector<16x128xf32>
      %c0_37 = arith.constant 0 : index
      %c0_38 = arith.constant 0 : index
      %c0_39 = arith.constant 0 : index
      %87 = vector.load %arg7[%c0_37, %c0_38, %c0_39] : memref<3x1152x128xbf16, #tpu.memory_space<vmem>>, vector<1x1152x128xbf16>
      %88 = vector.shape_cast %87 : vector<1x1152x128xbf16> to vector<1152x128xbf16>
      %cst_40 = arith.constant dense<0.000000e+00> : vector<16x128xf32>
      %89 = tpu.matmul %85, %88, %cst_40 {dimension_numbers = #tpu.dot_dimension_numbers<[1], [0], [0], [1], [0, 0, 1, 1], [], []>} : vector<16x1152xbf16>, vector<1152x128xbf16>, vector<16x128xf32> -> vector<16x128xf32>
      %90 = arith.addf %86, %89 : vector<16x128xf32>
      %c0_41 = arith.constant 0 : index
      %c0_42 = arith.constant 0 : index
      %91 = vector.load %arg9[%c0_41, %c0_42] : memref<16x128xf32, #tpu.memory_space<vmem>>, vector<16x128xf32>
      tpu.vector_store %arg9[%c0_41, %c0_42], %90 {strides = array<i32>} : memref<16x128xf32, #tpu.memory_space<vmem>>, vector<16x128xf32>,
    } else {
    }
    %c1_i32_9 = arith.constant 1 : i32
    %28 = arith.addi %arg1, %c1_i32_9 : i32
    %c1_i32_10 = arith.constant 1 : i32
    %29 = arith.cmpi sge, %28, %c1_i32_10 : i32
    %c4_i32_11 = arith.constant 4 : i32
    %30 = arith.cmpi sle, %28, %c4_i32_11 : i32
    %31 = arith.andi %29, %30 : i1
    %32 = arith.extui %31 : i1 to i32
    %c0_i32_12 = arith.constant 0 : i32
    %33 = arith.cmpi ne, %32, %c0_i32_12 : i32
    scf.if %33 {
      %c0_30 = arith.constant 0 : index
      %c0_31 = arith.constant 0 : index
      %c0_32 = arith.constant 0 : index
      %c0_33 = arith.constant 0 : index
      %56 = vector.load %arg3[%c0_30, %c0_31, %c0_32, %c0_33] : memref<1x6x6x128xf32, #tpu.memory_space<vmem>>, vector<1x6x6x128xf32>
      %57 = vector.shape_cast %56 : vector<1x6x6x128xf32> to vector<6x6x128xf32>
      %58 = vector.broadcast %17 : vector<1x1x128xf32> to vector<6x6x128xf32>
      %59 = arith.mulf %57, %58 : vector<6x6x128xf32>
      %60 = vector.broadcast %19 : vector<1x1x128xf32> to vector<6x6x128xf32>
      %61 = arith.addf %59, %60 : vector<6x6x128xf32>
      %cst_34 = arith.constant 0.000000e+00 : f32
      %62 = vector.broadcast %cst_34 : f32 to vector<6x6x128xf32>
      %63 = arith.maximumf %61, %62 : vector<6x6x128xf32>
      %64 = vector.broadcast %15 : vector<6x6x1xf32> to vector<6x6x128xf32>
      %65 = arith.mulf %63, %64 : vector<6x6x128xf32>
      %66 = vector.extract_strided_slice %65 {offsets = [0, 0, 0], sizes = [4, 4, 128], strides = [1, 1, 1]} : vector<6x6x128xf32> to vector<4x4x128xf32>
      %67 = vector.shape_cast %66 : vector<4x4x128xf32> to vector<16x128xf32>
      %68 = vector.extract_strided_slice %65 {offsets = [0, 1, 0], sizes = [4, 4, 128], strides = [1, 1, 1]} : vector<6x6x128xf32> to vector<4x4x128xf32>
      %69 = vector.shape_cast %68 : vector<4x4x128xf32> to vector<16x128xf32>
      %70 = vector.extract_strided_slice %65 {offsets = [0, 2, 0], sizes = [4, 4, 128], strides = [1, 1, 1]} : vector<6x6x128xf32> to vector<4x4x128xf32>
      %71 = vector.shape_cast %70 : vector<4x4x128xf32> to vector<16x128xf32>
      %72 = vector.extract_strided_slice %65 {offsets = [1, 0, 0], sizes = [4, 4, 128], strides = [1, 1, 1]} : vector<6x6x128xf32> to vector<4x4x128xf32>
      %73 = vector.shape_cast %72 : vector<4x4x128xf32> to vector<16x128xf32>
      %74 = vector.extract_strided_slice %65 {offsets = [1, 1, 0], sizes = [4, 4, 128], strides = [1, 1, 1]} : vector<6x6x128xf32> to vector<4x4x128xf32>
      %75 = vector.shape_cast %74 : vector<4x4x128xf32> to vector<16x128xf32>
      %76 = vector.extract_strided_slice %65 {offsets = [1, 2, 0], sizes = [4, 4, 128], strides = [1, 1, 1]} : vector<6x6x128xf32> to vector<4x4x128xf32>
      %77 = vector.shape_cast %76 : vector<4x4x128xf32> to vector<16x128xf32>
      %78 = vector.extract_strided_slice %65 {offsets = [2, 0, 0], sizes = [4, 4, 128], strides = [1, 1, 1]} : vector<6x6x128xf32> to vector<4x4x128xf32>
      %79 = vector.shape_cast %78 : vector<4x4x128xf32> to vector<16x128xf32>
      %80 = vector.extract_strided_slice %65 {offsets = [2, 1, 0], sizes = [4, 4, 128], strides = [1, 1, 1]} : vector<6x6x128xf32> to vector<4x4x128xf32>
      %81 = vector.shape_cast %80 : vector<4x4x128xf32> to vector<16x128xf32>
      %82 = vector.extract_strided_slice %65 {offsets = [2, 2, 0], sizes = [4, 4, 128], strides = [1, 1, 1]} : vector<6x6x128xf32> to vector<4x4x128xf32>
      %83 = vector.shape_cast %82 : vector<4x4x128xf32> to vector<16x128xf32>
      %84 = tpu.concatenate %67, %69, %71, %73, %75, %77, %79, %81, %83 in 1 : vector<16x128xf32>, vector<16x128xf32>, vector<16x128xf32>, vector<16x128xf32>, vector<16x128xf32>, vector<16x128xf32>, vector<16x128xf32>, vector<16x128xf32>, vector<16x128xf32> -> vector<16x1152xf32>
      %85 = arith.truncf %84 : vector<16x1152xf32> to vector<16x1152xbf16>
      %c0_35 = arith.constant 0 : index
      %c0_36 = arith.constant 0 : index
      %86 = vector.load %arg9[%c0_35, %c0_36] : memref<16x128xf32, #tpu.memory_space<vmem>>, vector<16x128xf32>
      %c1 = arith.constant 1 : index
      %c0_37 = arith.constant 0 : index
      %c0_38 = arith.constant 0 : index
      %87 = vector.load %arg7[%c1, %c0_37, %c0_38] : memref<3x1152x128xbf16, #tpu.memory_space<vmem>>, vector<1x1152x128xbf16>
      %88 = vector.shape_cast %87 : vector<1x1152x128xbf16> to vector<1152x128xbf16>
      %cst_39 = arith.constant dense<0.000000e+00> : vector<16x128xf32>
      %89 = tpu.matmul %85, %88, %cst_39 {dimension_numbers = #tpu.dot_dimension_numbers<[1], [0], [0], [1], [0, 0, 1, 1], [], []>} : vector<16x1152xbf16>, vector<1152x128xbf16>, vector<16x128xf32> -> vector<16x128xf32>
      %90 = arith.addf %86, %89 : vector<16x128xf32>
      %c0_40 = arith.constant 0 : index
      %c0_41 = arith.constant 0 : index
      %91 = vector.load %arg9[%c0_40, %c0_41] : memref<16x128xf32, #tpu.memory_space<vmem>>, vector<16x128xf32>
      tpu.vector_store %arg9[%c0_40, %c0_41], %90 {strides = array<i32>} : memref<16x128xf32, #tpu.memory_space<vmem>>, vector<16x128xf32>,
    } else {
    }
    %c2_i32 = arith.constant 2 : i32
    %34 = arith.addi %arg1, %c2_i32 : i32
    %c1_i32_13 = arith.constant 1 : i32
    %35 = arith.cmpi sge, %34, %c1_i32_13 : i32
    %c4_i32_14 = arith.constant 4 : i32
    %36 = arith.cmpi sle, %34, %c4_i32_14 : i32
    %37 = arith.andi %35, %36 : i1
    %38 = arith.extui %37 : i1 to i32
    %c0_i32_15 = arith.constant 0 : i32
    %39 = arith.cmpi ne, %38, %c0_i32_15 : i32
    scf.if %39 {
      %c0_30 = arith.constant 0 : index
      %c0_31 = arith.constant 0 : index
      %c0_32 = arith.constant 0 : index
      %c0_33 = arith.constant 0 : index
      %56 = vector.load %arg4[%c0_30, %c0_31, %c0_32, %c0_33] : memref<1x6x6x128xf32, #tpu.memory_space<vmem>>, vector<1x6x6x128xf32>
      %57 = vector.shape_cast %56 : vector<1x6x6x128xf32> to vector<6x6x128xf32>
      %58 = vector.broadcast %17 : vector<1x1x128xf32> to vector<6x6x128xf32>
      %59 = arith.mulf %57, %58 : vector<6x6x128xf32>
      %60 = vector.broadcast %19 : vector<1x1x128xf32> to vector<6x6x128xf32>
      %61 = arith.addf %59, %60 : vector<6x6x128xf32>
      %cst_34 = arith.constant 0.000000e+00 : f32
      %62 = vector.broadcast %cst_34 : f32 to vector<6x6x128xf32>
      %63 = arith.maximumf %61, %62 : vector<6x6x128xf32>
      %64 = vector.broadcast %15 : vector<6x6x1xf32> to vector<6x6x128xf32>
      %65 = arith.mulf %63, %64 : vector<6x6x128xf32>
      %66 = vector.extract_strided_slice %65 {offsets = [0, 0, 0], sizes = [4, 4, 128], strides = [1, 1, 1]} : vector<6x6x128xf32> to vector<4x4x128xf32>
      %67 = vector.shape_cast %66 : vector<4x4x128xf32> to vector<16x128xf32>
      %68 = vector.extract_strided_slice %65 {offsets = [0, 1, 0], sizes = [4, 4, 128], strides = [1, 1, 1]} : vector<6x6x128xf32> to vector<4x4x128xf32>
      %69 = vector.shape_cast %68 : vector<4x4x128xf32> to vector<16x128xf32>
      %70 = vector.extract_strided_slice %65 {offsets = [0, 2, 0], sizes = [4, 4, 128], strides = [1, 1, 1]} : vector<6x6x128xf32> to vector<4x4x128xf32>
      %71 = vector.shape_cast %70 : vector<4x4x128xf32> to vector<16x128xf32>
      %72 = vector.extract_strided_slice %65 {offsets = [1, 0, 0], sizes = [4, 4, 128], strides = [1, 1, 1]} : vector<6x6x128xf32> to vector<4x4x128xf32>
      %73 = vector.shape_cast %72 : vector<4x4x128xf32> to vector<16x128xf32>
      %74 = vector.extract_strided_slice %65 {offsets = [1, 1, 0], sizes = [4, 4, 128], strides = [1, 1, 1]} : vector<6x6x128xf32> to vector<4x4x128xf32>
      %75 = vector.shape_cast %74 : vector<4x4x128xf32> to vector<16x128xf32>
      %76 = vector.extract_strided_slice %65 {offsets = [1, 2, 0], sizes = [4, 4, 128], strides = [1, 1, 1]} : vector<6x6x128xf32> to vector<4x4x128xf32>
      %77 = vector.shape_cast %76 : vector<4x4x128xf32> to vector<16x128xf32>
      %78 = vector.extract_strided_slice %65 {offsets = [2, 0, 0], sizes = [4, 4, 128], strides = [1, 1, 1]} : vector<6x6x128xf32> to vector<4x4x128xf32>
      %79 = vector.shape_cast %78 : vector<4x4x128xf32> to vector<16x128xf32>
      %80 = vector.extract_strided_slice %65 {offsets = [2, 1, 0], sizes = [4, 4, 128], strides = [1, 1, 1]} : vector<6x6x128xf32> to vector<4x4x128xf32>
      %81 = vector.shape_cast %80 : vector<4x4x128xf32> to vector<16x128xf32>
      %82 = vector.extract_strided_slice %65 {offsets = [2, 2, 0], sizes = [4, 4, 128], strides = [1, 1, 1]} : vector<6x6x128xf32> to vector<4x4x128xf32>
      %83 = vector.shape_cast %82 : vector<4x4x128xf32> to vector<16x128xf32>
      %84 = tpu.concatenate %67, %69, %71, %73, %75, %77, %79, %81, %83 in 1 : vector<16x128xf32>, vector<16x128xf32>, vector<16x128xf32>, vector<16x128xf32>, vector<16x128xf32>, vector<16x128xf32>, vector<16x128xf32>, vector<16x128xf32>, vector<16x128xf32> -> vector<16x1152xf32>
      %85 = arith.truncf %84 : vector<16x1152xf32> to vector<16x1152xbf16>
      %c0_35 = arith.constant 0 : index
      %c0_36 = arith.constant 0 : index
      %86 = vector.load %arg9[%c0_35, %c0_36] : memref<16x128xf32, #tpu.memory_space<vmem>>, vector<16x128xf32>
      %c2 = arith.constant 2 : index
      %c0_37 = arith.constant 0 : index
      %c0_38 = arith.constant 0 : index
      %87 = vector.load %arg7[%c2, %c0_37, %c0_38] : memref<3x1152x128xbf16, #tpu.memory_space<vmem>>, vector<1x1152x128xbf16>
      %88 = vector.shape_cast %87 : vector<1x1152x128xbf16> to vector<1152x128xbf16>
      %cst_39 = arith.constant dense<0.000000e+00> : vector<16x128xf32>
      %89 = tpu.matmul %85, %88, %cst_39 {dimension_numbers = #tpu.dot_dimension_numbers<[1], [0], [0], [1], [0, 0, 1, 1], [], []>} : vector<16x1152xbf16>, vector<1152x128xbf16>, vector<16x128xf32> -> vector<16x128xf32>
      %90 = arith.addf %86, %89 : vector<16x128xf32>
      %c0_40 = arith.constant 0 : index
      %c0_41 = arith.constant 0 : index
      %91 = vector.load %arg9[%c0_40, %c0_41] : memref<16x128xf32, #tpu.memory_space<vmem>>, vector<16x128xf32>
      tpu.vector_store %arg9[%c0_40, %c0_41], %90 {strides = array<i32>} : memref<16x128xf32, #tpu.memory_space<vmem>>, vector<16x128xf32>,
    } else {
    }
    %c0_16 = arith.constant 0 : index
    %c0_17 = arith.constant 0 : index
    %40 = vector.load %arg9[%c0_16, %c0_17] : memref<16x128xf32, #tpu.memory_space<vmem>>, vector<16x128xf32>
    %c0_18 = arith.constant 0 : index
    %c0_19 = arith.constant 0 : index
    %41 = vector.load %arg8[%c0_18, %c0_19] : memref<1x128xf32, #tpu.memory_space<vmem>>, vector<1x128xf32>
    %42 = vector.broadcast %41 : vector<1x128xf32> to vector<16x128xf32>
    %43 = arith.addf %40, %42 : vector<16x128xf32>
    %c0_20 = arith.constant 0 : index
    %c0_21 = arith.constant 0 : index
    %44 = vector.load %arg9[%c0_20, %c0_21] : memref<16x128xf32, #tpu.memory_space<vmem>>, vector<16x128xf32>
    tpu.vector_store %arg9[%c0_20, %c0_21], %43 {strides = array<i32>} : memref<16x128xf32, #tpu.memory_space<vmem>>, vector<16x128xf32>,
    %cst_22 = arith.constant dense<0.000000e+00> : vector<128xf32>
    %45 = vector.multi_reduction <add>, %43, %cst_22 [0] : vector<16x128xf32> to vector<128xf32>
    %46 = vector.shape_cast %45 : vector<128xf32> to vector<1x128xf32>
    %c0_23 = arith.constant 0 : index
    %c0_24 = arith.constant 0 : index
    %c0_25 = arith.constant 0 : index
    %47 = vector.load %arg10[%c0_23, %c0_24, %c0_25] : memref<1x1x128xf32, #tpu.memory_space<vmem>>, vector<1x1x128xf32>
    %48 = vector.shape_cast %47 : vector<1x1x128xf32> to vector<1x128xf32>
    %49 = vector.shape_cast %46 : vector<1x128xf32> to vector<1x1x128xf32>
    tpu.vector_store %arg10[%c0_23, %c0_24, %c0_25], %49 {strides = array<i32>} : memref<1x1x128xf32, #tpu.memory_space<vmem>>, vector<1x1x128xf32>,
    %50 = arith.mulf %43, %43 : vector<16x128xf32>
    %cst_26 = arith.constant dense<0.000000e+00> : vector<128xf32>
    %51 = vector.multi_reduction <add>, %50, %cst_26 [0] : vector<16x128xf32> to vector<128xf32>
    %52 = vector.shape_cast %51 : vector<128xf32> to vector<1x128xf32>
    %c0_27 = arith.constant 0 : index
    %c0_28 = arith.constant 0 : index
    %c0_29 = arith.constant 0 : index
    %53 = vector.load %arg11[%c0_27, %c0_28, %c0_29] : memref<1x1x128xf32, #tpu.memory_space<vmem>>, vector<1x1x128xf32>
    %54 = vector.shape_cast %53 : vector<1x1x128xf32> to vector<1x128xf32>
    %55 = vector.shape_cast %52 : vector<1x128xf32> to vector<1x1x128xf32>
    tpu.vector_store %arg11[%c0_27, %c0_28, %c0_29], %55 {strides = array<i32>} : memref<1x1x128xf32, #tpu.memory_space<vmem>>, vector<1x1x128xf32>,
    return
  }
  func.func @transform_0(%arg0: i32, %arg1: i32) -> (i32, i32, i32, i32) {
    %c6_i32 = arith.constant 6 : i32
    %0 = arith.muli %arg0, %c6_i32 : i32
    %1 = arith.addi %0, %arg1 : i32
    %c0_i32 = arith.constant 0 : i32
    %2 = arith.addi %1, %c0_i32 : i32
    %c0_i32_0 = arith.constant 0 : i32
    %c0_i32_1 = arith.constant 0 : i32
    %c0_i32_2 = arith.constant 0 : i32
    %c0_i32_3 = arith.constant 0 : i32
    return %2, %c0_i32_0, %c0_i32_1, %c0_i32_2 : i32, i32, i32, i32
  }
  func.func @transform_1(%arg0: i32, %arg1: i32) -> (i32, i32, i32, i32) {
    %c6_i32 = arith.constant 6 : i32
    %0 = arith.muli %arg0, %c6_i32 : i32
    %1 = arith.addi %0, %arg1 : i32
    %c1_i32 = arith.constant 1 : i32
    %2 = arith.addi %1, %c1_i32 : i32
    %c0_i32 = arith.constant 0 : i32
    %c0_i32_0 = arith.constant 0 : i32
    %c0_i32_1 = arith.constant 0 : i32
    %c0_i32_2 = arith.constant 0 : i32
    return %2, %c0_i32, %c0_i32_0, %c0_i32_1 : i32, i32, i32, i32
  }
  func.func @transform_2(%arg0: i32, %arg1: i32) -> (i32, i32, i32, i32) {
    %c6_i32 = arith.constant 6 : i32
    %0 = arith.muli %arg0, %c6_i32 : i32
    %1 = arith.addi %0, %arg1 : i32
    %c2_i32 = arith.constant 2 : i32
    %2 = arith.addi %1, %c2_i32 : i32
    %c0_i32 = arith.constant 0 : i32
    %c0_i32_0 = arith.constant 0 : i32
    %c0_i32_1 = arith.constant 0 : i32
    %c0_i32_2 = arith.constant 0 : i32
    return %2, %c0_i32, %c0_i32_0, %c0_i32_1 : i32, i32, i32, i32
  }
  func.func @transform_3(%arg0: i32, %arg1: i32) -> (i32, i32) {
    %c0_i32 = arith.constant 0 : i32
    %c0_i32_0 = arith.constant 0 : i32
    %c0_i32_1 = arith.constant 0 : i32
    return %c0_i32, %c0_i32_0 : i32, i32
  }
  func.func @transform_4(%arg0: i32, %arg1: i32) -> (i32, i32) {
    %c0_i32 = arith.constant 0 : i32
    %c0_i32_0 = arith.constant 0 : i32
    %c0_i32_1 = arith.constant 0 : i32
    return %c0_i32, %c0_i32_0 : i32, i32
  }
  func.func @transform_5(%arg0: i32, %arg1: i32) -> (i32, i32, i32) {
    %c0_i32 = arith.constant 0 : i32
    %c0_i32_0 = arith.constant 0 : i32
    %c0_i32_1 = arith.constant 0 : i32
    %c0_i32_2 = arith.constant 0 : i32
    return %c0_i32, %c0_i32_0, %c0_i32_1 : i32, i32, i32
  }
  func.func @transform_6(%arg0: i32, %arg1: i32) -> (i32, i32) {
    %c0_i32 = arith.constant 0 : i32
    %c0_i32_0 = arith.constant 0 : i32
    %c0_i32_1 = arith.constant 0 : i32
    return %c0_i32, %c0_i32_0 : i32, i32
  }
  func.func @transform_7(%arg0: i32, %arg1: i32) -> (i32, i32) {
    %c4_i32 = arith.constant 4 : i32
    %0 = arith.muli %arg0, %c4_i32 : i32
    %1 = arith.addi %0, %arg1 : i32
    %c0_i32 = arith.constant 0 : i32
    %c0_i32_0 = arith.constant 0 : i32
    return %1, %c0_i32 : i32, i32
  }
  func.func @transform_8(%arg0: i32, %arg1: i32) -> (i32, i32, i32) {
    %c4_i32 = arith.constant 4 : i32
    %0 = arith.muli %arg0, %c4_i32 : i32
    %1 = arith.addi %0, %arg1 : i32
    %c0_i32 = arith.constant 0 : i32
    %c0_i32_0 = arith.constant 0 : i32
    %c0_i32_1 = arith.constant 0 : i32
    return %1, %c0_i32, %c0_i32_0 : i32, i32, i32
  }
  func.func @transform_9(%arg0: i32, %arg1: i32) -> (i32, i32, i32) {
    %c4_i32 = arith.constant 4 : i32
    %0 = arith.muli %arg0, %c4_i32 : i32
    %1 = arith.addi %0, %arg1 : i32
    %c0_i32 = arith.constant 0 : i32
    %c0_i32_0 = arith.constant 0 : i32
    %c0_i32_1 = arith.constant 0 : i32
    return %1, %c0_i32, %c0_i32_0 : i32, i32, i32
  }
}

module attributes {stable_mosaic.version = 11 : i64} {
  func.func @_final_conv_sc_kernel(%arg0: i32, %arg1: memref<128x128xf32, #tpu.memory_space<vmem>>, %arg2: memref<1x128xf32, #tpu.memory_space<vmem>>, %arg3: memref<1x128xf32, #tpu.memory_space<vmem>>, %arg4: memref<128x128xbf16, #tpu.memory_space<vmem>>, %arg5: memref<128x8xf32, #tpu.memory_space<vmem>>, %arg6: memref<8x128xbf16, #tpu.memory_space<vmem>>, %arg7: memref<1x128xf32, #tpu.memory_space<vmem>>, %arg8: memref<128x128xf32, #tpu.memory_space<vmem>>) attributes {dimension_semantics = [#tpu.dimension_semantics<parallel>], iteration_bounds = array<i64: 1>, scalar_prefetch = 0 : i64, scratch_operands = 0 : i64, tpu.core_type = #tpu.core_type<tc>, window_params = [{transform_indices = @transform_0, window_bounds = array<i64: 128, 128>}, {pipeline_mode = #tpu.pipeline_mode<synchronous>, transform_indices = @transform_1, window_bounds = array<i64: 1, 128>}, {pipeline_mode = #tpu.pipeline_mode<synchronous>, transform_indices = @transform_2, window_bounds = array<i64: 1, 128>}, {pipeline_mode = #tpu.pipeline_mode<synchronous>, transform_indices = @transform_3, window_bounds = array<i64: 128, 128>}, {transform_indices = @transform_4, window_bounds = array<i64: 128, 8>}, {pipeline_mode = #tpu.pipeline_mode<synchronous>, transform_indices = @transform_5, window_bounds = array<i64: 8, 128>}, {pipeline_mode = #tpu.pipeline_mode<synchronous>, transform_indices = @transform_6, window_bounds = array<i64: 1, 128>}, {transform_indices = @transform_7, window_bounds = array<i64: 128, 128>}]} {
    %c0 = arith.constant 0 : index
    %c0_0 = arith.constant 0 : index
    %0 = vector.load %arg1[%c0, %c0_0] : memref<128x128xf32, #tpu.memory_space<vmem>>, vector<128x128xf32>
    %c0_1 = arith.constant 0 : index
    %c0_2 = arith.constant 0 : index
    %1 = vector.load %arg2[%c0_1, %c0_2] : memref<1x128xf32, #tpu.memory_space<vmem>>, vector<1x128xf32>
    %2 = vector.broadcast %1 : vector<1x128xf32> to vector<128x128xf32>
    %3 = arith.mulf %0, %2 : vector<128x128xf32>
    %c0_3 = arith.constant 0 : index
    %c0_4 = arith.constant 0 : index
    %4 = vector.load %arg3[%c0_3, %c0_4] : memref<1x128xf32, #tpu.memory_space<vmem>>, vector<1x128xf32>
    %5 = vector.broadcast %4 : vector<1x128xf32> to vector<128x128xf32>
    %6 = arith.addf %3, %5 : vector<128x128xf32>
    %cst = arith.constant 0.000000e+00 : f32
    %7 = vector.broadcast %cst : f32 to vector<128x128xf32>
    %8 = arith.maximumf %6, %7 : vector<128x128xf32>
    %9 = arith.truncf %8 : vector<128x128xf32> to vector<128x128xbf16>
    %c0_5 = arith.constant 0 : index
    %c0_6 = arith.constant 0 : index
    %10 = vector.load %arg4[%c0_5, %c0_6] : memref<128x128xbf16, #tpu.memory_space<vmem>>, vector<128x128xbf16>
    %cst_7 = arith.constant dense<0.000000e+00> : vector<128x128xf32>
    %11 = tpu.matmul %9, %10, %cst_7 {dimension_numbers = #tpu.dot_dimension_numbers<[1], [0], [0], [1], [0, 0, 1, 1], [], []>} : vector<128x128xbf16>, vector<128x128xbf16>, vector<128x128xf32> -> vector<128x128xf32>
    %c0_8 = arith.constant 0 : index
    %c0_9 = arith.constant 0 : index
    %12 = vector.load %arg5[%c0_8, %c0_9] : memref<128x8xf32, #tpu.memory_space<vmem>>, vector<128x8xf32>
    %13 = arith.truncf %12 : vector<128x8xf32> to vector<128x8xbf16>
    %c0_10 = arith.constant 0 : index
    %c0_11 = arith.constant 0 : index
    %14 = vector.load %arg6[%c0_10, %c0_11] : memref<8x128xbf16, #tpu.memory_space<vmem>>, vector<8x128xbf16>
    %cst_12 = arith.constant dense<0.000000e+00> : vector<128x128xf32>
    %15 = tpu.matmul %13, %14, %cst_12 {dimension_numbers = #tpu.dot_dimension_numbers<[1], [0], [0], [1], [0, 0, 1, 1], [], []>} : vector<128x8xbf16>, vector<8x128xbf16>, vector<128x128xf32> -> vector<128x128xf32>
    %16 = arith.addf %11, %15 : vector<128x128xf32>
    %c0_13 = arith.constant 0 : index
    %c0_14 = arith.constant 0 : index
    %17 = vector.load %arg7[%c0_13, %c0_14] : memref<1x128xf32, #tpu.memory_space<vmem>>, vector<1x128xf32>
    %18 = vector.broadcast %17 : vector<1x128xf32> to vector<128x128xf32>
    %19 = arith.addf %16, %18 : vector<128x128xf32>
    %c0_15 = arith.constant 0 : index
    %c0_16 = arith.constant 0 : index
    %20 = vector.load %arg8[%c0_15, %c0_16] : memref<128x128xf32, #tpu.memory_space<vmem>>, vector<128x128xf32>
    tpu.vector_store %arg8[%c0_15, %c0_16], %19 {strides = array<i32>} : memref<128x128xf32, #tpu.memory_space<vmem>>, vector<128x128xf32>,
    return
  }
  func.func @transform_0(%arg0: i32) -> (i32, i32) {
    %c0_i32 = arith.constant 0 : i32
    %c0_i32_0 = arith.constant 0 : i32
    return %arg0, %c0_i32 : i32, i32
  }
  func.func @transform_1(%arg0: i32) -> (i32, i32) {
    %c0_i32 = arith.constant 0 : i32
    %c0_i32_0 = arith.constant 0 : i32
    %c0_i32_1 = arith.constant 0 : i32
    return %c0_i32, %c0_i32_0 : i32, i32
  }
  func.func @transform_2(%arg0: i32) -> (i32, i32) {
    %c0_i32 = arith.constant 0 : i32
    %c0_i32_0 = arith.constant 0 : i32
    %c0_i32_1 = arith.constant 0 : i32
    return %c0_i32, %c0_i32_0 : i32, i32
  }
  func.func @transform_3(%arg0: i32) -> (i32, i32) {
    %c0_i32 = arith.constant 0 : i32
    %c0_i32_0 = arith.constant 0 : i32
    %c0_i32_1 = arith.constant 0 : i32
    return %c0_i32, %c0_i32_0 : i32, i32
  }
  func.func @transform_4(%arg0: i32) -> (i32, i32) {
    %c0_i32 = arith.constant 0 : i32
    %c0_i32_0 = arith.constant 0 : i32
    return %arg0, %c0_i32 : i32, i32
  }
  func.func @transform_5(%arg0: i32) -> (i32, i32) {
    %c0_i32 = arith.constant 0 : i32
    %c0_i32_0 = arith.constant 0 : i32
    %c0_i32_1 = arith.constant 0 : i32
    return %c0_i32, %c0_i32_0 : i32, i32
  }
  func.func @transform_6(%arg0: i32) -> (i32, i32) {
    %c0_i32 = arith.constant 0 : i32
    %c0_i32_0 = arith.constant 0 : i32
    %c0_i32_1 = arith.constant 0 : i32
    return %c0_i32, %c0_i32_0 : i32, i32
  }
  func.func @transform_7(%arg0: i32) -> (i32, i32) {
    %c0_i32 = arith.constant 0 : i32
    %c0_i32_0 = arith.constant 0 : i32
    return %arg0, %c0_i32 : i32, i32
  }
}

</mosaic_0001>

<llo_original>
// kernel: preact_bottleneck.4
$region0: #{preact_bottleneck.4}
  #allocation0 [shape = 'u32[]', space=smem, size = 0x4, offset = 0x4, fixed_abs, tag = 'smem constant byte address 0x4 - core index']
  #allocation1 [shape = 'u32[72,128]{1,0:T(1,128)}', space=vmem, size = 0x9000, scoped, tag = 'internal scratch']
  %s0 = inlined_call_operand.vmem [shape: f32[64,128], index: 0, kind: input, shape index: {}]
  %s1 = inlined_call_operand.vmem [shape: f32[1,1,128], index: 1, kind: output, shape index: {0}]
  %s2 = inlined_call_operand.vmem [shape: f32[1,1,128], index: 2, kind: output, shape index: {1}]
  %3 = xla_tuple %s1, %s2
  %s4 = sld [smem:[#allocation0]]
  $region22: #{preact_bottleneck.4} parent=0
    _
  %s6 = ssub.s32 1, %s4
  %s7 = scalar_select 0, %s6, %s4
  // Predicated region
  $region2: #{preact_bottleneck.4} parent=0 // pred_check
    _
  $region3: #{preact_bottleneck.4} parent=0 // pred_check_branch
    %9 = sbr.rel (0) target = $region5
  $region4: #{preact_bottleneck.4} parent=0 // pred_region
    _
  $region5: #{preact_bottleneck.4} parent=0 // pred_fallthru
    _
  %v10 = vld [vmem:[%s0] sm:$0xff]
  %v11 = vld [vmem:[%s0 + $0x8] sm:$0xff]
  %v12 = vld [vmem:[%s0 + $0x10] sm:$0xff]
  %v13 = vld [vmem:[%s0 + $0x18] sm:$0xff]
  %v14 = vld [vmem:[%s0 + $0x20] sm:$0xff]
  %v15 = vld [vmem:[%s0 + $0x28] sm:$0xff]
  %v16 = vld [vmem:[%s0 + $0x30] sm:$0xff]
  %v17 = vld [vmem:[%s0 + $0x38] sm:$0xff]
  %v18 = vadd.f32 %v10, %v11
  %v19 = vadd.f32 %v18, %v12
  %v20 = vadd.f32 %v19, %v13
  %v21 = vadd.f32 %v20, %v14
  %v22 = vadd.f32 %v21, %v15
  %v23 = vadd.f32 %v22, %v16
  %v24 = vadd.f32 %v23, %v17
  %v25 = vrot.slane %v24, 4
  %v26 = vadd.f32 %v24, %v25
  %v27 = vrot.slane %v26, 2
  %v28 = vadd.f32 %v26, %v27
  %v29 = vrot.slane %v28, 1
  %v30 = vadd.f32 %v28, %v29
  %31 = vst [vmem:[%s1] sm:$0x1] %v30
  %v32 = vmul.f32 %v10, %v10
  %v33 = vmul.f32 %v11, %v11
  %v34 = vmul.f32 %v12, %v12
  %v35 = vmul.f32 %v13, %v13
  %v36 = vmul.f32 %v14, %v14
  %v37 = vmul.f32 %v15, %v15
  %v38 = vmul.f32 %v16, %v16
  %v39 = vmul.f32 %v17, %v17
  %v40 = vadd.f32 %v32, %v33
  %v41 = vadd.f32 %v40, %v34
  %v42 = vadd.f32 %v41, %v35
  %v43 = vadd.f32 %v42, %v36
  %v44 = vadd.f32 %v43, %v37
  %v45 = vadd.f32 %v44, %v38
  %v46 = vadd.f32 %v45, %v39
  %v47 = vrot.slane %v46, 4
  %v48 = vadd.f32 %v46, %v47
  %v49 = vrot.slane %v48, 2
  %v50 = vadd.f32 %v48, %v49
  %v51 = vrot.slane %v50, 1
  %v52 = vadd.f32 %v50, %v51
  %53 = vst [vmem:[%s2] sm:$0x1] %v52
  // Predicated region
  $region6: #{preact_bottleneck.4} parent=0 // pred_check
    _
  $region7: #{preact_bottleneck.4} parent=0 // pred_check_branch
    %55 = sbr.rel (0) target = $region9
  $region8: #{preact_bottleneck.4} parent=0 // pred_region
    _
  $region9: #{preact_bottleneck.4} parent=0 // pred_fallthru
    _
  // Predicated region
  $region10: #{preact_bottleneck.4} parent=0 // pred_check
    _
  $region11: #{preact_bottleneck.4} parent=0 // pred_check_branch
    %57 = sbr.rel (0) target = $region13
  $region12: #{preact_bottleneck.4} parent=0 // pred_region
    _
  $region13: #{preact_bottleneck.4} parent=0 // pred_fallthru
    _
  // Predicated region
  $region14: #{preact_bottleneck.4} parent=0 // pred_check
    _
  $region15: #{preact_bottleneck.4} parent=0 // pred_check_branch
    %59 = sbr.rel (0) target = $region17
  $region16: #{preact_bottleneck.4} parent=0 // pred_region
    _
  $region17: #{preact_bottleneck.4} parent=0 // pred_fallthru
    _
  // Predicated region
  $region18: #{preact_bottleneck.4} parent=0 // pred_check
    _
  $region19: #{preact_bottleneck.4} parent=0 // pred_check_branch
    %61 = sbr.rel (0) target = $region21
  $region20: #{preact_bottleneck.4} parent=0 // pred_region
    _
  $region21: #{preact_bottleneck.4} parent=0 // pred_fallthru
    _

// kernel: preact_bottleneck.5
$region0: #{preact_bottleneck.5}
  #allocation0 [shape = 'u32[]', space=smem, size = 0x4, offset = 0x4, fixed_abs, tag = 'smem constant byte address 0x4 - core index']
  #allocation1 [shape = 'u32[72,128]{1,0:T(1,128)}', space=vmem, size = 0x9000, scoped, tag = 'internal scratch']
  %s0 = inlined_call_operand.vmem [shape: f32[128,8], index: 0, kind: input, shape index: {}]
  %s1 = inlined_call_operand.vmem [shape: f32[1,8], index: 1, kind: input, shape index: {}]
  %s2 = inlined_call_operand.vmem [shape: f32[1,8], index: 2, kind: input, shape index: {}]
  %s3 = inlined_call_operand.vmem [shape: bf16[8,128], index: 3, kind: input, shape index: {}]
  %s4 = inlined_call_operand.vmem [shape: f32[1,128], index: 4, kind: input, shape index: {}]
  %s5 = inlined_call_operand.vmem [shape: f32[128,128], index: 5, kind: output, shape index: {0}]
  %s6 = inlined_call_operand.vmem [shape: f32[1,1,128], index: 6, kind: output, shape index: {1}]
  %s7 = inlined_call_operand.vmem [shape: f32[1,1,128], index: 7, kind: output, shape index: {2}]
  %8 = xla_tuple %s5, %s6, %s7
  %s9 = sld [smem:[#allocation0]]
  $region46: #{preact_bottleneck.5} parent=0
    _
  %s11 = ssub.s32 1, %s9
  %s12 = scalar_select 0, %s11, %s9
  // Predicated region
  $region2: #{preact_bottleneck.5} parent=0 // pred_check
    _
  $region3: #{preact_bottleneck.5} parent=0 // pred_check_branch
    %14 = sbr.rel (0) target = $region5
  $region4: #{preact_bottleneck.5} parent=0 // pred_region
    _
  $region5: #{preact_bottleneck.5} parent=0 // pred_fallthru
    _
  // Predicated region
  $region6: #{preact_bottleneck.5} parent=0 // pred_check
    _
  $region7: #{preact_bottleneck.5} parent=0 // pred_check_branch
    %16 = sbr.rel (0) target = $region9
  $region8: #{preact_bottleneck.5} parent=0 // pred_region
    _
  $region9: #{preact_bottleneck.5} parent=0 // pred_fallthru
    _
  // Predicated region
  $region10: #{preact_bottleneck.5} parent=0 // pred_check
    _
  $region11: #{preact_bottleneck.5} parent=0 // pred_check_branch
    %18 = sbr.rel (0) target = $region13
  $region12: #{preact_bottleneck.5} parent=0 // pred_region
    _
  $region13: #{preact_bottleneck.5} parent=0 // pred_fallthru
    _
  // Predicated region
  $region14: #{preact_bottleneck.5} parent=0 // pred_check
    _
  $region15: #{preact_bottleneck.5} parent=0 // pred_check_branch
    %20 = sbr.rel (0) target = $region17
  $region16: #{preact_bottleneck.5} parent=0 // pred_region
    _
  $region17: #{preact_bottleneck.5} parent=0 // pred_fallthru
    _
  // Predicated region
  $region18: #{preact_bottleneck.5} parent=0 // pred_check
    _
  $region19: #{preact_bottleneck.5} parent=0 // pred_check_branch
    %22 = sbr.rel (0) target = $region21
  $region20: #{preact_bottleneck.5} parent=0 // pred_region
    _
  $region21: #{preact_bottleneck.5} parent=0 // pred_fallthru
    _
  %v24 = vld [vmem:[%s0] sm:$0xff]
  %v25 = vld [vmem:[%s0 + $0x8] sm:$0xff]
  %v26 = vld [vmem:[%s0 + $0x10] sm:$0xff]
  %v27 = vld [vmem:[%s0 + $0x18] sm:$0xff]
  %v28 = vld [vmem:[%s0 + $0x20] sm:$0xff]
  %v29 = vld [vmem:[%s0 + $0x28] sm:$0xff]
  %v30 = vld [vmem:[%s0 + $0x30] sm:$0xff]
  %v31 = vld [vmem:[%s0 + $0x38] sm:$0xff]
  %v32 = vld [vmem:[%s0 + $0x40] sm:$0xff]
  %v33 = vld [vmem:[%s0 + $0x48] sm:$0xff]
  %v34 = vld [vmem:[%s0 + $0x50] sm:$0xff]
  %v35 = vld [vmem:[%s0 + $0x58] sm:$0xff]
  %v36 = vld [vmem:[%s0 + $0x60] sm:$0xff]
  %v37 = vld [vmem:[%s0 + $0x68] sm:$0xff]
  %v38 = vld [vmem:[%s0 + $0x70] sm:$0xff]
  %v39 = vld [vmem:[%s0 + $0x78] sm:$0xff]
  %v40 = vld [vmem:[%s1] sm:$0x1]
  %v42 = vperm.slane %v40, 0
  %v44 = vmul.f32 %v24, %v42
  %v45 = vmul.f32 %v25, %v42
  %v46 = vmul.f32 %v26, %v42
  %v47 = vmul.f32 %v27, %v42
  %v48 = vmul.f32 %v28, %v42
  %v49 = vmul.f32 %v29, %v42
  %v50 = vmul.f32 %v30, %v42
  %v51 = vmul.f32 %v31, %v42
  %v52 = vmul.f32 %v32, %v42
  %v53 = vmul.f32 %v33, %v42
  %v54 = vmul.f32 %v34, %v42
  %v55 = vmul.f32 %v35, %v42
  %v56 = vmul.f32 %v36, %v42
  %v57 = vmul.f32 %v37, %v42
  %v58 = vmul.f32 %v38, %v42
  %v59 = vmul.f32 %v39, %v42
  %v60 = vld [vmem:[%s2] sm:$0x1]
  %v62 = vperm.slane %v60, 0
  %v64 = vadd.f32 %v44, %v62
  %v65 = vadd.f32 %v45, %v62
  %v66 = vadd.f32 %v46, %v62
  %v67 = vadd.f32 %v47, %v62
  %v68 = vadd.f32 %v48, %v62
  %v69 = vadd.f32 %v49, %v62
  %v70 = vadd.f32 %v50, %v62
  %v71 = vadd.f32 %v51, %v62
  %v72 = vadd.f32 %v52, %v62
  %v73 = vadd.f32 %v53, %v62
  %v74 = vadd.f32 %v54, %v62
  %v75 = vadd.f32 %v55, %v62
  %v76 = vadd.f32 %v56, %v62
  %v77 = vadd.f32 %v57, %v62
  %v78 = vadd.f32 %v58, %v62
  %v79 = vadd.f32 %v59, %v62
  %v80 = vmax.f32 %v64, 0.0
  %v81 = vmax.f32 %v65, 0.0
  %v82 = vmax.f32 %v66, 0.0
  %v83 = vmax.f32 %v67, 0.0
  %v84 = vmax.f32 %v68, 0.0
  %v85 = vmax.f32 %v69, 0.0
  %v86 = vmax.f32 %v70, 0.0
  %v87 = vmax.f32 %v71, 0.0
  %v88 = vmax.f32 %v72, 0.0
  %v89 = vmax.f32 %v73, 0.0
  %v90 = vmax.f32 %v74, 0.0
  %v91 = vmax.f32 %v75, 0.0
  %v92 = vmax.f32 %v76, 0.0
  %v93 = vmax.f32 %v77, 0.0
  %v94 = vmax.f32 %v78, 0.0
  %v95 = vmax.f32 %v79, 0.0
  %v96 = vpack.c.bf16 %v81, %v80
  %v97 = vpack.c.bf16 %v83, %v82
  %v98 = vpack.c.bf16 %v85, %v84
  %v99 = vpack.c.bf16 %v87, %v86
  %v100 = vpack.c.bf16 %v89, %v88
  %v101 = vpack.c.bf16 %v91, %v90
  %v102 = vpack.c.bf16 %v93, %v92
  %v103 = vpack.c.bf16 %v95, %v94
  %v104 = vld [vmem:[%s3] sm:$0xf]
  %v105 = vld [vmem:[%s4] sm:$0x1]
  %v107 = vperm.slane %v105, 0
  %vm109 = vcmask 64512
  %v111 = vsel %vm109, %v96, 0
  %v114 = vsel %vm109, %v97, 0
  %v117 = vsel %vm109, %v98, 0
  %v120 = vsel %vm109, %v99, 0
  %v123 = vsel %vm109, %v100, 0
  %v126 = vsel %vm109, %v101, 0
  %v129 = vsel %vm109, %v102, 0
  %v132 = vsel %vm109, %v103, 0
  %vm134 = vcmask 1043456
  %v136 = vsel %vm134, %v104, 0
  %138 = vmatpush.bf16.msra.mxu0 0
  %139 = vmatpush.bf16.msra.mxu0 0
  %140 = vmatpush.bf16.msra.mxu0 0
  %141 = vmatpush.bf16.msra.mxu0 0
  %142 = vmatpush.bf16.msra.mxu0 0
  %143 = vmatpush.bf16.msra.mxu0 0
  %144 = vmatpush.bf16.msra.mxu0 0
  %145 = vmatpush.bf16.msra.mxu0 %v136
  %146 = vmatmul.bf16.gmra.mxu0 %v111
  %v147 = vpop.f32.mrf.mxu0
  %v148 = vadd.f32 %v107, %v147
  %v149 = vpop.f32.mrf.mxu0
  %v150 = vadd.f32 %v107, %v149
  %151 = vmatmul.bf16.gmra.mxu0 %v114
  %v152 = vpop.f32.mrf.mxu0
  %v153 = vadd.f32 %v107, %v152
  %v154 = vpop.f32.mrf.mxu0
  %v155 = vadd.f32 %v107, %v154
  %156 = vmatmul.bf16.gmra.mxu0 %v117
  %v157 = vpop.f32.mrf.mxu0
  %v158 = vadd.f32 %v107, %v157
  %v159 = vpop.f32.mrf.mxu0
  %v160 = vadd.f32 %v107, %v159
  %161 = vmatmul.bf16.gmra.mxu0 %v120
  %v162 = vpop.f32.mrf.mxu0
  %v163 = vadd.f32 %v107, %v162
  %v164 = vpop.f32.mrf.mxu0
  %v165 = vadd.f32 %v107, %v164
  %166 = vmatmul.bf16.gmra.mxu0 %v123
  %v167 = vpop.f32.mrf.mxu0
  %v168 = vadd.f32 %v107, %v167
  %v169 = vpop.f32.mrf.mxu0
  %v170 = vadd.f32 %v107, %v169
  %171 = vmatmul.bf16.gmra.mxu0 %v126
  %v172 = vpop.f32.mrf.mxu0
  %v173 = vadd.f32 %v107, %v172
  %v174 = vpop.f32.mrf.mxu0
  %v175 = vadd.f32 %v107, %v174
  %176 = vmatmul.bf16.gmra.mxu0 %v129
  %v177 = vpop.f32.mrf.mxu0
  %v178 = vadd.f32 %v107, %v177
  %v179 = vpop.f32.mrf.mxu0
  %v180 = vadd.f32 %v107, %v179
  %181 = vmatmul.bf16.gmra.mxu0 %v132
  %v182 = vpop.f32.mrf.mxu0
  %v183 = vadd.f32 %v107, %v182
  %v184 = vpop.f32.mrf.mxu0
  %v185 = vadd.f32 %v107, %v184
  %186 = vdwg.mxu0
  %187 = vst [vmem:[%s5] sm:$0xff] %v148
  %188 = vst [vmem:[%s5 + $0x8] sm:$0xff] %v150
  %189 = vst [vmem:[%s5 + $0x10] sm:$0xff] %v153
  %190 = vst [vmem:[%s5 + $0x18] sm:$0xff] %v155
  %191 = vst [vmem:[%s5 + $0x20] sm:$0xff] %v158
  %192 = vst [vmem:[%s5 + $0x28] sm:$0xff] %v160
  %193 = vst [vmem:[%s5 + $0x30] sm:$0xff] %v163
  %194 = vst [vmem:[%s5 + $0x38] sm:$0xff] %v165
  %195 = vst [vmem:[%s5 + $0x40] sm:$0xff] %v168
  %196 = vst [vmem:[%s5 + $0x48] sm:$0xff] %v170
  %197 = vst [vmem:[%s5 + $0x50] sm:$0xff] %v173
  %198 = vst [vmem:[%s5 + $0x58] sm:$0xff] %v175
  %199 = vst [vmem:[%s5 + $0x60] sm:$0xff] %v178
  %200 = vst [vmem:[%s5 + $0x68] sm:$0xff] %v180
  %201 = vst [vmem:[%s5 + $0x70] sm:$0xff] %v183
  %202 = vst [vmem:[%s5 + $0x78] sm:$0xff] %v185
  %v203 = vadd.f32 %v148, %v150
  %v204 = vadd.f32 %v203, %v153
  %v205 = vadd.f32 %v204, %v155
  %v206 = vadd.f32 %v205, %v158
  %v207 = vadd.f32 %v206, %v160
  %v208 = vadd.f32 %v207, %v163
  %v209 = vadd.f32 %v208, %v165
  %v210 = vadd.f32 %v209, %v168
  %v211 = vadd.f32 %v210, %v170
  %v212 = vadd.f32 %v211, %v173
  %v213 = vadd.f32 %v212, %v175
  %v214 = vadd.f32 %v213, %v178
  %v215 = vadd.f32 %v214, %v180
  %v216 = vadd.f32 %v215, %v183
  %v217 = vadd.f32 %v216, %v185
  %v218 = vrot.slane %v217, 4
  %v219 = vadd.f32 %v217, %v218
  %v220 = vrot.slane %v219, 2
  %v221 = vadd.f32 %v219, %v220
  %v222 = vrot.slane %v221, 1
  %v223 = vadd.f32 %v221, %v222
  %224 = vst [vmem:[%s6] sm:$0x1] %v223
  %v225 = vmul.f32 %v148, %v148
  %v226 = vmul.f32 %v150, %v150
  %v227 = vmul.f32 %v153, %v153
  %v228 = vmul.f32 %v155, %v155
  %v229 = vmul.f32 %v158, %v158
  %v230 = vmul.f32 %v160, %v160
  %v231 = vmul.f32 %v163, %v163
  %v232 = vmul.f32 %v165, %v165
  %v233 = vmul.f32 %v168, %v168
  %v234 = vmul.f32 %v170, %v170
  %v235 = vmul.f32 %v173, %v173
  %v236 = vmul.f32 %v175, %v175
  %v237 = vmul.f32 %v178, %v178
  %v238 = vmul.f32 %v180, %v180
  %v239 = vmul.f32 %v183, %v183
  %v240 = vmul.f32 %v185, %v185
  %v241 = vadd.f32 %v225, %v226
  %v242 = vadd.f32 %v241, %v227
  %v243 = vadd.f32 %v242, %v228
  %v244 = vadd.f32 %v243, %v229
  %v245 = vadd.f32 %v244, %v230
  %v246 = vadd.f32 %v245, %v231
  %v247 = vadd.f32 %v246, %v232
  %v248 = vadd.f32 %v247, %v233
  %v249 = vadd.f32 %v248, %v234
  %v250 = vadd.f32 %v249, %v235
  %v251 = vadd.f32 %v250, %v236
  %v252 = vadd.f32 %v251, %v237
  %v253 = vadd.f32 %v252, %v238
  %v254 = vadd.f32 %v253, %v239
  %v255 = vadd.f32 %v254, %v240
  %v256 = vrot.slane %v255, 4
  %v257 = vadd.f32 %v255, %v256
  %v258 = vrot.slane %v257, 2
  %v259 = vadd.f32 %v257, %v258
  %v260 = vrot.slane %v259, 1
  %v261 = vadd.f32 %v259, %v260
  %262 = vst [vmem:[%s7] sm:$0x1] %v261
  // Predicated region
  $region22: #{preact_bottleneck.5} parent=0 // pred_check
    _
  $region23: #{preact_bottleneck.5} parent=0 // pred_check_branch
    %264 = sbr.rel (0) target = $region25
  $region24: #{preact_bottleneck.5} parent=0 // pred_region
    _
  $region25: #{preact_bottleneck.5} parent=0 // pred_fallthru
    _
  // Predicated region
  $region26: #{preact_bottleneck.5} parent=0 // pred_check
    _
  $region27: #{preact_bottleneck.5} parent=0 // pred_check_branch
    %266 = sbr.rel (0) target = $region29
  $region28: #{preact_bottleneck.5} parent=0 // pred_region
    _
  $region29: #{preact_bottleneck.5} parent=0 // pred_fallthru
    _
  // Predicated region
  $region30: #{preact_bottleneck.5} parent=0 // pred_check
    _
  $region31: #{preact_bottleneck.5} parent=0 // pred_check_branch
    %268 = sbr.rel (0) target = $region33
  $region32: #{preact_bottleneck.5} parent=0 // pred_region
    _
  $region33: #{preact_bottleneck.5} parent=0 // pred_fallthru
    _
  // Predicated region
  $region34: #{preact_bottleneck.5} parent=0 // pred_check
    _
  $region35: #{preact_bottleneck.5} parent=0 // pred_check_branch
    %270 = sbr.rel (0) target = $region37
  $region36: #{preact_bottleneck.5} parent=0 // pred_region
    _
  $region37: #{preact_bottleneck.5} parent=0 // pred_fallthru
    _
  // Predicated region
  $region38: #{preact_bottleneck.5} parent=0 // pred_check
    _
  $region39: #{preact_bottleneck.5} parent=0 // pred_check_branch
    %272 = sbr.rel (0) target = $region41
  $region40: #{preact_bottleneck.5} parent=0 // pred_region
    _
  $region41: #{preact_bottleneck.5} parent=0 // pred_fallthru
    _
  // Predicated region
  $region42: #{preact_bottleneck.5} parent=0 // pred_check
    _
  $region43: #{preact_bottleneck.5} parent=0 // pred_check_branch
    %274 = sbr.rel (0) target = $region45
  $region44: #{preact_bottleneck.5} parent=0 // pred_region
    _
  $region45: #{preact_bottleneck.5} parent=0 // pred_fallthru
    _

// kernel: preact_bottleneck.7
$region0: #{preact_bottleneck.7}
  #allocation0 [shape = 'u32[]', space=smem, size = 0x4, offset = 0x4, fixed_abs, tag = 'smem constant byte address 0x4 - core index']
  #allocation1 [shape = 'u32[72,128]{1,0:T(1,128)}', space=vmem, size = 0x9000, scoped, tag = 'internal scratch']
  %s0 = inlined_call_operand.vmem [shape: f32[128,128], index: 0, kind: input, shape index: {}]
  %s1 = inlined_call_operand.vmem [shape: f32[1,128], index: 1, kind: input, shape index: {}]
  %s2 = inlined_call_operand.vmem [shape: f32[1,128], index: 2, kind: input, shape index: {}]
  %s3 = inlined_call_operand.vmem [shape: bf16[128,128], index: 3, kind: input, shape index: {}]
  %s4 = inlined_call_operand.vmem [shape: f32[128,8], index: 4, kind: input, shape index: {}]
  %s5 = inlined_call_operand.vmem [shape: bf16[8,128], index: 5, kind: input, shape index: {}]
  %s6 = inlined_call_operand.vmem [shape: f32[1,128], index: 6, kind: input, shape index: {}]
  %s7 = inlined_call_operand.vmem [shape: f32[128,128], index: 7, kind: output, shape index: {}]
  %s8 = sld [smem:[#allocation0]]
  $region38: #{preact_bottleneck.7} parent=0
    _
  %s10 = ssub.s32 1, %s8
  %s11 = scalar_select 0, %s10, %s8
  // Predicated region
  $region2: #{preact_bottleneck.7} parent=0 // pred_check
    _
  $region3: #{preact_bottleneck.7} parent=0 // pred_check_branch
    %13 = sbr.rel (0) target = $region5
  $region4: #{preact_bottleneck.7} parent=0 // pred_region
    _
  $region5: #{preact_bottleneck.7} parent=0 // pred_fallthru
    _
  // Predicated region
  $region6: #{preact_bottleneck.7} parent=0 // pred_check
    _
  $region7: #{preact_bottleneck.7} parent=0 // pred_check_branch
    %15 = sbr.rel (0) target = $region9
  $region8: #{preact_bottleneck.7} parent=0 // pred_region
    _
  $region9: #{preact_bottleneck.7} parent=0 // pred_fallthru
    _
  // Predicated region
  $region10: #{preact_bottleneck.7} parent=0 // pred_check
    _
  $region11: #{preact_bottleneck.7} parent=0 // pred_check_branch
    %17 = sbr.rel (0) target = $region13
  $region12: #{preact_bottleneck.7} parent=0 // pred_region
    _
  $region13: #{preact_bottleneck.7} parent=0 // pred_fallthru
    _
  // Predicated region
  $region14: #{preact_bottleneck.7} parent=0 // pred_check
    _
  $region15: #{preact_bottleneck.7} parent=0 // pred_check_branch
    %19 = sbr.rel (0) target = $region17
  $region16: #{preact_bottleneck.7} parent=0 // pred_region
    _
  $region17: #{preact_bottleneck.7} parent=0 // pred_fallthru
    _
  // Predicated region
  $region18: #{preact_bottleneck.7} parent=0 // pred_check
    _
  $region19: #{preact_bottleneck.7} parent=0 // pred_check_branch
    %21 = sbr.rel (0) target = $region21
  $region20: #{preact_bottleneck.7} parent=0 // pred_region
    _
  $region21: #{preact_bottleneck.7} parent=0 // pred_fallthru
    _
  // Predicated region
  $region22: #{preact_bottleneck.7} parent=0 // pred_check
    _
  $region23: #{preact_bottleneck.7} parent=0 // pred_check_branch
    %23 = sbr.rel (0) target = $region25
  $region24: #{preact_bottleneck.7} parent=0 // pred_region
    _
  $region25: #{preact_bottleneck.7} parent=0 // pred_fallthru
    _
  // Predicated region
  $region26: #{preact_bottleneck.7} parent=0 // pred_check
    _
  $region27: #{preact_bottleneck.7} parent=0 // pred_check_branch
    %25 = sbr.rel (0) target = $region29
  $region28: #{preact_bottleneck.7} parent=0 // pred_region
    _
  $region29: #{preact_bottleneck.7} parent=0 // pred_fallthru
    _
  %v27 = vld [vmem:[%s0] sm:$0xff]
  %v28 = vld [vmem:[%s0 + $0x8] sm:$0xff]
  %v29 = vld [vmem:[%s0 + $0x10] sm:$0xff]
  %v30 = vld [vmem:[%s0 + $0x18] sm:$0xff]
  %v31 = vld [vmem:[%s0 + $0x20] sm:$0xff]
  %v32 = vld [vmem:[%s0 + $0x28] sm:$0xff]
  %v33 = vld [vmem:[%s0 + $0x30] sm:$0xff]
  %v34 = vld [vmem:[%s0 + $0x38] sm:$0xff]
  %v35 = vld [vmem:[%s0 + $0x40] sm:$0xff]
  %v36 = vld [vmem:[%s0 + $0x48] sm:$0xff]
  %v37 = vld [vmem:[%s0 + $0x50] sm:$0xff]
  %v38 = vld [vmem:[%s0 + $0x58] sm:$0xff]
  %v39 = vld [vmem:[%s0 + $0x60] sm:$0xff]
  %v40 = vld [vmem:[%s0 + $0x68] sm:$0xff]
  %v41 = vld [vmem:[%s0 + $0x70] sm:$0xff]
  %v42 = vld [vmem:[%s0 + $0x78] sm:$0xff]
  %v43 = vld [vmem:[%s1] sm:$0x1]
  %v45 = vperm.slane %v43, 0
  %v47 = vmul.f32 %v27, %v45
  %v48 = vmul.f32 %v28, %v45
  %v49 = vmul.f32 %v29, %v45
  %v50 = vmul.f32 %v30, %v45
  %v51 = vmul.f32 %v31, %v45
  %v52 = vmul.f32 %v32, %v45
  %v53 = vmul.f32 %v33, %v45
  %v54 = vmul.f32 %v34, %v45
  %v55 = vmul.f32 %v35, %v45
  %v56 = vmul.f32 %v36, %v45
  %v57 = vmul.f32 %v37, %v45
  %v58 = vmul.f32 %v38, %v45
  %v59 = vmul.f32 %v39, %v45
  %v60 = vmul.f32 %v40, %v45
  %v61 = vmul.f32 %v41, %v45
  %v62 = vmul.f32 %v42, %v45
  %v63 = vld [vmem:[%s2] sm:$0x1]
  %v65 = vperm.slane %v63, 0
  %v67 = vadd.f32 %v47, %v65
  %v68 = vadd.f32 %v48, %v65
  %v69 = vadd.f32 %v49, %v65
  %v70 = vadd.f32 %v50, %v65
  %v71 = vadd.f32 %v51, %v65
  %v72 = vadd.f32 %v52, %v65
  %v73 = vadd.f32 %v53, %v65
  %v74 = vadd.f32 %v54, %v65
  %v75 = vadd.f32 %v55, %v65
  %v76 = vadd.f32 %v56, %v65
  %v77 = vadd.f32 %v57, %v65
  %v78 = vadd.f32 %v58, %v65
  %v79 = vadd.f32 %v59, %v65
  %v80 = vadd.f32 %v60, %v65
  %v81 = vadd.f32 %v61, %v65
  %v82 = vadd.f32 %v62, %v65
  %v83 = vmax.f32 %v67, 0.0
  %v84 = vmax.f32 %v68, 0.0
  %v85 = vmax.f32 %v69, 0.0
  %v86 = vmax.f32 %v70, 0.0
  %v87 = vmax.f32 %v71, 0.0
  %v88 = vmax.f32 %v72, 0.0
  %v89 = vmax.f32 %v73, 0.0
  %v90 = vmax.f32 %v74, 0.0
  %v91 = vmax.f32 %v75, 0.0
  %v92 = vmax.f32 %v76, 0.0
  %v93 = vmax.f32 %v77, 0.0
  %v94 = vmax.f32 %v78, 0.0
  %v95 = vmax.f32 %v79, 0.0
  %v96 = vmax.f32 %v80, 0.0
  %v97 = vmax.f32 %v81, 0.0
  %v98 = vmax.f32 %v82, 0.0
  %v99 = vpack.c.bf16 %v84, %v83
  %v100 = vpack.c.bf16 %v86, %v85
  %v101 = vpack.c.bf16 %v88, %v87
  %v102 = vpack.c.bf16 %v90, %v89
  %v103 = vpack.c.bf16 %v92, %v91
  %v104 = vpack.c.bf16 %v94, %v93
  %v105 = vpack.c.bf16 %v96, %v95
  %v106 = vpack.c.bf16 %v98, %v97
  %v107 = vld [vmem:[%s3] sm:$0xf]
  %v108 = vld [vmem:[%s3 + $0x4] sm:$0xf]
  %v109 = vld [vmem:[%s3 + $0x8] sm:$0xf]
  %v110 = vld [vmem:[%s3 + $0xc] sm:$0xf]
  %v111 = vld [vmem:[%s3 + $0x10] sm:$0xf]
  %v112 = vld [vmem:[%s3 + $0x14] sm:$0xf]
  %v113 = vld [vmem:[%s3 + $0x18] sm:$0xf]
  %v114 = vld [vmem:[%s3 + $0x1c] sm:$0xf]
  %v115 = vld [vmem:[%s3 + $0x20] sm:$0xf]
  %v116 = vld [vmem:[%s3 + $0x24] sm:$0xf]
  %v117 = vld [vmem:[%s3 + $0x28] sm:$0xf]
  %v118 = vld [vmem:[%s3 + $0x2c] sm:$0xf]
  %v119 = vld [vmem:[%s3 + $0x30] sm:$0xf]
  %v120 = vld [vmem:[%s3 + $0x34] sm:$0xf]
  %v121 = vld [vmem:[%s3 + $0x38] sm:$0xf]
  %v122 = vld [vmem:[%s3 + $0x3c] sm:$0xf]
  %v123 = vld [vmem:[%s4] sm:$0xff]
  %v124 = vld [vmem:[%s4 + $0x8] sm:$0xff]
  %v125 = vld [vmem:[%s4 + $0x10] sm:$0xff]
  %v126 = vld [vmem:[%s4 + $0x18] sm:$0xff]
  %v127 = vld [vmem:[%s4 + $0x20] sm:$0xff]
  %v128 = vld [vmem:[%s4 + $0x28] sm:$0xff]
  %v129 = vld [vmem:[%s4 + $0x30] sm:$0xff]
  %v130 = vld [vmem:[%s4 + $0x38] sm:$0xff]
  %v131 = vld [vmem:[%s4 + $0x40] sm:$0xff]
  %v132 = vld [vmem:[%s4 + $0x48] sm:$0xff]
  %v133 = vld [vmem:[%s4 + $0x50] sm:$0xff]
  %v134 = vld [vmem:[%s4 + $0x58] sm:$0xff]
  %v135 = vld [vmem:[%s4 + $0x60] sm:$0xff]
  %v136 = vld [vmem:[%s4 + $0x68] sm:$0xff]
  %v137 = vld [vmem:[%s4 + $0x70] sm:$0xff]
  %v138 = vld [vmem:[%s4 + $0x78] sm:$0xff]
  %v139 = vpack.c.bf16 %v124, %v123
  %v140 = vpack.c.bf16 %v126, %v125
  %v141 = vpack.c.bf16 %v128, %v127
  %v142 = vpack.c.bf16 %v130, %v129
  %v143 = vpack.c.bf16 %v132, %v131
  %v144 = vpack.c.bf16 %v134, %v133
  %v145 = vpack.c.bf16 %v136, %v135
  %v146 = vpack.c.bf16 %v138, %v137
  %v147 = vld [vmem:[%s5] sm:$0xf]
  %vm148 = vcmask 64512
  %v150 = vsel %vm148, %v139, 0
  %v153 = vsel %vm148, %v140, 0
  %v156 = vsel %vm148, %v141, 0
  %v159 = vsel %vm148, %v142, 0
  %v162 = vsel %vm148, %v143, 0
  %v165 = vsel %vm148, %v144, 0
  %v168 = vsel %vm148, %v145, 0
  %v171 = vsel %vm148, %v146, 0
  %vm173 = vcmask 1043456
  %v175 = vsel %vm173, %v147, 0
  %177 = vmatpush.bf16.msra.mxu0 0
  %178 = vmatpush.bf16.msra.mxu0 0
  %179 = vmatpush.bf16.msra.mxu0 0
  %180 = vmatpush.bf16.msra.mxu0 0
  %181 = vmatpush.bf16.msra.mxu0 0
  %182 = vmatpush.bf16.msra.mxu0 0
  %183 = vmatpush.bf16.msra.mxu0 0
  %184 = vmatpush.bf16.msra.mxu0 %v175
  %185 = vmatmul.bf16.gmra.mxu0 %v150
  %v186 = vpop.f32.mrf.mxu0
  %v187 = vadd.f32 0.0, %v186
  %v188 = vpop.f32.mrf.mxu0
  %v189 = vadd.f32 0.0, %v188
  %190 = vmatmul.bf16.gmra.mxu0 %v153
  %v191 = vpop.f32.mrf.mxu0
  %v192 = vadd.f32 0.0, %v191
  %v193 = vpop.f32.mrf.mxu0
  %v194 = vadd.f32 0.0, %v193
  %195 = vmatmul.bf16.gmra.mxu0 %v156
  %v196 = vpop.f32.mrf.mxu0
  %v197 = vadd.f32 0.0, %v196
  %v198 = vpop.f32.mrf.mxu0
  %v199 = vadd.f32 0.0, %v198
  %200 = vmatmul.bf16.gmra.mxu0 %v159
  %v201 = vpop.f32.mrf.mxu0
  %v202 = vadd.f32 0.0, %v201
  %v203 = vpop.f32.mrf.mxu0
  %v204 = vadd.f32 0.0, %v203
  %205 = vmatmul.bf16.gmra.mxu0 %v162
  %v206 = vpop.f32.mrf.mxu0
  %v207 = vadd.f32 0.0, %v206
  %v208 = vpop.f32.mrf.mxu0
  %v209 = vadd.f32 0.0, %v208
  %210 = vmatmul.bf16.gmra.mxu0 %v165
  %v211 = vpop.f32.mrf.mxu0
  %v212 = vadd.f32 0.0, %v211
  %v213 = vpop.f32.mrf.mxu0
  %v214 = vadd.f32 0.0, %v213
  %215 = vmatmul.bf16.gmra.mxu0 %v168
  %v216 = vpop.f32.mrf.mxu0
  %v217 = vadd.f32 0.0, %v216
  %v218 = vpop.f32.mrf.mxu0
  %v219 = vadd.f32 0.0, %v218
  %220 = vmatmul.bf16.gmra.mxu0 %v171
  %v221 = vpop.f32.mrf.mxu0
  %v222 = vadd.f32 0.0, %v221
  %v223 = vpop.f32.mrf.mxu0
  %v224 = vadd.f32 0.0, %v223
  %225 = vdwg.mxu0
  %v242 = vunpack.c.l.b16 %v107
  %v243 = vunpack.c.l.b16 %v108
  %v244 = vunpack.c.l.b16 %v109
  %v245 = vunpack.c.l.b16 %v110
  %v246 = vunpack.c.l.b16 %v111
  %v247 = vunpack.c.l.b16 %v112
  %v248 = vunpack.c.l.b16 %v113
  %v249 = vunpack.c.l.b16 %v114
  %v250 = vunpack.c.l.b16 %v115
  %v251 = vunpack.c.l.b16 %v116
  %v252 = vunpack.c.l.b16 %v117
  %v253 = vunpack.c.l.b16 %v118
  %v254 = vunpack.c.l.b16 %v119
  %v255 = vunpack.c.l.b16 %v120
  %v256 = vunpack.c.l.b16 %v121
  %v257 = vunpack.c.l.b16 %v122
  %v258 = vpack.c.b16 %v243, %v242
  %v259 = vpack.c.b16 %v245, %v244
  %v260 = vpack.c.b16 %v247, %v246
  %v261 = vpack.c.b16 %v249, %v248
  %v262 = vpack.c.b16 %v251, %v250
  %v263 = vpack.c.b16 %v253, %v252
  %v264 = vpack.c.b16 %v255, %v254
  %v265 = vpack.c.b16 %v257, %v256
  %274 = vmatpush.bf16.msra.mxu0 %v265
  %275 = vmatpush.bf16.msra.mxu0 %v264
  %276 = vmatpush.bf16.msra.mxu0 %v263
  %277 = vmatpush.bf16.msra.mxu0 %v262
  %278 = vmatpush.bf16.msra.mxu0 %v261
  %279 = vmatpush.bf16.msra.mxu0 %v260
  %280 = vmatpush.bf16.msra.mxu0 %v259
  %281 = vmatpush.bf16.msra.mxu0 %v258
  %282 = vmatmul.bf16.gmra.mxu0 %v99
  %v283 = vpop.f32.mrf.mxu0
  %v284 = vadd.f32 %v187, %v283
  %v285 = vpop.f32.mrf.mxu0
  %v286 = vadd.f32 %v189, %v285
  %287 = vmatmul.bf16.gmra.mxu0 %v100
  %v288 = vpop.f32.mrf.mxu0
  %v289 = vadd.f32 %v192, %v288
  %v290 = vpop.f32.mrf.mxu0
  %v291 = vadd.f32 %v194, %v290
  %292 = vmatmul.bf16.gmra.mxu0 %v101
  %v293 = vpop.f32.mrf.mxu0
  %v294 = vadd.f32 %v197, %v293
  %v295 = vpop.f32.mrf.mxu0
  %v296 = vadd.f32 %v199, %v295
  %297 = vmatmul.bf16.gmra.mxu0 %v102
  %v298 = vpop.f32.mrf.mxu0
  %v299 = vadd.f32 %v202, %v298
  %v300 = vpop.f32.mrf.mxu0
  %v301 = vadd.f32 %v204, %v300
  %302 = vmatmul.bf16.gmra.mxu0 %v103
  %v303 = vpop.f32.mrf.mxu0
  %v304 = vadd.f32 %v207, %v303
  %v305 = vpop.f32.mrf.mxu0
  %v306 = vadd.f32 %v209, %v305
  %307 = vmatmul.bf16.gmra.mxu0 %v104
  %v308 = vpop.f32.mrf.mxu0
  %v309 = vadd.f32 %v212, %v308
  %v310 = vpop.f32.mrf.mxu0
  %v311 = vadd.f32 %v214, %v310
  %312 = vmatmul.bf16.gmra.mxu0 %v105
  %v313 = vpop.f32.mrf.mxu0
  %v314 = vadd.f32 %v217, %v313
  %v315 = vpop.f32.mrf.mxu0
  %v316 = vadd.f32 %v219, %v315
  %317 = vmatmul.bf16.gmra.mxu0 %v106
  %v318 = vpop.f32.mrf.mxu0
  %v319 = vadd.f32 %v222, %v318
  %v320 = vpop.f32.mrf.mxu0
  %v321 = vadd.f32 %v224, %v320
  %322 = vdwg.mxu0
  %v323 = vld [vmem:[%s6] sm:$0x1]
  %v325 = vperm.slane %v323, 0
  %v327 = vadd.f32 %v284, %v325
  %v328 = vadd.f32 %v286, %v325
  %v329 = vadd.f32 %v289, %v325
  %v330 = vadd.f32 %v291, %v325
  %v331 = vadd.f32 %v294, %v325
  %v332 = vadd.f32 %v296, %v325
  %v333 = vadd.f32 %v299, %v325
  %v334 = vadd.f32 %v301, %v325
  %v335 = vadd.f32 %v304, %v325
  %v336 = vadd.f32 %v306, %v325
  %v337 = vadd.f32 %v309, %v325
  %v338 = vadd.f32 %v311, %v325
  %v339 = vadd.f32 %v314, %v325
  %v340 = vadd.f32 %v316, %v325
  %v341 = vadd.f32 %v319, %v325
  %v342 = vadd.f32 %v321, %v325
  %343 = vst [vmem:[%s7] sm:$0xff] %v327
  %344 = vst [vmem:[%s7 + $0x8] sm:$0xff] %v328
  %345 = vst [vmem:[%s7 + $0x10] sm:$0xff] %v329
  %346 = vst [vmem:[%s7 + $0x18] sm:$0xff] %v330
  %347 = vst [vmem:[%s7 + $0x20] sm:$0xff] %v331
  %348 = vst [vmem:[%s7 + $0x28] sm:$0xff] %v332
  %349 = vst [vmem:[%s7 + $0x30] sm:$0xff] %v333
  %350 = vst [vmem:[%s7 + $0x38] sm:$0xff] %v334
  %351 = vst [vmem:[%s7 + $0x40] sm:$0xff] %v335
  %352 = vst [vmem:[%s7 + $0x48] sm:$0xff] %v336
  %353 = vst [vmem:[%s7 + $0x50] sm:$0xff] %v337
  %354 = vst [vmem:[%s7 + $0x58] sm:$0xff] %v338
  %355 = vst [vmem:[%s7 + $0x60] sm:$0xff] %v339
  %356 = vst [vmem:[%s7 + $0x68] sm:$0xff] %v340
  %357 = vst [vmem:[%s7 + $0x70] sm:$0xff] %v341
  %358 = vst [vmem:[%s7 + $0x78] sm:$0xff] %v342
  // Predicated region
  $region30: #{preact_bottleneck.7} parent=0 // pred_check
    _
  $region31: #{preact_bottleneck.7} parent=0 // pred_check_branch
    %360 = sbr.rel (0) target = $region33
  $region32: #{preact_bottleneck.7} parent=0 // pred_region
    _
  $region33: #{preact_bottleneck.7} parent=0 // pred_fallthru
    _
  // Predicated region
  $region34: #{preact_bottleneck.7} parent=0 // pred_check
    _
  $region35: #{preact_bottleneck.7} parent=0 // pred_check_branch
    %362 = sbr.rel (0) target = $region37
  $region36: #{preact_bottleneck.7} parent=0 // pred_region
    _
  $region37: #{preact_bottleneck.7} parent=0 // pred_fallthru
    _

// kernel: preact_bottleneck.6
$region0: #{preact_bottleneck.6}
  #allocation0 [shape = 'u32[]', space=smem, size = 0x4, offset = 0x4, fixed_abs, tag = 'smem constant byte address 0x4 - core index']
  #allocation1 [shape = 'u32[72,128]{1,0:T(1,128)}', space=vmem, size = 0x9000, scoped, tag = 'internal scratch']
  %s0 = inlined_call_operand.vmem [shape: f32[12,6,6,128], index: 0, kind: input, shape index: {}, may-alias: {0,1,2}]
  %s1 = inlined_call_operand.vmem [shape: f32[12,6,6,128], index: 1, kind: input, shape index: {}, may-alias: {0,1,2}]
  %s2 = inlined_call_operand.vmem [shape: f32[12,6,6,128], index: 2, kind: input, shape index: {}, may-alias: {0,1,2}]
  %s3 = inlined_call_operand.vmem [shape: f32[1,128], index: 3, kind: input, shape index: {}]
  %s4 = inlined_call_operand.vmem [shape: f32[1,128], index: 4, kind: input, shape index: {}]
  %s5 = inlined_call_operand.vmem [shape: bf16[3,1152,128], index: 5, kind: input, shape index: {}]
  %s6 = inlined_call_operand.vmem [shape: f32[1,128], index: 6, kind: input, shape index: {}]
  %s7 = inlined_call_operand.vmem [shape: f32[128,128], index: 7, kind: output, shape index: {0}]
  %s8 = inlined_call_operand.vmem [shape: f32[8,1,128], index: 8, kind: output, shape index: {1}]
  %s9 = inlined_call_operand.vmem [shape: f32[8,1,128], index: 9, kind: output, shape index: {2}]
  %10 = xla_tuple %s7, %s8, %s9
  %s11 = sld [smem:[#allocation0]]
  $region89: #{preact_bottleneck.6} parent=0
    _
  %s13 = ssub.s32 1, %s11
  %s14 = scalar_select 0, %s13, %s11
  loop: start=0, step=1, limit=10
  $region2: #{preact_bottleneck.6} parent=0 // loop_pre_header
    _
  $region3: #{preact_bottleneck.6} parent=0 // loop_header
    %s16 = sphi 0, %s20
    %p17 = scmp.ge.s32.totalorder %s16, 10
    %s23 = sphi 0, %s35
    %s24 = sphi 0, %s31
    %s25 = sphi 0, %s23
    %s26 = sphi 0, %s24
    %s27 = sphi 0, %s25
    %s28 = sphi 0, %s26
    %s42 = sphi 0, %s44
    %s45 = sphi 0, %s42
    %s46 = sphi 0, %s45
    %s62 = sphi 0, %s46
    %s74 = sphi 0, %s76
    %s77 = sphi 0, %s74
    %s78 = sphi 0, %s77
    %s94 = sphi 0, %s78
    %s106 = sphi 0, %s108
    %s109 = sphi 0, %s106
    %s110 = sphi 0, %s109
    %s126 = sphi 0, %s110
    %s130 = sphi 0, %s130
    %s132 = sphi 0, %s130
    %s133 = sphi 0, %s132
    %s147 = sphi 0, %s133
    %s151 = sphi 0, %s151
    %s153 = sphi 0, %s151
    %s154 = sphi 0, %s153
    %s168 = sphi 0, %s154
    %s172 = sphi 0, %s172
    %s174 = sphi 0, %s172
    %s175 = sphi 0, %s174
    %s189 = sphi 0, %s175
    %s193 = sphi 0, %s193
    %s195 = sphi 0, %s193
    %s196 = sphi 0, %s195
    %s210 = sphi 0, %s196
    %s220 = sphi 0, %s222
    %s223 = sphi 0, %s220
    %s224 = sphi 0, %s223
    %s240 = sphi 0, %s224
    %s250 = sphi 0, %s252
    %s253 = sphi 0, %s250
    %s254 = sphi 0, %s253
    %s270 = sphi 0, %s254
    %s280 = sphi 0, %s282
    %s283 = sphi 0, %s280
    %s284 = sphi 0, %s283
    %s300 = sphi 0, %s284
  $region4: #{preact_bottleneck.6} parent=0 // loop_header_branch
    %19 = sbr.rel (%p17) target = $region8
  $region5: #{preact_bottleneck.6} parent=0 // loop_body
    %s21 = ssub.s32 %s16, 1
    %s22 = ssub.s32 %s16, 2
    %s29 = sadd.s32 1, %s24
    %p30 = scmp.ge.s32.totalorder %s29, 4
    %s31 = scalar_select %p30, 0, %s29
    %s32 = sadd.s32 1, %s23
    %s33 = scalar_select %p30, %s32, %s23
    %p34 = scmp.ge.s32.totalorder %s33, 2
    %s35 = scalar_select %p34, 0, %s33
    %s36 = smul.u32 %s23, 6
    %s37 = sadd.s32 %s36, %s24
    %s38 = smul.u32 %s35, 6
    %s39 = sadd.s32 %s38, %s31
    %s40 = ssub.s32 %s37, %s39
    %p41 = scmp.eq.s32.totalorder %s40, 0
    %s43 = sadd.s32 %s42, 1
    %s44 = scalar_select %p41, %s42, %s43
    %p47 = pneg %p41
    %p48 = scmp.eq.s32.totalorder %s16, 7
    %p49 = por %p47, %p48
    %p50 = scmp.ne.s32.totalorder %s42, %s45
    %p51 = scmp.eq.s32.totalorder %s16, 0
    %p52 = por %p50, %p51
    %p53 = scmp.ne.s32.totalorder %s42, %s45
    %p54 = scmp.eq.s32.totalorder %s21, 7
    %p55 = por %p53, %p54
    %p56 = scmp.ne.s32.totalorder %s45, %s46
    %p57 = scmp.eq.s32.totalorder %s21, 0
    %p58 = por %p56, %p57
    %p59 = scmp.ne.s32.totalorder %s45, %s46
    %p60 = scmp.eq.s32.totalorder %s22, 7
    %p61 = por %p59, %p60
    %p63 = scmp.ne.s32.totalorder %s46, %s62
    %p64 = scmp.eq.s32.totalorder %s22, 0
    %p65 = por %p63, %p64
    %s66 = smul.u32 %s23, 6
    %s67 = sadd.s32 %s66, %s24
    %s68 = sadd.s32 %s67, 1
    %s69 = smul.u32 %s35, 6
    %s70 = sadd.s32 %s69, %s31
    %s71 = sadd.s32 %s70, 1
    %s72 = ssub.s32 %s68, %s71
    %p73 = scmp.eq.s32.totalorder %s72, 0
    %s75 = sadd.s32 %s74, 1
    %s76 = scalar_select %p73, %s74, %s75
    %p79 = pneg %p73
    %p80 = scmp.eq.s32.totalorder %s16, 7
    %p81 = por %p79, %p80
    %p82 = scmp.ne.s32.totalorder %s74, %s77
    %p83 = scmp.eq.s32.totalorder %s16, 0
    %p84 = por %p82, %p83
    %p85 = scmp.ne.s32.totalorder %s74, %s77
    %p86 = scmp.eq.s32.totalorder %s21, 7
    %p87 = por %p85, %p86
    %p88 = scmp.ne.s32.totalorder %s77, %s78
    %p89 = scmp.eq.s32.totalorder %s21, 0
    %p90 = por %p88, %p89
    %p91 = scmp.ne.s32.totalorder %s77, %s78
    %p92 = scmp.eq.s32.totalorder %s22, 7
    %p93 = por %p91, %p92
    %p95 = scmp.ne.s32.totalorder %s78, %s94
    %p96 = scmp.eq.s32.totalorder %s22, 0
    %p97 = por %p95, %p96
    %s98 = smul.u32 %s23, 6
    %s99 = sadd.s32 %s98, %s24
    %s100 = sadd.s32 %s99, 2
    %s101 = smul.u32 %s35, 6
    %s102 = sadd.s32 %s101, %s31
    %s103 = sadd.s32 %s102, 2
    %s104 = ssub.s32 %s100, %s103
    %p105 = scmp.eq.s32.totalorder %s104, 0
    %s107 = sadd.s32 %s106, 1
    %s108 = scalar_select %p105, %s106, %s107
    %p111 = pneg %p105
    %p112 = scmp.eq.s32.totalorder %s16, 7
    %p113 = por %p111, %p112
    %p114 = scmp.ne.s32.totalorder %s106, %s109
    %p115 = scmp.eq.s32.totalorder %s16, 0
    %p116 = por %p114, %p115
    %p117 = scmp.ne.s32.totalorder %s106, %s109
    %p118 = scmp.eq.s32.totalorder %s21, 7
    %p119 = por %p117, %p118
    %p120 = scmp.ne.s32.totalorder %s109, %s110
    %p121 = scmp.eq.s32.totalorder %s21, 0
    %p122 = por %p120, %p121
    %p123 = scmp.ne.s32.totalorder %s109, %s110
    %p124 = scmp.eq.s32.totalorder %s22, 7
    %p125 = por %p123, %p124
    %p127 = scmp.ne.s32.totalorder %s110, %s126
    %p128 = scmp.eq.s32.totalorder %s22, 0
    %p129 = por %p127, %p128
    %s131 = sadd.s32 %s130, 1
    %p134 = scmp.eq.s32.totalorder %s16, 7
    %p135 = scmp.ne.s32.totalorder %s130, %s132
    %p136 = scmp.eq.s32.totalorder %s16, 0
    %p137 = por %p135, %p136
    %p138 = scmp.ne.s32.totalorder %s130, %s132
    %p139 = scmp.eq.s32.totalorder %s21, 7
    %p140 = por %p138, %p139
    %p141 = scmp.ne.s32.totalorder %s132, %s133
    %p142 = scmp.eq.s32.totalorder %s21, 0
    %p143 = por %p141, %p142
    %p144 = scmp.ne.s32.totalorder %s132, %s133
    %p145 = scmp.eq.s32.totalorder %s22, 7
    %p146 = por %p144, %p145
    %p148 = scmp.ne.s32.totalorder %s133, %s147
    %p149 = scmp.eq.s32.totalorder %s22, 0
    %p150 = por %p148, %p149
    %s152 = sadd.s32 %s151, 1
    %p155 = scmp.eq.s32.totalorder %s16, 7
    %p156 = scmp.ne.s32.totalorder %s151, %s153
    %p157 = scmp.eq.s32.totalorder %s16, 0
    %p158 = por %p156, %p157
    %p159 = scmp.ne.s32.totalorder %s151, %s153
    %p160 = scmp.eq.s32.totalorder %s21, 7
    %p161 = por %p159, %p160
    %p162 = scmp.ne.s32.totalorder %s153, %s154
    %p163 = scmp.eq.s32.totalorder %s21, 0
    %p164 = por %p162, %p163
    %p165 = scmp.ne.s32.totalorder %s153, %s154
    %p166 = scmp.eq.s32.totalorder %s22, 7
    %p167 = por %p165, %p166
    %p169 = scmp.ne.s32.totalorder %s154, %s168
    %p170 = scmp.eq.s32.totalorder %s22, 0
    %p171 = por %p169, %p170
    %s173 = sadd.s32 %s172, 1
    %p176 = scmp.eq.s32.totalorder %s16, 7
    %p177 = scmp.ne.s32.totalorder %s172, %s174
    %p178 = scmp.eq.s32.totalorder %s16, 0
    %p179 = por %p177, %p178
    %p180 = scmp.ne.s32.totalorder %s172, %s174
    %p181 = scmp.eq.s32.totalorder %s21, 7
    %p182 = por %p180, %p181
    %p183 = scmp.ne.s32.totalorder %s174, %s175
    %p184 = scmp.eq.s32.totalorder %s21, 0
    %p185 = por %p183, %p184
    %p186 = scmp.ne.s32.totalorder %s174, %s175
    %p187 = scmp.eq.s32.totalorder %s22, 7
    %p188 = por %p186, %p187
    %p190 = scmp.ne.s32.totalorder %s175, %s189
    %p191 = scmp.eq.s32.totalorder %s22, 0
    %p192 = por %p190, %p191
    %s194 = sadd.s32 %s193, 1
    %p197 = scmp.eq.s32.totalorder %s16, 7
    %p198 = scmp.ne.s32.totalorder %s193, %s195
    %p199 = scmp.eq.s32.totalorder %s16, 0
    %p200 = por %p198, %p199
    %p201 = scmp.ne.s32.totalorder %s193, %s195
    %p202 = scmp.eq.s32.totalorder %s21, 7
    %p203 = por %p201, %p202
    %p204 = scmp.ne.s32.totalorder %s195, %s196
    %p205 = scmp.eq.s32.totalorder %s21, 0
    %p206 = por %p204, %p205
    %p207 = scmp.ne.s32.totalorder %s195, %s196
    %p208 = scmp.eq.s32.totalorder %s22, 7
    %p209 = por %p207, %p208
    %p211 = scmp.ne.s32.totalorder %s196, %s210
    %p212 = scmp.eq.s32.totalorder %s22, 0
    %p213 = por %p211, %p212
    %s214 = smul.u32 %s23, 4
    %s215 = sadd.s32 %s214, %s24
    %s216 = smul.u32 %s35, 4
    %s217 = sadd.s32 %s216, %s31
    %s218 = ssub.s32 %s215, %s217
    %p219 = scmp.eq.s32.totalorder %s218, 0
    %s221 = sadd.s32 %s220, 1
    %s222 = scalar_select %p219, %s220, %s221
    %p225 = pneg %p219
    %p226 = scmp.eq.s32.totalorder %s16, 7
    %p227 = por %p225, %p226
    %p228 = scmp.ne.s32.totalorder %s220, %s223
    %p229 = scmp.eq.s32.totalorder %s16, 0
    %p230 = por %p228, %p229
    %p231 = scmp.ne.s32.totalorder %s220, %s223
    %p232 = scmp.eq.s32.totalorder %s21, 7
    %p233 = por %p231, %p232
    %p234 = scmp.ne.s32.totalorder %s223, %s224
    %p235 = scmp.eq.s32.totalorder %s21, 0
    %p236 = por %p234, %p235
    %p237 = scmp.ne.s32.totalorder %s223, %s224
    %p238 = scmp.eq.s32.totalorder %s22, 7
    %p239 = por %p237, %p238
    %p241 = scmp.ne.s32.totalorder %s224, %s240
    %p242 = scmp.eq.s32.totalorder %s22, 0
    %p243 = por %p241, %p242
    %s244 = smul.u32 %s23, 4
    %s245 = sadd.s32 %s244, %s24
    %s246 = smul.u32 %s35, 4
    %s247 = sadd.s32 %s246, %s31
    %s248 = ssub.s32 %s245, %s247
    %p249 = scmp.eq.s32.totalorder %s248, 0
    %s251 = sadd.s32 %s250, 1
    %s252 = scalar_select %p249, %s250, %s251
    %p255 = pneg %p249
    %p256 = scmp.eq.s32.totalorder %s16, 7
    %p257 = por %p255, %p256
    %p258 = scmp.ne.s32.totalorder %s250, %s253
    %p259 = scmp.eq.s32.totalorder %s16, 0
    %p260 = por %p258, %p259
    %p261 = scmp.ne.s32.totalorder %s250, %s253
    %p262 = scmp.eq.s32.totalorder %s21, 7
    %p263 = por %p261, %p262
    %p264 = scmp.ne.s32.totalorder %s253, %s254
    %p265 = scmp.eq.s32.totalorder %s21, 0
    %p266 = por %p264, %p265
    %p267 = scmp.ne.s32.totalorder %s253, %s254
    %p268 = scmp.eq.s32.totalorder %s22, 7
    %p269 = por %p267, %p268
    %p271 = scmp.ne.s32.totalorder %s254, %s270
    %p272 = scmp.eq.s32.totalorder %s22, 0
    %p273 = por %p271, %p272
    %s274 = smul.u32 %s23, 4
    %s275 = sadd.s32 %s274, %s24
    %s276 = smul.u32 %s35, 4
    %s277 = sadd.s32 %s276, %s31
    %s278 = ssub.s32 %s275, %s277
    %p279 = scmp.eq.s32.totalorder %s278, 0
    %s281 = sadd.s32 %s280, 1
    %s282 = scalar_select %p279, %s280, %s281
    %p285 = pneg %p279
    %p286 = scmp.eq.s32.totalorder %s16, 7
    %p287 = por %p285, %p286
    %p288 = scmp.ne.s32.totalorder %s280, %s283
    %p289 = scmp.eq.s32.totalorder %s16, 0
    %p290 = por %p288, %p289
    %p291 = scmp.ne.s32.totalorder %s280, %s283
    %p292 = scmp.eq.s32.totalorder %s21, 7
    %p293 = por %p291, %p292
    %p294 = scmp.ne.s32.totalorder %s283, %s284
    %p295 = scmp.eq.s32.totalorder %s21, 0
    %p296 = por %p294, %p295
    %p297 = scmp.ne.s32.totalorder %s283, %s284
    %p298 = scmp.eq.s32.totalorder %s22, 7
    %p299 = por %p297, %p298
    %p301 = scmp.ne.s32.totalorder %s284, %s300
    %p302 = scmp.eq.s32.totalorder %s22, 0
    %p303 = por %p301, %p302
    %p304 = scmp.le.s32.totalorder 1, %s16
    %p305 = scmp.lt.s32.totalorder %s16, 9
    %p306 = pnand %p304, %p305
    %p307 = pneg %p306
    // Predicated region
    $region9: #{preact_bottleneck.6} parent=5 // pred_check
      _
    $region10: #{preact_bottleneck.6} parent=5 // pred_check_branch
      %309 = sbr.rel (%p306) target = $region12
    $region11: #{preact_bottleneck.6} parent=5 // pred_region
      %s310 = ssub.s32 %s16, 1
      // Predicated region
      $region13: #{preact_bottleneck.6} parent=11 // pred_check
        %p311 = pneg %p143
      $region14: #{preact_bottleneck.6} parent=11 // pred_check_branch
        %313 = sbr.rel (%p311) target = $region16
      $region15: #{preact_bottleneck.6} parent=11 // pred_region
        _
      $region16: #{preact_bottleneck.6} parent=11 // pred_fallthru
        _
      // Predicated region
      $region17: #{preact_bottleneck.6} parent=11 // pred_check
        %p314 = pneg %p164
      $region18: #{preact_bottleneck.6} parent=11 // pred_check_branch
        %316 = sbr.rel (%p314) target = $region20
      $region19: #{preact_bottleneck.6} parent=11 // pred_region
        _
      $region20: #{preact_bottleneck.6} parent=11 // pred_fallthru
        _
      // Predicated region
      $region21: #{preact_bottleneck.6} parent=11 // pred_check
        %p317 = pneg %p185
      $region22: #{preact_bottleneck.6} parent=11 // pred_check_branch
        %319 = sbr.rel (%p317) target = $region24
      $region23: #{preact_bottleneck.6} parent=11 // pred_region
        _
      $region24: #{preact_bottleneck.6} parent=11 // pred_fallthru
        _
      // Predicated region
      $region25: #{preact_bottleneck.6} parent=11 // pred_check
        %p320 = pneg %p206
      $region26: #{preact_bottleneck.6} parent=11 // pred_check_branch
        %322 = sbr.rel (%p320) target = $region28
      $region27: #{preact_bottleneck.6} parent=11 // pred_region
        _
      $region28: #{preact_bottleneck.6} parent=11 // pred_fallthru
        _
    $region12: #{preact_bottleneck.6} parent=5 // pred_fallthru
      _
    %p323 = scmp.lt.s32.totalorder %s16, 8
    // Predicated region
    $region29: #{preact_bottleneck.6} parent=5 // pred_check
      %p324 = pneg %p323
    $region30: #{preact_bottleneck.6} parent=5 // pred_check_branch
      %326 = sbr.rel (%p324) target = $region32
    $region31: #{preact_bottleneck.6} parent=5 // pred_region
      // Predicated region
      $region33: #{preact_bottleneck.6} parent=31 // pred_check
        %p327 = pneg %p52
      $region34: #{preact_bottleneck.6} parent=31 // pred_check_branch
        %329 = sbr.rel (%p327) target = $region36
      $region35: #{preact_bottleneck.6} parent=31 // pred_region
        %s330 = smul.u32 %s23, 6
        %s331 = sadd.s32 %s330, %s24
        %p332 = scmp.lt.s32.totalorder %s331, 11
        %s333 = scalar_select %p332, %s331, 11
        %s334 = smul.addr %s333, 6
        %s335 = smul.addr %s334, 8
        %s336 = scalar_lea.vmem %s0, %s335
        %s337 = smul.u32 %s23, 6
        %s338 = sadd.s32 %s337, %s24
      $region36: #{preact_bottleneck.6} parent=31 // pred_fallthru
        _
      // Predicated region
      $region37: #{preact_bottleneck.6} parent=31 // pred_check
        %p339 = pneg %p84
      $region38: #{preact_bottleneck.6} parent=31 // pred_check_branch
        %341 = sbr.rel (%p339) target = $region40
      $region39: #{preact_bottleneck.6} parent=31 // pred_region
        %s342 = smul.u32 %s23, 6
        %s343 = sadd.s32 %s342, %s24
        %s344 = sadd.s32 %s343, 1
        %p345 = scmp.lt.s32.totalorder %s344, 11
        %s346 = scalar_select %p345, %s344, 11
        %s347 = smul.addr %s346, 6
        %s348 = smul.addr %s347, 8
        %s349 = scalar_lea.vmem %s1, %s348
        %s350 = smul.u32 %s23, 6
        %s351 = sadd.s32 %s350, %s24
        %s352 = sadd.s32 %s351, 1
      $region40: #{preact_bottleneck.6} parent=31 // pred_fallthru
        _
      // Predicated region
      $region41: #{preact_bottleneck.6} parent=31 // pred_check
        %p353 = pneg %p116
      $region42: #{preact_bottleneck.6} parent=31 // pred_check_branch
        %355 = sbr.rel (%p353) target = $region44
      $region43: #{preact_bottleneck.6} parent=31 // pred_region
        %s356 = smul.u32 %s23, 6
        %s357 = sadd.s32 %s356, %s24
        %s358 = sadd.s32 %s357, 2
        %p359 = scmp.lt.s32.totalorder %s358, 11
        %s360 = scalar_select %p359, %s358, 11
        %s361 = smul.addr %s360, 6
        %s362 = smul.addr %s361, 8
        %s363 = scalar_lea.vmem %s2, %s362
        %s364 = smul.u32 %s23, 6
        %s365 = sadd.s32 %s364, %s24
        %s366 = sadd.s32 %s365, 2
      $region44: #{preact_bottleneck.6} parent=31 // pred_fallthru
        _
    $region32: #{preact_bottleneck.6} parent=5 // pred_fallthru
      _
    %p367 = scmp.le.s32.totalorder 1, %s16
    %p368 = scmp.lt.s32.totalorder %s16, 9
    %p369 = pnand %p367, %p368
    %p370 = pneg %p369
    // Predicated region
    $region45: #{preact_bottleneck.6} parent=5 // pred_check
      _
    $region46: #{preact_bottleneck.6} parent=5 // pred_check_branch
      %372 = sbr.rel (%p369) target = $region48
    $region47: #{preact_bottleneck.6} parent=5 // pred_region
      %s373 = ssub.s32 %s16, 1
      %s374 = smul.u32 %s25, 6
      %s375 = sadd.s32 %s374, %s26
      %p376 = scmp.lt.s32.totalorder %s375, 11
      %s377 = scalar_select %p376, %s375, 11
      %s378 = smul.addr %s377, 6
      %s379 = smul.addr %s378, 8
      %s380 = scalar_lea.vmem %s0, %s379
      %p381 = pneg %p58
      %p382 = pneg %p55
      %s383 = smul.u32 %s25, 6
      %s384 = sadd.s32 %s383, %s26
      %s385 = sadd.s32 %s384, 1
      %p386 = scmp.lt.s32.totalorder %s385, 11
      %s387 = scalar_select %p386, %s385, 11
      %s388 = smul.addr %s387, 6
      %s389 = smul.addr %s388, 8
      %s390 = scalar_lea.vmem %s1, %s389
      %p391 = pneg %p90
      %p392 = pneg %p87
      %s393 = smul.u32 %s25, 6
      %s394 = sadd.s32 %s393, %s26
      %s395 = sadd.s32 %s394, 2
      %p396 = scmp.lt.s32.totalorder %s395, 11
      %s397 = scalar_select %p396, %s395, 11
      %s398 = smul.addr %s397, 6
      %s399 = smul.addr %s398, 8
      %s400 = scalar_lea.vmem %s2, %s399
      %p401 = pneg %p122
      %p402 = pneg %p119
      %p403 = pneg %p143
      %p404 = pneg %p140
      %p405 = pneg %p164
      %p406 = pneg %p161
      %p407 = pneg %p185
      %p408 = pneg %p182
      %p409 = pneg %p206
      %p410 = pneg %p203
      %p411 = pneg %p236
      %p412 = pneg %p233
      %s413 = smul.u32 %s25, 4
      %s414 = sadd.s32 %s413, %s26
      %s415 = smul.u32 2, %s414
      %p416 = scmp.lt.s32.totalorder %s415, 15
      %s417 = scalar_select %p416, %s415, 15
      %s418 = smul.addr %s417, 8
      %s419 = scalar_lea.vmem %s7, %s418
      %p420 = pneg %p266
      %p421 = pneg %p263
      %s422 = smul.u32 %s25, 4
      %s423 = sadd.s32 %s422, %s26
      %p424 = scmp.lt.s32.totalorder %s423, 7
      %s425 = scalar_select %p424, %s423, 7
      %s426 = scalar_lea.vmem %s8, %s425
      %p427 = pneg %p296
      %p428 = pneg %p293
      %s429 = smul.u32 %s25, 4
      %s430 = sadd.s32 %s429, %s26
      %p431 = scmp.lt.s32.totalorder %s430, 7
      %s432 = scalar_select %p431, %s430, 7
      %s433 = scalar_lea.vmem %s9, %s432
      %s434 = smul.u32 %s25, 6
      %s435 = sadd.s32 %s434, %s26
      %p436 = scmp.lt.s32.totalorder %s435, 11
      %s437 = scalar_select %p436, %s435, 11
      %s438 = smul.addr %s437, 6
      %s439 = smul.addr %s438, 8
      %s440 = scalar_lea.vmem %s0, %s439
      %s441 = smul.u32 %s25, 6
      %s442 = sadd.s32 %s441, %s26
      %s443 = smul.u32 %s25, 6
      %s444 = sadd.s32 %s443, %s26
      %s445 = sadd.s32 %s444, 1
      %p446 = scmp.lt.s32.totalorder %s445, 11
      %s447 = scalar_select %p446, %s445, 11
      %s448 = smul.addr %s447, 6
      %s449 = smul.addr %s448, 8
      %s450 = scalar_lea.vmem %s1, %s449
      %s451 = smul.u32 %s25, 6
      %s452 = sadd.s32 %s451, %s26
      %s453 = sadd.s32 %s452, 1
      %s454 = smul.u32 %s25, 6
      %s455 = sadd.s32 %s454, %s26
      %s456 = sadd.s32 %s455, 2
      %p457 = scmp.lt.s32.totalorder %s456, 11
      %s458 = scalar_select %p457, %s456, 11
      %s459 = smul.addr %s458, 6
      %s460 = smul.addr %s459, 8
      %s461 = scalar_lea.vmem %s2, %s460
      %s462 = smul.u32 %s25, 6
      %s463 = sadd.s32 %s462, %s26
      %s464 = sadd.s32 %s463, 2
      %s465 = smul.u32 %s25, 4
      %s466 = sadd.s32 %s465, %s26
      %s467 = smul.u32 2, %s466
      %p468 = scmp.lt.s32.totalorder %s467, 15
      %s469 = scalar_select %p468, %s467, 15
      %s470 = smul.addr %s469, 8
      %s471 = scalar_lea.vmem %s7, %s470
      %s472 = smul.u32 %s25, 4
      %s473 = sadd.s32 %s472, %s26
      %s474 = smul.u32 2, %s473
      %s475 = smul.u32 %s25, 4
      %s476 = sadd.s32 %s475, %s26
      %p477 = scmp.lt.s32.totalorder %s476, 7
      %s478 = scalar_select %p477, %s476, 7
      %s479 = scalar_lea.vmem %s8, %s478
      %s480 = smul.u32 %s25, 4
      %s481 = sadd.s32 %s480, %s26
      %s482 = smul.u32 %s25, 4
      %s483 = sadd.s32 %s482, %s26
      %p484 = scmp.lt.s32.totalorder %s483, 7
      %s485 = scalar_select %p484, %s483, 7
      %s486 = scalar_lea.vmem %s9, %s485
      %s487 = smul.u32 %s25, 4
      %s488 = sadd.s32 %s487, %s26
      %v489 = vlaneseq
      %v490 = vshrl.u32 %v489, 7
      %v491 = vlaneseq
      %v492 = vand.u32 %v491, 127
      %vm493 = vcmp.gt.s32.totalorder %v490, 0
      %vm494 = vcmp.lt.s32.totalorder %v490, 5
      %vm495 = vmand %vm493, %vm494
      %vm496 = vcmp.gt.s32.totalorder %v492, 0
      %vm497 = vcmp.lt.s32.totalorder %v492, 5
      %vm498 = vmand %vm496, %vm497
      %vm499 = vmand %vm495, %vm498
      %v500 = vsel %vm499, 1, 0
      %v501 = vcvt.s32.f32 %v500
      %v502 = vperm.slane %v501, 0
      %v503 = vlaneseq
      %v504 = vshrl.u32 %v503, 7
      %506 = vset.pattern.permute.xlu0 %v504
      %507 = vperm.xlu0 %506, %v502
      %v508 = vpop.permute.xlu0 %507
      %v509 = vperm.slane %v501, 1
      %v510 = vlaneseq
      %v511 = vshrl.u32 %v510, 7
      %513 = vset.pattern.permute.xlu0 %v511
      %514 = vperm.xlu0 %513, %v509
      %v515 = vpop.permute.xlu0 %514
      %v516 = vperm.slane %v501, 2
      %v517 = vlaneseq
      %v518 = vshrl.u32 %v517, 7
      %520 = vset.pattern.permute.xlu0 %v518
      %521 = vperm.xlu0 %520, %v516
      %v522 = vpop.permute.xlu0 %521
      %v523 = vperm.slane %v501, 3
      %v524 = vlaneseq
      %v525 = vshrl.u32 %v524, 7
      %527 = vset.pattern.permute.xlu0 %v525
      %528 = vperm.xlu0 %527, %v523
      %v529 = vpop.permute.xlu0 %528
      %v530 = vperm.slane %v501, 4
      %v531 = vlaneseq
      %v532 = vshrl.u32 %v531, 7
      %534 = vset.pattern.permute.xlu0 %v532
      %535 = vperm.xlu0 %534, %v530
      %v536 = vpop.permute.xlu0 %535
      %v537 = vperm.slane %v501, 5
      %v538 = vlaneseq
      %v539 = vshrl.u32 %v538, 7
      %541 = vset.pattern.permute.xlu0 %v539
      %542 = vperm.xlu0 %541, %v537
      %v543 = vpop.permute.xlu0 %542
      %v544 = vld [vmem:[%s3] sm:$0x1]
      %v545 = vld [vmem:[%s4] sm:$0x1]
      %546 = vst [vmem:[%s471] sm:$0xff] 0.0
      %547 = vst [vmem:[%s471 + $0x8] sm:$0xff] 0.0
      %p548 = scmp.ge.s32.totalorder %s26, 1
      %p549 = scmp.le.s32.totalorder %s26, 4
      %p550 = pnand %p548, %p549
      %p551 = pneg %p550
      // Predicated region
      $region49: #{preact_bottleneck.6} parent=47 // pred_check
        _
      $region50: #{preact_bottleneck.6} parent=47 // pred_check_branch
        %553 = sbr.rel (%p550) target = $region52
      $region51: #{preact_bottleneck.6} parent=47 // pred_region
        %v554 = vld [vmem:[%s440] sm:$0x3f]
        %v555 = vld [vmem:[%s440 + $0x8] sm:$0x3f]
        %v556 = vld [vmem:[%s440 + $0x10] sm:$0x3f]
        %v557 = vld [vmem:[%s440 + $0x18] sm:$0x3f]
        %v558 = vld [vmem:[%s440 + $0x20] sm:$0x3f]
        %v559 = vld [vmem:[%s440 + $0x28] sm:$0x3f]
        %v561 = vperm.slane %v544, 0
        %v563 = vmul.f32 %v554, %v561
        %v564 = vmul.f32 %v555, %v561
        %v565 = vmul.f32 %v556, %v561
        %v566 = vmul.f32 %v557, %v561
        %v567 = vmul.f32 %v558, %v561
        %v568 = vmul.f32 %v559, %v561
        %v570 = vperm.slane %v545, 0
        %v572 = vadd.f32 %v563, %v570
        %v573 = vadd.f32 %v564, %v570
        %v574 = vadd.f32 %v565, %v570
        %v575 = vadd.f32 %v566, %v570
        %v576 = vadd.f32 %v567, %v570
        %v577 = vadd.f32 %v568, %v570
        %v578 = vmax.f32 %v572, 0.0
        %v579 = vmax.f32 %v573, 0.0
        %v580 = vmax.f32 %v574, 0.0
        %v581 = vmax.f32 %v575, 0.0
        %v582 = vmax.f32 %v576, 0.0
        %v583 = vmax.f32 %v577, 0.0
        %v584 = vmul.f32 %v578, %v508
        %v585 = vmul.f32 %v579, %v515
        %v586 = vmul.f32 %v580, %v522
        %v587 = vmul.f32 %v581, %v529
        %v588 = vmul.f32 %v582, %v536
        %v589 = vmul.f32 %v583, %v543
        %v594 = vrot.slane %v584, 4
        %v595 = vrot.slane %v585, 4
        %v596 = vrot.slane %v586, 4
        %v597 = vrot.slane %v587, 4
        %vm598 = vcmask 1042432
        %vm599 = vcmask 1046532
        %vm600 = vmor %vm598, %vm599
        %v601 = vrot.slane %v584, 5
        %v602 = vrot.slane %v601, 4
        %v603 = vrot.slane %v594, 5
        %v604 = vsel %vm600, %v602, %v603
        %v605 = vrot.slane %v585, 5
        %v606 = vrot.slane %v605, 4
        %v607 = vrot.slane %v595, 5
        %v608 = vsel %vm600, %v606, %v607
        %v609 = vrot.slane %v586, 5
        %v610 = vrot.slane %v609, 4
        %v611 = vrot.slane %v596, 5
        %v612 = vsel %vm600, %v610, %v611
        %v613 = vrot.slane %v587, 5
        %v614 = vrot.slane %v613, 4
        %v615 = vrot.slane %v597, 5
        %v616 = vsel %vm600, %v614, %v615
        %vm617 = vcmask 1041408
        %vm618 = vcmask 1045508
        %vm619 = vmor %vm617, %vm618
        %v620 = vrot.slane %v584, 6
        %v621 = vrot.slane %v620, 4
        %v622 = vrot.slane %v594, 6
        %v623 = vsel %vm619, %v621, %v622
        %v624 = vrot.slane %v585, 6
        %v625 = vrot.slane %v624, 4
        %v626 = vrot.slane %v595, 6
        %v627 = vsel %vm619, %v625, %v626
        %v628 = vrot.slane %v586, 6
        %v629 = vrot.slane %v628, 4
        %v630 = vrot.slane %v596, 6
        %v631 = vsel %vm619, %v629, %v630
        %v632 = vrot.slane %v587, 6
        %v633 = vrot.slane %v632, 4
        %v634 = vrot.slane %v597, 6
        %v635 = vsel %vm619, %v633, %v634
        %v637 = vrot.slane %v588, 4
        %v638 = vrot.slane %v588, 5
        %v639 = vrot.slane %v638, 4
        %v640 = vrot.slane %v637, 5
        %v641 = vsel %vm600, %v639, %v640
        %v642 = vrot.slane %v588, 6
        %v643 = vrot.slane %v642, 4
        %v644 = vrot.slane %v637, 6
        %v645 = vsel %vm619, %v643, %v644
        %v647 = vrot.slane %v589, 4
        %v648 = vrot.slane %v589, 5
        %v649 = vrot.slane %v648, 4
        %v650 = vrot.slane %v647, 5
        %v651 = vsel %vm600, %v649, %v650
        %v652 = vrot.slane %v589, 6
        %v653 = vrot.slane %v652, 4
        %v654 = vrot.slane %v647, 6
        %v655 = vsel %vm619, %v653, %v654
        %656 = vst [vmem:[#allocation1] ss:$2 sm:$0xff] %v584
        %s657 = scalar_lea.vmem [#allocation1], 1
        %658 = vst [vmem:[%s657] ss:$2 sm:$0xff] %v585
        %s659 = scalar_lea.vmem [#allocation1], 16
        %660 = vst [vmem:[%s659] ss:$2 sm:$0xff] %v586
        %s661 = scalar_lea.vmem [#allocation1], 17
        %662 = vst [vmem:[%s661] ss:$2 sm:$0xff] %v587
        %v663 = vld.sshfl [vmem:[#allocation1] sm:$0xff pattern:$0x75316420]
        %v664 = vld.sshfl [vmem:[#allocation1 + $0x10] sm:$0xff pattern:$0x75316420]
        %667 = vst [vmem:[#allocation1] ss:$2 sm:$0xff] %v604
        %s668 = scalar_lea.vmem [#allocation1], 1
        %669 = vst [vmem:[%s668] ss:$2 sm:$0xff] %v608
        %s670 = scalar_lea.vmem [#allocation1], 16
        %671 = vst [vmem:[%s670] ss:$2 sm:$0xff] %v612
        %s672 = scalar_lea.vmem [#allocation1], 17
        %673 = vst [vmem:[%s672] ss:$2 sm:$0xff] %v616
        %v674 = vld.sshfl [vmem:[#allocation1] sm:$0xff pattern:$0x75316420]
        %v675 = vld.sshfl [vmem:[#allocation1 + $0x10] sm:$0xff pattern:$0x75316420]
        %678 = vst [vmem:[#allocation1] ss:$2 sm:$0xff] %v623
        %s679 = scalar_lea.vmem [#allocation1], 1
        %680 = vst [vmem:[%s679] ss:$2 sm:$0xff] %v627
        %s681 = scalar_lea.vmem [#allocation1], 16
        %682 = vst [vmem:[%s681] ss:$2 sm:$0xff] %v631
        %s683 = scalar_lea.vmem [#allocation1], 17
        %684 = vst [vmem:[%s683] ss:$2 sm:$0xff] %v635
        %v685 = vld.sshfl [vmem:[#allocation1] sm:$0xff pattern:$0x75316420]
        %v686 = vld.sshfl [vmem:[#allocation1 + $0x10] sm:$0xff pattern:$0x75316420]
        %689 = vst [vmem:[#allocation1] ss:$2 sm:$0xff] %v585
        %s690 = scalar_lea.vmem [#allocation1], 1
        %691 = vst [vmem:[%s690] ss:$2 sm:$0xff] %v586
        %s692 = scalar_lea.vmem [#allocation1], 16
        %693 = vst [vmem:[%s692] ss:$2 sm:$0xff] %v587
        %s694 = scalar_lea.vmem [#allocation1], 17
        %695 = vst [vmem:[%s694] ss:$2 sm:$0xff] %v588
        %v696 = vld.sshfl [vmem:[#allocation1] sm:$0xff pattern:$0x75316420]
        %v697 = vld.sshfl [vmem:[#allocation1 + $0x10] sm:$0xff pattern:$0x75316420]
        %700 = vst [vmem:[#allocation1] ss:$2 sm:$0xff] %v608
        %s701 = scalar_lea.vmem [#allocation1], 1
        %702 = vst [vmem:[%s701] ss:$2 sm:$0xff] %v612
        %s703 = scalar_lea.vmem [#allocation1], 16
        %704 = vst [vmem:[%s703] ss:$2 sm:$0xff] %v616
        %s705 = scalar_lea.vmem [#allocation1], 17
        %706 = vst [vmem:[%s705] ss:$2 sm:$0xff] %v641
        %v707 = vld.sshfl [vmem:[#allocation1] sm:$0xff pattern:$0x75316420]
        %v708 = vld.sshfl [vmem:[#allocation1 + $0x10] sm:$0xff pattern:$0x75316420]
        %711 = vst [vmem:[#allocation1] ss:$2 sm:$0xff] %v627
        %s712 = scalar_lea.vmem [#allocation1], 1
        %713 = vst [vmem:[%s712] ss:$2 sm:$0xff] %v631
        %s714 = scalar_lea.vmem [#allocation1], 16
        %715 = vst [vmem:[%s714] ss:$2 sm:$0xff] %v635
        %s716 = scalar_lea.vmem [#allocation1], 17
        %717 = vst [vmem:[%s716] ss:$2 sm:$0xff] %v645
        %v718 = vld.sshfl [vmem:[#allocation1] sm:$0xff pattern:$0x75316420]
        %v719 = vld.sshfl [vmem:[#allocation1 + $0x10] sm:$0xff pattern:$0x75316420]
        %722 = vst [vmem:[#allocation1] ss:$2 sm:$0xff] %v586
        %s723 = scalar_lea.vmem [#allocation1], 1
        %724 = vst [vmem:[%s723] ss:$2 sm:$0xff] %v587
        %s725 = scalar_lea.vmem [#allocation1], 16
        %726 = vst [vmem:[%s725] ss:$2 sm:$0xff] %v588
        %s727 = scalar_lea.vmem [#allocation1], 17
        %728 = vst [vmem:[%s727] ss:$2 sm:$0xff] %v589
        %v729 = vld.sshfl [vmem:[#allocation1] sm:$0xff pattern:$0x75316420]
        %v730 = vld.sshfl [vmem:[#allocation1 + $0x10] sm:$0xff pattern:$0x75316420]
        %733 = vst [vmem:[#allocation1] ss:$2 sm:$0xff] %v612
        %s734 = scalar_lea.vmem [#allocation1], 1
        %735 = vst [vmem:[%s734] ss:$2 sm:$0xff] %v616
        %s736 = scalar_lea.vmem [#allocation1], 16
        %737 = vst [vmem:[%s736] ss:$2 sm:$0xff] %v641
        %s738 = scalar_lea.vmem [#allocation1], 17
        %739 = vst [vmem:[%s738] ss:$2 sm:$0xff] %v651
        %v740 = vld.sshfl [vmem:[#allocation1] sm:$0xff pattern:$0x75316420]
        %v741 = vld.sshfl [vmem:[#allocation1 + $0x10] sm:$0xff pattern:$0x75316420]
        %744 = vst [vmem:[#allocation1] ss:$2 sm:$0xff] %v631
        %s745 = scalar_lea.vmem [#allocation1], 1
        %746 = vst [vmem:[%s745] ss:$2 sm:$0xff] %v635
        %s747 = scalar_lea.vmem [#allocation1], 16
        %748 = vst [vmem:[%s747] ss:$2 sm:$0xff] %v645
        %s749 = scalar_lea.vmem [#allocation1], 17
        %750 = vst [vmem:[%s749] ss:$2 sm:$0xff] %v655
        %v751 = vld.sshfl [vmem:[#allocation1] sm:$0xff pattern:$0x75316420]
        %v752 = vld.sshfl [vmem:[#allocation1 + $0x10] sm:$0xff pattern:$0x75316420]
        %v755 = vpack.c.bf16 %v664, %v663
        %v756 = vpack.c.bf16 %v675, %v674
        %v757 = vpack.c.bf16 %v686, %v685
        %v758 = vpack.c.bf16 %v697, %v696
        %v759 = vpack.c.bf16 %v708, %v707
        %v760 = vpack.c.bf16 %v719, %v718
        %v761 = vpack.c.bf16 %v730, %v729
        %v762 = vpack.c.bf16 %v741, %v740
        %v763 = vpack.c.bf16 %v752, %v751
        %v764 = vld [vmem:[%s471] sm:$0xff]
        %v765 = vld [vmem:[%s471 + $0x8] sm:$0xff]
        %v766 = vld [vmem:[%s5] sm:$0xf]
        %v767 = vld [vmem:[%s5 + $0x4] sm:$0xf]
        %v768 = vld [vmem:[%s5 + $0x8] sm:$0xf]
        %v769 = vld [vmem:[%s5 + $0xc] sm:$0xf]
        %v770 = vld [vmem:[%s5 + $0x10] sm:$0xf]
        %v771 = vld [vmem:[%s5 + $0x14] sm:$0xf]
        %v772 = vld [vmem:[%s5 + $0x18] sm:$0xf]
        %v773 = vld [vmem:[%s5 + $0x1c] sm:$0xf]
        %v774 = vld [vmem:[%s5 + $0x20] sm:$0xf]
        %v775 = vld [vmem:[%s5 + $0x24] sm:$0xf]
        %v776 = vld [vmem:[%s5 + $0x28] sm:$0xf]
        %v777 = vld [vmem:[%s5 + $0x2c] sm:$0xf]
        %v778 = vld [vmem:[%s5 + $0x30] sm:$0xf]
        %v779 = vld [vmem:[%s5 + $0x34] sm:$0xf]
        %v780 = vld [vmem:[%s5 + $0x38] sm:$0xf]
        %v781 = vld [vmem:[%s5 + $0x3c] sm:$0xf]
        %v782 = vld [vmem:[%s5 + $0x40] sm:$0xf]
        %v783 = vld [vmem:[%s5 + $0x44] sm:$0xf]
        %v784 = vld [vmem:[%s5 + $0x48] sm:$0xf]
        %v785 = vld [vmem:[%s5 + $0x4c] sm:$0xf]
        %v786 = vld [vmem:[%s5 + $0x50] sm:$0xf]
        %v787 = vld [vmem:[%s5 + $0x54] sm:$0xf]
        %v788 = vld [vmem:[%s5 + $0x58] sm:$0xf]
        %v789 = vld [vmem:[%s5 + $0x5c] sm:$0xf]
        %v790 = vld [vmem:[%s5 + $0x60] sm:$0xf]
        %v791 = vld [vmem:[%s5 + $0x64] sm:$0xf]
        %v792 = vld [vmem:[%s5 + $0x68] sm:$0xf]
        %v793 = vld [vmem:[%s5 + $0x6c] sm:$0xf]
        %v794 = vld [vmem:[%s5 + $0x70] sm:$0xf]
        %v795 = vld [vmem:[%s5 + $0x74] sm:$0xf]
        %v796 = vld [vmem:[%s5 + $0x78] sm:$0xf]
        %v797 = vld [vmem:[%s5 + $0x7c] sm:$0xf]
        %v798 = vld [vmem:[%s5 + $0x80] sm:$0xf]
        %v799 = vld [vmem:[%s5 + $0x84] sm:$0xf]
        %v800 = vld [vmem:[%s5 + $0x88] sm:$0xf]
        %v801 = vld [vmem:[%s5 + $0x8c] sm:$0xf]
        %v802 = vld [vmem:[%s5 + $0x90] sm:$0xf]
        %v803 = vld [vmem:[%s5 + $0x94] sm:$0xf]
        %v804 = vld [vmem:[%s5 + $0x98] sm:$0xf]
        %v805 = vld [vmem:[%s5 + $0x9c] sm:$0xf]
        %v806 = vld [vmem:[%s5 + $0xa0] sm:$0xf]
        %v807 = vld [vmem:[%s5 + $0xa4] sm:$0xf]
        %v808 = vld [vmem:[%s5 + $0xa8] sm:$0xf]
        %v809 = vld [vmem:[%s5 + $0xac] sm:$0xf]
        %v810 = vld [vmem:[%s5 + $0xb0] sm:$0xf]
        %v811 = vld [vmem:[%s5 + $0xb4] sm:$0xf]
        %v812 = vld [vmem:[%s5 + $0xb8] sm:$0xf]
        %v813 = vld [vmem:[%s5 + $0xbc] sm:$0xf]
        %v814 = vld [vmem:[%s5 + $0xc0] sm:$0xf]
        %v815 = vld [vmem:[%s5 + $0xc4] sm:$0xf]
        %v816 = vld [vmem:[%s5 + $0xc8] sm:$0xf]
        %v817 = vld [vmem:[%s5 + $0xcc] sm:$0xf]
        %v818 = vld [vmem:[%s5 + $0xd0] sm:$0xf]
        %v819 = vld [vmem:[%s5 + $0xd4] sm:$0xf]
        %v820 = vld [vmem:[%s5 + $0xd8] sm:$0xf]
        %v821 = vld [vmem:[%s5 + $0xdc] sm:$0xf]
        %v822 = vld [vmem:[%s5 + $0xe0] sm:$0xf]
        %v823 = vld [vmem:[%s5 + $0xe4] sm:$0xf]
        %v824 = vld [vmem:[%s5 + $0xe8] sm:$0xf]
        %v825 = vld [vmem:[%s5 + $0xec] sm:$0xf]
        %v826 = vld [vmem:[%s5 + $0xf0] sm:$0xf]
        %v827 = vld [vmem:[%s5 + $0xf4] sm:$0xf]
        %v828 = vld [vmem:[%s5 + $0xf8] sm:$0xf]
        %v829 = vld [vmem:[%s5 + $0xfc] sm:$0xf]
        %v830 = vld [vmem:[%s5 + $0x100] sm:$0xf]
        %v831 = vld [vmem:[%s5 + $0x104] sm:$0xf]
        %v832 = vld [vmem:[%s5 + $0x108] sm:$0xf]
        %v833 = vld [vmem:[%s5 + $0x10c] sm:$0xf]
        %v834 = vld [vmem:[%s5 + $0x110] sm:$0xf]
        %v835 = vld [vmem:[%s5 + $0x114] sm:$0xf]
        %v836 = vld [vmem:[%s5 + $0x118] sm:$0xf]
        %v837 = vld [vmem:[%s5 + $0x11c] sm:$0xf]
        %v838 = vld [vmem:[%s5 + $0x120] sm:$0xf]
        %v839 = vld [vmem:[%s5 + $0x124] sm:$0xf]
        %v840 = vld [vmem:[%s5 + $0x128] sm:$0xf]
        %v841 = vld [vmem:[%s5 + $0x12c] sm:$0xf]
        %v842 = vld [vmem:[%s5 + $0x130] sm:$0xf]
        %v843 = vld [vmem:[%s5 + $0x134] sm:$0xf]
        %v844 = vld [vmem:[%s5 + $0x138] sm:$0xf]
        %v845 = vld [vmem:[%s5 + $0x13c] sm:$0xf]
        %v846 = vld [vmem:[%s5 + $0x140] sm:$0xf]
        %v847 = vld [vmem:[%s5 + $0x144] sm:$0xf]
        %v848 = vld [vmem:[%s5 + $0x148] sm:$0xf]
        %v849 = vld [vmem:[%s5 + $0x14c] sm:$0xf]
        %v850 = vld [vmem:[%s5 + $0x150] sm:$0xf]
        %v851 = vld [vmem:[%s5 + $0x154] sm:$0xf]
        %v852 = vld [vmem:[%s5 + $0x158] sm:$0xf]
        %v853 = vld [vmem:[%s5 + $0x15c] sm:$0xf]
        %v854 = vld [vmem:[%s5 + $0x160] sm:$0xf]
        %v855 = vld [vmem:[%s5 + $0x164] sm:$0xf]
        %v856 = vld [vmem:[%s5 + $0x168] sm:$0xf]
        %v857 = vld [vmem:[%s5 + $0x16c] sm:$0xf]
        %v858 = vld [vmem:[%s5 + $0x170] sm:$0xf]
        %v859 = vld [vmem:[%s5 + $0x174] sm:$0xf]
        %v860 = vld [vmem:[%s5 + $0x178] sm:$0xf]
        %v861 = vld [vmem:[%s5 + $0x17c] sm:$0xf]
        %v862 = vld [vmem:[%s5 + $0x180] sm:$0xf]
        %v863 = vld [vmem:[%s5 + $0x184] sm:$0xf]
        %v864 = vld [vmem:[%s5 + $0x188] sm:$0xf]
        %v865 = vld [vmem:[%s5 + $0x18c] sm:$0xf]
        %v866 = vld [vmem:[%s5 + $0x190] sm:$0xf]
        %v867 = vld [vmem:[%s5 + $0x194] sm:$0xf]
        %v868 = vld [vmem:[%s5 + $0x198] sm:$0xf]
        %v869 = vld [vmem:[%s5 + $0x19c] sm:$0xf]
        %v870 = vld [vmem:[%s5 + $0x1a0] sm:$0xf]
        %v871 = vld [vmem:[%s5 + $0x1a4] sm:$0xf]
        %v872 = vld [vmem:[%s5 + $0x1a8] sm:$0xf]
        %v873 = vld [vmem:[%s5 + $0x1ac] sm:$0xf]
        %v874 = vld [vmem:[%s5 + $0x1b0] sm:$0xf]
        %v875 = vld [vmem:[%s5 + $0x1b4] sm:$0xf]
        %v876 = vld [vmem:[%s5 + $0x1b8] sm:$0xf]
        %v877 = vld [vmem:[%s5 + $0x1bc] sm:$0xf]
        %v878 = vld [vmem:[%s5 + $0x1c0] sm:$0xf]
        %v879 = vld [vmem:[%s5 + $0x1c4] sm:$0xf]
        %v880 = vld [vmem:[%s5 + $0x1c8] sm:$0xf]
        %v881 = vld [vmem:[%s5 + $0x1cc] sm:$0xf]
        %v882 = vld [vmem:[%s5 + $0x1d0] sm:$0xf]
        %v883 = vld [vmem:[%s5 + $0x1d4] sm:$0xf]
        %v884 = vld [vmem:[%s5 + $0x1d8] sm:$0xf]
        %v885 = vld [vmem:[%s5 + $0x1dc] sm:$0xf]
        %v886 = vld [vmem:[%s5 + $0x1e0] sm:$0xf]
        %v887 = vld [vmem:[%s5 + $0x1e4] sm:$0xf]
        %v888 = vld [vmem:[%s5 + $0x1e8] sm:$0xf]
        %v889 = vld [vmem:[%s5 + $0x1ec] sm:$0xf]
        %v890 = vld [vmem:[%s5 + $0x1f0] sm:$0xf]
        %v891 = vld [vmem:[%s5 + $0x1f4] sm:$0xf]
        %v892 = vld [vmem:[%s5 + $0x1f8] sm:$0xf]
        %v893 = vld [vmem:[%s5 + $0x1fc] sm:$0xf]
        %v894 = vld [vmem:[%s5 + $0x200] sm:$0xf]
        %v895 = vld [vmem:[%s5 + $0x204] sm:$0xf]
        %v896 = vld [vmem:[%s5 + $0x208] sm:$0xf]
        %v897 = vld [vmem:[%s5 + $0x20c] sm:$0xf]
        %v898 = vld [vmem:[%s5 + $0x210] sm:$0xf]
        %v899 = vld [vmem:[%s5 + $0x214] sm:$0xf]
        %v900 = vld [vmem:[%s5 + $0x218] sm:$0xf]
        %v901 = vld [vmem:[%s5 + $0x21c] sm:$0xf]
        %v902 = vld [vmem:[%s5 + $0x220] sm:$0xf]
        %v903 = vld [vmem:[%s5 + $0x224] sm:$0xf]
        %v904 = vld [vmem:[%s5 + $0x228] sm:$0xf]
        %v905 = vld [vmem:[%s5 + $0x22c] sm:$0xf]
        %v906 = vld [vmem:[%s5 + $0x230] sm:$0xf]
        %v907 = vld [vmem:[%s5 + $0x234] sm:$0xf]
        %v908 = vld [vmem:[%s5 + $0x238] sm:$0xf]
        %v909 = vld [vmem:[%s5 + $0x23c] sm:$0xf]
        %v1054 = vunpack.c.l.b16 %v766
        %v1055 = vunpack.c.l.b16 %v767
        %v1056 = vunpack.c.l.b16 %v768
        %v1057 = vunpack.c.l.b16 %v769
        %v1058 = vunpack.c.l.b16 %v770
        %v1059 = vunpack.c.l.b16 %v771
        %v1060 = vunpack.c.l.b16 %v772
        %v1061 = vunpack.c.l.b16 %v773
        %v1062 = vunpack.c.l.b16 %v774
        %v1063 = vunpack.c.l.b16 %v775
        %v1064 = vunpack.c.l.b16 %v776
        %v1065 = vunpack.c.l.b16 %v777
        %v1066 = vunpack.c.l.b16 %v778
        %v1067 = vunpack.c.l.b16 %v779
        %v1068 = vunpack.c.l.b16 %v780
        %v1069 = vunpack.c.l.b16 %v781
        %v1070 = vunpack.c.l.b16 %v782
        %v1071 = vunpack.c.l.b16 %v783
        %v1072 = vunpack.c.l.b16 %v784
        %v1073 = vunpack.c.l.b16 %v785
        %v1074 = vunpack.c.l.b16 %v786
        %v1075 = vunpack.c.l.b16 %v787
        %v1076 = vunpack.c.l.b16 %v788
        %v1077 = vunpack.c.l.b16 %v789
        %v1078 = vunpack.c.l.b16 %v790
        %v1079 = vunpack.c.l.b16 %v791
        %v1080 = vunpack.c.l.b16 %v792
        %v1081 = vunpack.c.l.b16 %v793
        %v1082 = vunpack.c.l.b16 %v794
        %v1083 = vunpack.c.l.b16 %v795
        %v1084 = vunpack.c.l.b16 %v796
        %v1085 = vunpack.c.l.b16 %v797
        %v1086 = vunpack.c.l.b16 %v798
        %v1087 = vunpack.c.l.b16 %v799
        %v1088 = vunpack.c.l.b16 %v800
        %v1089 = vunpack.c.l.b16 %v801
        %v1090 = vunpack.c.l.b16 %v802
        %v1091 = vunpack.c.l.b16 %v803
        %v1092 = vunpack.c.l.b16 %v804
        %v1093 = vunpack.c.l.b16 %v805
        %v1094 = vunpack.c.l.b16 %v806
        %v1095 = vunpack.c.l.b16 %v807
        %v1096 = vunpack.c.l.b16 %v808
        %v1097 = vunpack.c.l.b16 %v809
        %v1098 = vunpack.c.l.b16 %v810
        %v1099 = vunpack.c.l.b16 %v811
        %v1100 = vunpack.c.l.b16 %v812
        %v1101 = vunpack.c.l.b16 %v813
        %v1102 = vunpack.c.l.b16 %v814
        %v1103 = vunpack.c.l.b16 %v815
        %v1104 = vunpack.c.l.b16 %v816
        %v1105 = vunpack.c.l.b16 %v817
        %v1106 = vunpack.c.l.b16 %v818
        %v1107 = vunpack.c.l.b16 %v819
        %v1108 = vunpack.c.l.b16 %v820
        %v1109 = vunpack.c.l.b16 %v821
        %v1110 = vunpack.c.l.b16 %v822
        %v1111 = vunpack.c.l.b16 %v823
        %v1112 = vunpack.c.l.b16 %v824
        %v1113 = vunpack.c.l.b16 %v825
        %v1114 = vunpack.c.l.b16 %v826
        %v1115 = vunpack.c.l.b16 %v827
        %v1116 = vunpack.c.l.b16 %v828
        %v1117 = vunpack.c.l.b16 %v829
        %v1118 = vunpack.c.l.b16 %v830
        %v1119 = vunpack.c.l.b16 %v831
        %v1120 = vunpack.c.l.b16 %v832
        %v1121 = vunpack.c.l.b16 %v833
        %v1122 = vunpack.c.l.b16 %v834
        %v1123 = vunpack.c.l.b16 %v835
        %v1124 = vunpack.c.l.b16 %v836
        %v1125 = vunpack.c.l.b16 %v837
        %v1126 = vunpack.c.l.b16 %v838
        %v1127 = vunpack.c.l.b16 %v839
        %v1128 = vunpack.c.l.b16 %v840
        %v1129 = vunpack.c.l.b16 %v841
        %v1130 = vunpack.c.l.b16 %v842
        %v1131 = vunpack.c.l.b16 %v843
        %v1132 = vunpack.c.l.b16 %v844
        %v1133 = vunpack.c.l.b16 %v845
        %v1134 = vunpack.c.l.b16 %v846
        %v1135 = vunpack.c.l.b16 %v847
        %v1136 = vunpack.c.l.b16 %v848
        %v1137 = vunpack.c.l.b16 %v849
        %v1138 = vunpack.c.l.b16 %v850
        %v1139 = vunpack.c.l.b16 %v851
        %v1140 = vunpack.c.l.b16 %v852
        %v1141 = vunpack.c.l.b16 %v853
        %v1142 = vunpack.c.l.b16 %v854
        %v1143 = vunpack.c.l.b16 %v855
        %v1144 = vunpack.c.l.b16 %v856
        %v1145 = vunpack.c.l.b16 %v857
        %v1146 = vunpack.c.l.b16 %v858
        %v1147 = vunpack.c.l.b16 %v859
        %v1148 = vunpack.c.l.b16 %v860
        %v1149 = vunpack.c.l.b16 %v861
        %v1150 = vunpack.c.l.b16 %v862
        %v1151 = vunpack.c.l.b16 %v863
        %v1152 = vunpack.c.l.b16 %v864
        %v1153 = vunpack.c.l.b16 %v865
        %v1154 = vunpack.c.l.b16 %v866
        %v1155 = vunpack.c.l.b16 %v867
        %v1156 = vunpack.c.l.b16 %v868
        %v1157 = vunpack.c.l.b16 %v869
        %v1158 = vunpack.c.l.b16 %v870
        %v1159 = vunpack.c.l.b16 %v871
        %v1160 = vunpack.c.l.b16 %v872
        %v1161 = vunpack.c.l.b16 %v873
        %v1162 = vunpack.c.l.b16 %v874
        %v1163 = vunpack.c.l.b16 %v875
        %v1164 = vunpack.c.l.b16 %v876
        %v1165 = vunpack.c.l.b16 %v877
        %v1166 = vunpack.c.l.b16 %v878
        %v1167 = vunpack.c.l.b16 %v879
        %v1168 = vunpack.c.l.b16 %v880
        %v1169 = vunpack.c.l.b16 %v881
        %v1170 = vunpack.c.l.b16 %v882
        %v1171 = vunpack.c.l.b16 %v883
        %v1172 = vunpack.c.l.b16 %v884
        %v1173 = vunpack.c.l.b16 %v885
        %v1174 = vunpack.c.l.b16 %v886
        %v1175 = vunpack.c.l.b16 %v887
        %v1176 = vunpack.c.l.b16 %v888
        %v1177 = vunpack.c.l.b16 %v889
        %v1178 = vunpack.c.l.b16 %v890
        %v1179 = vunpack.c.l.b16 %v891
        %v1180 = vunpack.c.l.b16 %v892
        %v1181 = vunpack.c.l.b16 %v893
        %v1182 = vunpack.c.l.b16 %v894
        %v1183 = vunpack.c.l.b16 %v895
        %v1184 = vunpack.c.l.b16 %v896
        %v1185 = vunpack.c.l.b16 %v897
        %v1186 = vunpack.c.l.b16 %v898
        %v1187 = vunpack.c.l.b16 %v899
        %v1188 = vunpack.c.l.b16 %v900
        %v1189 = vunpack.c.l.b16 %v901
        %v1190 = vunpack.c.l.b16 %v902
        %v1191 = vunpack.c.l.b16 %v903
        %v1192 = vunpack.c.l.b16 %v904
        %v1193 = vunpack.c.l.b16 %v905
        %v1194 = vunpack.c.l.b16 %v906
        %v1195 = vunpack.c.l.b16 %v907
        %v1196 = vunpack.c.l.b16 %v908
        %v1197 = vunpack.c.l.b16 %v909
        %v1198 = vpack.c.b16 %v1055, %v1054
        %v1199 = vpack.c.b16 %v1057, %v1056
        %v1200 = vpack.c.b16 %v1059, %v1058
        %v1201 = vpack.c.b16 %v1061, %v1060
        %v1202 = vpack.c.b16 %v1063, %v1062
        %v1203 = vpack.c.b16 %v1065, %v1064
        %v1204 = vpack.c.b16 %v1067, %v1066
        %v1205 = vpack.c.b16 %v1069, %v1068
        %v1206 = vpack.c.b16 %v1071, %v1070
        %v1207 = vpack.c.b16 %v1073, %v1072
        %v1208 = vpack.c.b16 %v1075, %v1074
        %v1209 = vpack.c.b16 %v1077, %v1076
        %v1210 = vpack.c.b16 %v1079, %v1078
        %v1211 = vpack.c.b16 %v1081, %v1080
        %v1212 = vpack.c.b16 %v1083, %v1082
        %v1213 = vpack.c.b16 %v1085, %v1084
        %v1214 = vpack.c.b16 %v1087, %v1086
        %v1215 = vpack.c.b16 %v1089, %v1088
        %v1216 = vpack.c.b16 %v1091, %v1090
        %v1217 = vpack.c.b16 %v1093, %v1092
        %v1218 = vpack.c.b16 %v1095, %v1094
        %v1219 = vpack.c.b16 %v1097, %v1096
        %v1220 = vpack.c.b16 %v1099, %v1098
        %v1221 = vpack.c.b16 %v1101, %v1100
        %v1222 = vpack.c.b16 %v1103, %v1102
        %v1223 = vpack.c.b16 %v1105, %v1104
        %v1224 = vpack.c.b16 %v1107, %v1106
        %v1225 = vpack.c.b16 %v1109, %v1108
        %v1226 = vpack.c.b16 %v1111, %v1110
        %v1227 = vpack.c.b16 %v1113, %v1112
        %v1228 = vpack.c.b16 %v1115, %v1114
        %v1229 = vpack.c.b16 %v1117, %v1116
        %v1230 = vpack.c.b16 %v1119, %v1118
        %v1231 = vpack.c.b16 %v1121, %v1120
        %v1232 = vpack.c.b16 %v1123, %v1122
        %v1233 = vpack.c.b16 %v1125, %v1124
        %v1234 = vpack.c.b16 %v1127, %v1126
        %v1235 = vpack.c.b16 %v1129, %v1128
        %v1236 = vpack.c.b16 %v1131, %v1130
        %v1237 = vpack.c.b16 %v1133, %v1132
        %v1238 = vpack.c.b16 %v1135, %v1134
        %v1239 = vpack.c.b16 %v1137, %v1136
        %v1240 = vpack.c.b16 %v1139, %v1138
        %v1241 = vpack.c.b16 %v1141, %v1140
        %v1242 = vpack.c.b16 %v1143, %v1142
        %v1243 = vpack.c.b16 %v1145, %v1144
        %v1244 = vpack.c.b16 %v1147, %v1146
        %v1245 = vpack.c.b16 %v1149, %v1148
        %v1246 = vpack.c.b16 %v1151, %v1150
        %v1247 = vpack.c.b16 %v1153, %v1152
        %v1248 = vpack.c.b16 %v1155, %v1154
        %v1249 = vpack.c.b16 %v1157, %v1156
        %v1250 = vpack.c.b16 %v1159, %v1158
        %v1251 = vpack.c.b16 %v1161, %v1160
        %v1252 = vpack.c.b16 %v1163, %v1162
        %v1253 = vpack.c.b16 %v1165, %v1164
        %v1254 = vpack.c.b16 %v1167, %v1166
        %v1255 = vpack.c.b16 %v1169, %v1168
        %v1256 = vpack.c.b16 %v1171, %v1170
        %v1257 = vpack.c.b16 %v1173, %v1172
        %v1258 = vpack.c.b16 %v1175, %v1174
        %v1259 = vpack.c.b16 %v1177, %v1176
        %v1260 = vpack.c.b16 %v1179, %v1178
        %v1261 = vpack.c.b16 %v1181, %v1180
        %v1262 = vpack.c.b16 %v1183, %v1182
        %v1263 = vpack.c.b16 %v1185, %v1184
        %v1264 = vpack.c.b16 %v1187, %v1186
        %v1265 = vpack.c.b16 %v1189, %v1188
        %v1266 = vpack.c.b16 %v1191, %v1190
        %v1267 = vpack.c.b16 %v1193, %v1192
        %v1268 = vpack.c.b16 %v1195, %v1194
        %v1269 = vpack.c.b16 %v1197, %v1196
        %1342 = vmatpush.bf16.msra.mxu0 %v1205
        %1343 = vmatpush.bf16.msra.mxu0 %v1204
        %1344 = vmatpush.bf16.msra.mxu0 %v1203
        %1345 = vmatpush.bf16.msra.mxu0 %v1202
        %1346 = vmatpush.bf16.msra.mxu0 %v1201
        %1347 = vmatpush.bf16.msra.mxu0 %v1200
        %1348 = vmatpush.bf16.msra.mxu0 %v1199
        %1349 = vmatpush.bf16.msra.mxu0 %v1198
        %1350 = vmatmul.bf16.gmra.mxu0 %v755
        %v1351 = vpop.f32.mrf.mxu0
        %v1352 = vadd.f32 0.0, %v1351
        %v1353 = vpop.f32.mrf.mxu0
        %v1354 = vadd.f32 0.0, %v1353
        %1355 = vdwg.mxu0
        %1356 = vmatpush.bf16.msra.mxu0 %v1213
        %1357 = vmatpush.bf16.msra.mxu0 %v1212
        %1358 = vmatpush.bf16.msra.mxu0 %v1211
        %1359 = vmatpush.bf16.msra.mxu0 %v1210
        %1360 = vmatpush.bf16.msra.mxu0 %v1209
        %1361 = vmatpush.bf16.msra.mxu0 %v1208
        %1362 = vmatpush.bf16.msra.mxu0 %v1207
        %1363 = vmatpush.bf16.msra.mxu0 %v1206
        %1364 = vmatmul.bf16.gmra.mxu0 %v756
        %v1365 = vpop.f32.mrf.mxu0
        %v1366 = vadd.f32 %v1352, %v1365
        %v1367 = vpop.f32.mrf.mxu0
        %v1368 = vadd.f32 %v1354, %v1367
        %1369 = vdwg.mxu0
        %1370 = vmatpush.bf16.msra.mxu0 %v1221
        %1371 = vmatpush.bf16.msra.mxu0 %v1220
        %1372 = vmatpush.bf16.msra.mxu0 %v1219
        %1373 = vmatpush.bf16.msra.mxu0 %v1218
        %1374 = vmatpush.bf16.msra.mxu0 %v1217
        %1375 = vmatpush.bf16.msra.mxu0 %v1216
        %1376 = vmatpush.bf16.msra.mxu0 %v1215
        %1377 = vmatpush.bf16.msra.mxu0 %v1214
        %1378 = vmatmul.bf16.gmra.mxu0 %v757
        %v1379 = vpop.f32.mrf.mxu0
        %v1380 = vadd.f32 %v1366, %v1379
        %v1381 = vpop.f32.mrf.mxu0
        %v1382 = vadd.f32 %v1368, %v1381
        %1383 = vdwg.mxu0
        %1384 = vmatpush.bf16.msra.mxu0 %v1229
        %1385 = vmatpush.bf16.msra.mxu0 %v1228
        %1386 = vmatpush.bf16.msra.mxu0 %v1227
        %1387 = vmatpush.bf16.msra.mxu0 %v1226
        %1388 = vmatpush.bf16.msra.mxu0 %v1225
        %1389 = vmatpush.bf16.msra.mxu0 %v1224
        %1390 = vmatpush.bf16.msra.mxu0 %v1223
        %1391 = vmatpush.bf16.msra.mxu0 %v1222
        %1392 = vmatmul.bf16.gmra.mxu0 %v758
        %v1393 = vpop.f32.mrf.mxu0
        %v1394 = vadd.f32 %v1380, %v1393
        %v1395 = vpop.f32.mrf.mxu0
        %v1396 = vadd.f32 %v1382, %v1395
        %1397 = vdwg.mxu0
        %1398 = vmatpush.bf16.msra.mxu0 %v1237
        %1399 = vmatpush.bf16.msra.mxu0 %v1236
        %1400 = vmatpush.bf16.msra.mxu0 %v1235
        %1401 = vmatpush.bf16.msra.mxu0 %v1234
        %1402 = vmatpush.bf16.msra.mxu0 %v1233
        %1403 = vmatpush.bf16.msra.mxu0 %v1232
        %1404 = vmatpush.bf16.msra.mxu0 %v1231
        %1405 = vmatpush.bf16.msra.mxu0 %v1230
        %1406 = vmatmul.bf16.gmra.mxu0 %v759
        %v1407 = vpop.f32.mrf.mxu0
        %v1408 = vadd.f32 %v1394, %v1407
        %v1409 = vpop.f32.mrf.mxu0
        %v1410 = vadd.f32 %v1396, %v1409
        %1411 = vdwg.mxu0
        %1412 = vmatpush.bf16.msra.mxu0 %v1245
        %1413 = vmatpush.bf16.msra.mxu0 %v1244
        %1414 = vmatpush.bf16.msra.mxu0 %v1243
        %1415 = vmatpush.bf16.msra.mxu0 %v1242
        %1416 = vmatpush.bf16.msra.mxu0 %v1241
        %1417 = vmatpush.bf16.msra.mxu0 %v1240
        %1418 = vmatpush.bf16.msra.mxu0 %v1239
        %1419 = vmatpush.bf16.msra.mxu0 %v1238
        %1420 = vmatmul.bf16.gmra.mxu0 %v760
        %v1421 = vpop.f32.mrf.mxu0
        %v1422 = vadd.f32 %v1408, %v1421
        %v1423 = vpop.f32.mrf.mxu0
        %v1424 = vadd.f32 %v1410, %v1423
        %1425 = vdwg.mxu0
        %1426 = vmatpush.bf16.msra.mxu0 %v1253
        %1427 = vmatpush.bf16.msra.mxu0 %v1252
        %1428 = vmatpush.bf16.msra.mxu0 %v1251
        %1429 = vmatpush.bf16.msra.mxu0 %v1250
        %1430 = vmatpush.bf16.msra.mxu0 %v1249
        %1431 = vmatpush.bf16.msra.mxu0 %v1248
        %1432 = vmatpush.bf16.msra.mxu0 %v1247
        %1433 = vmatpush.bf16.msra.mxu0 %v1246
        %1434 = vmatmul.bf16.gmra.mxu0 %v761
        %v1435 = vpop.f32.mrf.mxu0
        %v1436 = vadd.f32 %v1422, %v1435
        %v1437 = vpop.f32.mrf.mxu0
        %v1438 = vadd.f32 %v1424, %v1437
        %1439 = vdwg.mxu0
        %1440 = vmatpush.bf16.msra.mxu0 %v1261
        %1441 = vmatpush.bf16.msra.mxu0 %v1260
        %1442 = vmatpush.bf16.msra.mxu0 %v1259
        %1443 = vmatpush.bf16.msra.mxu0 %v1258
        %1444 = vmatpush.bf16.msra.mxu0 %v1257
        %1445 = vmatpush.bf16.msra.mxu0 %v1256
        %1446 = vmatpush.bf16.msra.mxu0 %v1255
        %1447 = vmatpush.bf16.msra.mxu0 %v1254
        %1448 = vmatmul.bf16.gmra.mxu0 %v762
        %v1449 = vpop.f32.mrf.mxu0
        %v1450 = vadd.f32 %v1436, %v1449
        %v1451 = vpop.f32.mrf.mxu0
        %v1452 = vadd.f32 %v1438, %v1451
        %1453 = vdwg.mxu0
        %1454 = vmatpush.bf16.msra.mxu0 %v1269
        %1455 = vmatpush.bf16.msra.mxu0 %v1268
        %1456 = vmatpush.bf16.msra.mxu0 %v1267
        %1457 = vmatpush.bf16.msra.mxu0 %v1266
        %1458 = vmatpush.bf16.msra.mxu0 %v1265
        %1459 = vmatpush.bf16.msra.mxu0 %v1264
        %1460 = vmatpush.bf16.msra.mxu0 %v1263
        %1461 = vmatpush.bf16.msra.mxu0 %v1262
        %1462 = vmatmul.bf16.gmra.mxu0 %v763
        %v1463 = vpop.f32.mrf.mxu0
        %v1464 = vadd.f32 %v1450, %v1463
        %v1465 = vpop.f32.mrf.mxu0
        %v1466 = vadd.f32 %v1452, %v1465
        %1467 = vdwg.mxu0
        %v1468 = vadd.f32 %v764, %v1464
        %v1469 = vadd.f32 %v765, %v1466
        %1470 = vst [vmem:[%s471] sm:$0xff] %v1468
        %1471 = vst [vmem:[%s471 + $0x8] sm:$0xff] %v1469
      $region52: #{preact_bottleneck.6} parent=47 // pred_fallthru
        _
      %s1472 = sadd.s32 %s26, 1
      %p1473 = scmp.ge.s32.totalorder %s1472, 1
      %p1474 = scmp.le.s32.totalorder %s1472, 4
      %p1475 = pnand %p1473, %p1474
      %p1476 = pneg %p1475
      // Predicated region
      $region53: #{preact_bottleneck.6} parent=47 // pred_check
        _
      $region54: #{preact_bottleneck.6} parent=47 // pred_check_branch
        %1478 = sbr.rel (%p1475) target = $region56
      $region55: #{preact_bottleneck.6} parent=47 // pred_region
        %v1479 = vld [vmem:[%s450] sm:$0x3f]
        %v1480 = vld [vmem:[%s450 + $0x8] sm:$0x3f]
        %v1481 = vld [vmem:[%s450 + $0x10] sm:$0x3f]
        %v1482 = vld [vmem:[%s450 + $0x18] sm:$0x3f]
        %v1483 = vld [vmem:[%s450 + $0x20] sm:$0x3f]
        %v1484 = vld [vmem:[%s450 + $0x28] sm:$0x3f]
        %v1486 = vperm.slane %v544, 0
        %v1488 = vmul.f32 %v1479, %v1486
        %v1489 = vmul.f32 %v1480, %v1486
        %v1490 = vmul.f32 %v1481, %v1486
        %v1491 = vmul.f32 %v1482, %v1486
        %v1492 = vmul.f32 %v1483, %v1486
        %v1493 = vmul.f32 %v1484, %v1486
        %v1495 = vperm.slane %v545, 0
        %v1497 = vadd.f32 %v1488, %v1495
        %v1498 = vadd.f32 %v1489, %v1495
        %v1499 = vadd.f32 %v1490, %v1495
        %v1500 = vadd.f32 %v1491, %v1495
        %v1501 = vadd.f32 %v1492, %v1495
        %v1502 = vadd.f32 %v1493, %v1495
        %v1503 = vmax.f32 %v1497, 0.0
        %v1504 = vmax.f32 %v1498, 0.0
        %v1505 = vmax.f32 %v1499, 0.0
        %v1506 = vmax.f32 %v1500, 0.0
        %v1507 = vmax.f32 %v1501, 0.0
        %v1508 = vmax.f32 %v1502, 0.0
        %v1509 = vmul.f32 %v1503, %v508
        %v1510 = vmul.f32 %v1504, %v515
        %v1511 = vmul.f32 %v1505, %v522
        %v1512 = vmul.f32 %v1506, %v529
        %v1513 = vmul.f32 %v1507, %v536
        %v1514 = vmul.f32 %v1508, %v543
        %v1519 = vrot.slane %v1509, 4
        %v1520 = vrot.slane %v1510, 4
        %v1521 = vrot.slane %v1511, 4
        %v1522 = vrot.slane %v1512, 4
        %vm1523 = vcmask 1042432
        %vm1524 = vcmask 1046532
        %vm1525 = vmor %vm1523, %vm1524
        %v1526 = vrot.slane %v1509, 5
        %v1527 = vrot.slane %v1526, 4
        %v1528 = vrot.slane %v1519, 5
        %v1529 = vsel %vm1525, %v1527, %v1528
        %v1530 = vrot.slane %v1510, 5
        %v1531 = vrot.slane %v1530, 4
        %v1532 = vrot.slane %v1520, 5
        %v1533 = vsel %vm1525, %v1531, %v1532
        %v1534 = vrot.slane %v1511, 5
        %v1535 = vrot.slane %v1534, 4
        %v1536 = vrot.slane %v1521, 5
        %v1537 = vsel %vm1525, %v1535, %v1536
        %v1538 = vrot.slane %v1512, 5
        %v1539 = vrot.slane %v1538, 4
        %v1540 = vrot.slane %v1522, 5
        %v1541 = vsel %vm1525, %v1539, %v1540
        %vm1542 = vcmask 1041408
        %vm1543 = vcmask 1045508
        %vm1544 = vmor %vm1542, %vm1543
        %v1545 = vrot.slane %v1509, 6
        %v1546 = vrot.slane %v1545, 4
        %v1547 = vrot.slane %v1519, 6
        %v1548 = vsel %vm1544, %v1546, %v1547
        %v1549 = vrot.slane %v1510, 6
        %v1550 = vrot.slane %v1549, 4
        %v1551 = vrot.slane %v1520, 6
        %v1552 = vsel %vm1544, %v1550, %v1551
        %v1553 = vrot.slane %v1511, 6
        %v1554 = vrot.slane %v1553, 4
        %v1555 = vrot.slane %v1521, 6
        %v1556 = vsel %vm1544, %v1554, %v1555
        %v1557 = vrot.slane %v1512, 6
        %v1558 = vrot.slane %v1557, 4
        %v1559 = vrot.slane %v1522, 6
        %v1560 = vsel %vm1544, %v1558, %v1559
        %v1562 = vrot.slane %v1513, 4
        %v1563 = vrot.slane %v1513, 5
        %v1564 = vrot.slane %v1563, 4
        %v1565 = vrot.slane %v1562, 5
        %v1566 = vsel %vm1525, %v1564, %v1565
        %v1567 = vrot.slane %v1513, 6
        %v1568 = vrot.slane %v1567, 4
        %v1569 = vrot.slane %v1562, 6
        %v1570 = vsel %vm1544, %v1568, %v1569
        %v1572 = vrot.slane %v1514, 4
        %v1573 = vrot.slane %v1514, 5
        %v1574 = vrot.slane %v1573, 4
        %v1575 = vrot.slane %v1572, 5
        %v1576 = vsel %vm1525, %v1574, %v1575
        %v1577 = vrot.slane %v1514, 6
        %v1578 = vrot.slane %v1577, 4
        %v1579 = vrot.slane %v1572, 6
        %v1580 = vsel %vm1544, %v1578, %v1579
        %1581 = vst [vmem:[#allocation1] ss:$2 sm:$0xff] %v1509
        %s1582 = scalar_lea.vmem [#allocation1], 1
        %1583 = vst [vmem:[%s1582] ss:$2 sm:$0xff] %v1510
        %s1584 = scalar_lea.vmem [#allocation1], 16
        %1585 = vst [vmem:[%s1584] ss:$2 sm:$0xff] %v1511
        %s1586 = scalar_lea.vmem [#allocation1], 17
        %1587 = vst [vmem:[%s1586] ss:$2 sm:$0xff] %v1512
        %v1588 = vld.sshfl [vmem:[#allocation1] sm:$0xff pattern:$0x75316420]
        %v1589 = vld.sshfl [vmem:[#allocation1 + $0x10] sm:$0xff pattern:$0x75316420]
        %1592 = vst [vmem:[#allocation1] ss:$2 sm:$0xff] %v1529
        %s1593 = scalar_lea.vmem [#allocation1], 1
        %1594 = vst [vmem:[%s1593] ss:$2 sm:$0xff] %v1533
        %s1595 = scalar_lea.vmem [#allocation1], 16
        %1596 = vst [vmem:[%s1595] ss:$2 sm:$0xff] %v1537
        %s1597 = scalar_lea.vmem [#allocation1], 17
        %1598 = vst [vmem:[%s1597] ss:$2 sm:$0xff] %v1541
        %v1599 = vld.sshfl [vmem:[#allocation1] sm:$0xff pattern:$0x75316420]
        %v1600 = vld.sshfl [vmem:[#allocation1 + $0x10] sm:$0xff pattern:$0x75316420]
        %1603 = vst [vmem:[#allocation1] ss:$2 sm:$0xff] %v1548
        %s1604 = scalar_lea.vmem [#allocation1], 1
        %1605 = vst [vmem:[%s1604] ss:$2 sm:$0xff] %v1552
        %s1606 = scalar_lea.vmem [#allocation1], 16
        %1607 = vst [vmem:[%s1606] ss:$2 sm:$0xff] %v1556
        %s1608 = scalar_lea.vmem [#allocation1], 17
        %1609 = vst [vmem:[%s1608] ss:$2 sm:$0xff] %v1560
        %v1610 = vld.sshfl [vmem:[#allocation1] sm:$0xff pattern:$0x75316420]
        %v1611 = vld.sshfl [vmem:[#allocation1 + $0x10] sm:$0xff pattern:$0x75316420]
        %1614 = vst [vmem:[#allocation1] ss:$2 sm:$0xff] %v1510
        %s1615 = scalar_lea.vmem [#allocation1], 1
        %1616 = vst [vmem:[%s1615] ss:$2 sm:$0xff] %v1511
        %s1617 = scalar_lea.vmem [#allocation1], 16
        %1618 = vst [vmem:[%s1617] ss:$2 sm:$0xff] %v1512
        %s1619 = scalar_lea.vmem [#allocation1], 17
        %1620 = vst [vmem:[%s1619] ss:$2 sm:$0xff] %v1513
        %v1621 = vld.sshfl [vmem:[#allocation1] sm:$0xff pattern:$0x75316420]
        %v1622 = vld.sshfl [vmem:[#allocation1 + $0x10] sm:$0xff pattern:$0x75316420]
        %1625 = vst [vmem:[#allocation1] ss:$2 sm:$0xff] %v1533
        %s1626 = scalar_lea.vmem [#allocation1], 1
        %1627 = vst [vmem:[%s1626] ss:$2 sm:$0xff] %v1537
        %s1628 = scalar_lea.vmem [#allocation1], 16
        %1629 = vst [vmem:[%s1628] ss:$2 sm:$0xff] %v1541
        %s1630 = scalar_lea.vmem [#allocation1], 17
        %1631 = vst [vmem:[%s1630] ss:$2 sm:$0xff] %v1566
        %v1632 = vld.sshfl [vmem:[#allocation1] sm:$0xff pattern:$0x75316420]
        %v1633 = vld.sshfl [vmem:[#allocation1 + $0x10] sm:$0xff pattern:$0x75316420]
        %1636 = vst [vmem:[#allocation1] ss:$2 sm:$0xff] %v1552
        %s1637 = scalar_lea.vmem [#allocation1], 1
        %1638 = vst [vmem:[%s1637] ss:$2 sm:$0xff] %v1556
        %s1639 = scalar_lea.vmem [#allocation1], 16
        %1640 = vst [vmem:[%s1639] ss:$2 sm:$0xff] %v1560
        %s1641 = scalar_lea.vmem [#allocation1], 17
        %1642 = vst [vmem:[%s1641] ss:$2 sm:$0xff] %v1570
        %v1643 = vld.sshfl [vmem:[#allocation1] sm:$0xff pattern:$0x75316420]
        %v1644 = vld.sshfl [vmem:[#allocation1 + $0x10] sm:$0xff pattern:$0x75316420]
        %1647 = vst [vmem:[#allocation1] ss:$2 sm:$0xff] %v1511
        %s1648 = scalar_lea.vmem [#allocation1], 1
        %1649 = vst [vmem:[%s1648] ss:$2 sm:$0xff] %v1512
        %s1650 = scalar_lea.vmem [#allocation1], 16
        %1651 = vst [vmem:[%s1650] ss:$2 sm:$0xff] %v1513
        %s1652 = scalar_lea.vmem [#allocation1], 17
        %1653 = vst [vmem:[%s1652] ss:$2 sm:$0xff] %v1514
        %v1654 = vld.sshfl [vmem:[#allocation1] sm:$0xff pattern:$0x75316420]
        %v1655 = vld.sshfl [vmem:[#allocation1 + $0x10] sm:$0xff pattern:$0x75316420]
        %1658 = vst [vmem:[#allocation1] ss:$2 sm:$0xff] %v1537
        %s1659 = scalar_lea.vmem [#allocation1], 1
        %1660 = vst [vmem:[%s1659] ss:$2 sm:$0xff] %v1541
        %s1661 = scalar_lea.vmem [#allocation1], 16
        %1662 = vst [vmem:[%s1661] ss:$2 sm:$0xff] %v1566
        %s1663 = scalar_lea.vmem [#allocation1], 17
        %1664 = vst [vmem:[%s1663] ss:$2 sm:$0xff] %v1576
        %v1665 = vld.sshfl [vmem:[#allocation1] sm:$0xff pattern:$0x75316420]
        %v1666 = vld.sshfl [vmem:[#allocation1 + $0x10] sm:$0xff pattern:$0x75316420]
        %1669 = vst [vmem:[#allocation1] ss:$2 sm:$0xff] %v1556
        %s1670 = scalar_lea.vmem [#allocation1], 1
        %1671 = vst [vmem:[%s1670] ss:$2 sm:$0xff] %v1560
        %s1672 = scalar_lea.vmem [#allocation1], 16
        %1673 = vst [vmem:[%s1672] ss:$2 sm:$0xff] %v1570
        %s1674 = scalar_lea.vmem [#allocation1], 17
        %1675 = vst [vmem:[%s1674] ss:$2 sm:$0xff] %v1580
        %v1676 = vld.sshfl [vmem:[#allocation1] sm:$0xff pattern:$0x75316420]
        %v1677 = vld.sshfl [vmem:[#allocation1 + $0x10] sm:$0xff pattern:$0x75316420]
        %v1680 = vpack.c.bf16 %v1589, %v1588
        %v1681 = vpack.c.bf16 %v1600, %v1599
        %v1682 = vpack.c.bf16 %v1611, %v1610
        %v1683 = vpack.c.bf16 %v1622, %v1621
        %v1684 = vpack.c.bf16 %v1633, %v1632
        %v1685 = vpack.c.bf16 %v1644, %v1643
        %v1686 = vpack.c.bf16 %v1655, %v1654
        %v1687 = vpack.c.bf16 %v1666, %v1665
        %v1688 = vpack.c.bf16 %v1677, %v1676
        %v1689 = vld [vmem:[%s471] sm:$0xff]
        %v1690 = vld [vmem:[%s471 + $0x8] sm:$0xff]
        %s1691 = scalar_lea.vmem %s5, 576
        %v1692 = vld [vmem:[%s1691] sm:$0xf]
        %v1693 = vld [vmem:[%s1691 + $0x4] sm:$0xf]
        %v1694 = vld [vmem:[%s1691 + $0x8] sm:$0xf]
        %v1695 = vld [vmem:[%s1691 + $0xc] sm:$0xf]
        %v1696 = vld [vmem:[%s1691 + $0x10] sm:$0xf]
        %v1697 = vld [vmem:[%s1691 + $0x14] sm:$0xf]
        %v1698 = vld [vmem:[%s1691 + $0x18] sm:$0xf]
        %v1699 = vld [vmem:[%s1691 + $0x1c] sm:$0xf]
        %v1700 = vld [vmem:[%s1691 + $0x20] sm:$0xf]
        %v1701 = vld [vmem:[%s1691 + $0x24] sm:$0xf]
        %v1702 = vld [vmem:[%s1691 + $0x28] sm:$0xf]
        %v1703 = vld [vmem:[%s1691 + $0x2c] sm:$0xf]
        %v1704 = vld [vmem:[%s1691 + $0x30] sm:$0xf]
        %v1705 = vld [vmem:[%s1691 + $0x34] sm:$0xf]
        %v1706 = vld [vmem:[%s1691 + $0x38] sm:$0xf]
        %v1707 = vld [vmem:[%s1691 + $0x3c] sm:$0xf]
        %v1708 = vld [vmem:[%s1691 + $0x40] sm:$0xf]
        %v1709 = vld [vmem:[%s1691 + $0x44] sm:$0xf]
        %v1710 = vld [vmem:[%s1691 + $0x48] sm:$0xf]
        %v1711 = vld [vmem:[%s1691 + $0x4c] sm:$0xf]
        %v1712 = vld [vmem:[%s1691 + $0x50] sm:$0xf]
        %v1713 = vld [vmem:[%s1691 + $0x54] sm:$0xf]
        %v1714 = vld [vmem:[%s1691 + $0x58] sm:$0xf]
        %v1715 = vld [vmem:[%s1691 + $0x5c] sm:$0xf]
        %v1716 = vld [vmem:[%s1691 + $0x60] sm:$0xf]
        %v1717 = vld [vmem:[%s1691 + $0x64] sm:$0xf]
        %v1718 = vld [vmem:[%s1691 + $0x68] sm:$0xf]
        %v1719 = vld [vmem:[%s1691 + $0x6c] sm:$0xf]
        %v1720 = vld [vmem:[%s1691 + $0x70] sm:$0xf]
        %v1721 = vld [vmem:[%s1691 + $0x74] sm:$0xf]
        %v1722 = vld [vmem:[%s1691 + $0x78] sm:$0xf]
        %v1723 = vld [vmem:[%s1691 + $0x7c] sm:$0xf]
        %v1724 = vld [vmem:[%s1691 + $0x80] sm:$0xf]
        %v1725 = vld [vmem:[%s1691 + $0x84] sm:$0xf]
        %v1726 = vld [vmem:[%s1691 + $0x88] sm:$0xf]
        %v1727 = vld [vmem:[%s1691 + $0x8c] sm:$0xf]
        %v1728 = vld [vmem:[%s1691 + $0x90] sm:$0xf]
        %v1729 = vld [vmem:[%s1691 + $0x94] sm:$0xf]
        %v1730 = vld [vmem:[%s1691 + $0x98] sm:$0xf]
        %v1731 = vld [vmem:[%s1691 + $0x9c] sm:$0xf]
        %v1732 = vld [vmem:[%s1691 + $0xa0] sm:$0xf]
        %v1733 = vld [vmem:[%s1691 + $0xa4] sm:$0xf]
        %v1734 = vld [vmem:[%s1691 + $0xa8] sm:$0xf]
        %v1735 = vld [vmem:[%s1691 + $0xac] sm:$0xf]
        %v1736 = vld [vmem:[%s1691 + $0xb0] sm:$0xf]
        %v1737 = vld [vmem:[%s1691 + $0xb4] sm:$0xf]
        %v1738 = vld [vmem:[%s1691 + $0xb8] sm:$0xf]
        %v1739 = vld [vmem:[%s1691 + $0xbc] sm:$0xf]
        %v1740 = vld [vmem:[%s1691 + $0xc0] sm:$0xf]
        %v1741 = vld [vmem:[%s1691 + $0xc4] sm:$0xf]
        %v1742 = vld [vmem:[%s1691 + $0xc8] sm:$0xf]
        %v1743 = vld [vmem:[%s1691 + $0xcc] sm:$0xf]
        %v1744 = vld [vmem:[%s1691 + $0xd0] sm:$0xf]
        %v1745 = vld [vmem:[%s1691 + $0xd4] sm:$0xf]
        %v1746 = vld [vmem:[%s1691 + $0xd8] sm:$0xf]
        %v1747 = vld [vmem:[%s1691 + $0xdc] sm:$0xf]
        %v1748 = vld [vmem:[%s1691 + $0xe0] sm:$0xf]
        %v1749 = vld [vmem:[%s1691 + $0xe4] sm:$0xf]
        %v1750 = vld [vmem:[%s1691 + $0xe8] sm:$0xf]
        %v1751 = vld [vmem:[%s1691 + $0xec] sm:$0xf]
        %v1752 = vld [vmem:[%s1691 + $0xf0] sm:$0xf]
        %v1753 = vld [vmem:[%s1691 + $0xf4] sm:$0xf]
        %v1754 = vld [vmem:[%s1691 + $0xf8] sm:$0xf]
        %v1755 = vld [vmem:[%s1691 + $0xfc] sm:$0xf]
        %v1756 = vld [vmem:[%s1691 + $0x100] sm:$0xf]
        %v1757 = vld [vmem:[%s1691 + $0x104] sm:$0xf]
        %v1758 = vld [vmem:[%s1691 + $0x108] sm:$0xf]
        %v1759 = vld [vmem:[%s1691 + $0x10c] sm:$0xf]
        %v1760 = vld [vmem:[%s1691 + $0x110] sm:$0xf]
        %v1761 = vld [vmem:[%s1691 + $0x114] sm:$0xf]
        %v1762 = vld [vmem:[%s1691 + $0x118] sm:$0xf]
        %v1763 = vld [vmem:[%s1691 + $0x11c] sm:$0xf]
        %v1764 = vld [vmem:[%s1691 + $0x120] sm:$0xf]
        %v1765 = vld [vmem:[%s1691 + $0x124] sm:$0xf]
        %v1766 = vld [vmem:[%s1691 + $0x128] sm:$0xf]
        %v1767 = vld [vmem:[%s1691 + $0x12c] sm:$0xf]
        %v1768 = vld [vmem:[%s1691 + $0x130] sm:$0xf]
        %v1769 = vld [vmem:[%s1691 + $0x134] sm:$0xf]
        %v1770 = vld [vmem:[%s1691 + $0x138] sm:$0xf]
        %v1771 = vld [vmem:[%s1691 + $0x13c] sm:$0xf]
        %v1772 = vld [vmem:[%s1691 + $0x140] sm:$0xf]
        %v1773 = vld [vmem:[%s1691 + $0x144] sm:$0xf]
        %v1774 = vld [vmem:[%s1691 + $0x148] sm:$0xf]
        %v1775 = vld [vmem:[%s1691 + $0x14c] sm:$0xf]
        %v1776 = vld [vmem:[%s1691 + $0x150] sm:$0xf]
        %v1777 = vld [vmem:[%s1691 + $0x154] sm:$0xf]
        %v1778 = vld [vmem:[%s1691 + $0x158] sm:$0xf]
        %v1779 = vld [vmem:[%s1691 + $0x15c] sm:$0xf]
        %v1780 = vld [vmem:[%s1691 + $0x160] sm:$0xf]
        %v1781 = vld [vmem:[%s1691 + $0x164] sm:$0xf]
        %v1782 = vld [vmem:[%s1691 + $0x168] sm:$0xf]
        %v1783 = vld [vmem:[%s1691 + $0x16c] sm:$0xf]
        %v1784 = vld [vmem:[%s1691 + $0x170] sm:$0xf]
        %v1785 = vld [vmem:[%s1691 + $0x174] sm:$0xf]
        %v1786 = vld [vmem:[%s1691 + $0x178] sm:$0xf]
        %v1787 = vld [vmem:[%s1691 + $0x17c] sm:$0xf]
        %v1788 = vld [vmem:[%s1691 + $0x180] sm:$0xf]
        %v1789 = vld [vmem:[%s1691 + $0x184] sm:$0xf]
        %v1790 = vld [vmem:[%s1691 + $0x188] sm:$0xf]
        %v1791 = vld [vmem:[%s1691 + $0x18c] sm:$0xf]
        %v1792 = vld [vmem:[%s1691 + $0x190] sm:$0xf]
        %v1793 = vld [vmem:[%s1691 + $0x194] sm:$0xf]
        %v1794 = vld [vmem:[%s1691 + $0x198] sm:$0xf]
        %v1795 = vld [vmem:[%s1691 + $0x19c] sm:$0xf]
        %v1796 = vld [vmem:[%s1691 + $0x1a0] sm:$0xf]
        %v1797 = vld [vmem:[%s1691 + $0x1a4] sm:$0xf]
        %v1798 = vld [vmem:[%s1691 + $0x1a8] sm:$0xf]
        %v1799 = vld [vmem:[%s1691 + $0x1ac] sm:$0xf]
        %v1800 = vld [vmem:[%s1691 + $0x1b0] sm:$0xf]
        %v1801 = vld [vmem:[%s1691 + $0x1b4] sm:$0xf]
        %v1802 = vld [vmem:[%s1691 + $0x1b8] sm:$0xf]
        %v1803 = vld [vmem:[%s1691 + $0x1bc] sm:$0xf]
        %v1804 = vld [vmem:[%s1691 + $0x1c0] sm:$0xf]
        %v1805 = vld [vmem:[%s1691 + $0x1c4] sm:$0xf]
        %v1806 = vld [vmem:[%s1691 + $0x1c8] sm:$0xf]
        %v1807 = vld [vmem:[%s1691 + $0x1cc] sm:$0xf]
        %v1808 = vld [vmem:[%s1691 + $0x1d0] sm:$0xf]
        %v1809 = vld [vmem:[%s1691 + $0x1d4] sm:$0xf]
        %v1810 = vld [vmem:[%s1691 + $0x1d8] sm:$0xf]
        %v1811 = vld [vmem:[%s1691 + $0x1dc] sm:$0xf]
        %v1812 = vld [vmem:[%s1691 + $0x1e0] sm:$0xf]
        %v1813 = vld [vmem:[%s1691 + $0x1e4] sm:$0xf]
        %v1814 = vld [vmem:[%s1691 + $0x1e8] sm:$0xf]
        %v1815 = vld [vmem:[%s1691 + $0x1ec] sm:$0xf]
        %v1816 = vld [vmem:[%s1691 + $0x1f0] sm:$0xf]
        %v1817 = vld [vmem:[%s1691 + $0x1f4] sm:$0xf]
        %v1818 = vld [vmem:[%s1691 + $0x1f8] sm:$0xf]
        %v1819 = vld [vmem:[%s1691 + $0x1fc] sm:$0xf]
        %v1820 = vld [vmem:[%s1691 + $0x200] sm:$0xf]
        %v1821 = vld [vmem:[%s1691 + $0x204] sm:$0xf]
        %v1822 = vld [vmem:[%s1691 + $0x208] sm:$0xf]
        %v1823 = vld [vmem:[%s1691 + $0x20c] sm:$0xf]
        %v1824 = vld [vmem:[%s1691 + $0x210] sm:$0xf]
        %v1825 = vld [vmem:[%s1691 + $0x214] sm:$0xf]
        %v1826 = vld [vmem:[%s1691 + $0x218] sm:$0xf]
        %v1827 = vld [vmem:[%s1691 + $0x21c] sm:$0xf]
        %v1828 = vld [vmem:[%s1691 + $0x220] sm:$0xf]
        %v1829 = vld [vmem:[%s1691 + $0x224] sm:$0xf]
        %v1830 = vld [vmem:[%s1691 + $0x228] sm:$0xf]
        %v1831 = vld [vmem:[%s1691 + $0x22c] sm:$0xf]
        %v1832 = vld [vmem:[%s1691 + $0x230] sm:$0xf]
        %v1833 = vld [vmem:[%s1691 + $0x234] sm:$0xf]
        %v1834 = vld [vmem:[%s1691 + $0x238] sm:$0xf]
        %v1835 = vld [vmem:[%s1691 + $0x23c] sm:$0xf]
        %v1980 = vunpack.c.l.b16 %v1692
        %v1981 = vunpack.c.l.b16 %v1693
        %v1982 = vunpack.c.l.b16 %v1694
        %v1983 = vunpack.c.l.b16 %v1695
        %v1984 = vunpack.c.l.b16 %v1696
        %v1985 = vunpack.c.l.b16 %v1697
        %v1986 = vunpack.c.l.b16 %v1698
        %v1987 = vunpack.c.l.b16 %v1699
        %v1988 = vunpack.c.l.b16 %v1700
        %v1989 = vunpack.c.l.b16 %v1701
        %v1990 = vunpack.c.l.b16 %v1702
        %v1991 = vunpack.c.l.b16 %v1703
        %v1992 = vunpack.c.l.b16 %v1704
        %v1993 = vunpack.c.l.b16 %v1705
        %v1994 = vunpack.c.l.b16 %v1706
        %v1995 = vunpack.c.l.b16 %v1707
        %v1996 = vunpack.c.l.b16 %v1708
        %v1997 = vunpack.c.l.b16 %v1709
        %v1998 = vunpack.c.l.b16 %v1710
        %v1999 = vunpack.c.l.b16 %v1711
        %v2000 = vunpack.c.l.b16 %v1712
        %v2001 = vunpack.c.l.b16 %v1713
        %v2002 = vunpack.c.l.b16 %v1714
        %v2003 = vunpack.c.l.b16 %v1715
        %v2004 = vunpack.c.l.b16 %v1716
        %v2005 = vunpack.c.l.b16 %v1717
        %v2006 = vunpack.c.l.b16 %v1718
        %v2007 = vunpack.c.l.b16 %v1719
        %v2008 = vunpack.c.l.b16 %v1720
        %v2009 = vunpack.c.l.b16 %v1721
        %v2010 = vunpack.c.l.b16 %v1722
        %v2011 = vunpack.c.l.b16 %v1723
        %v2012 = vunpack.c.l.b16 %v1724
        %v2013 = vunpack.c.l.b16 %v1725
        %v2014 = vunpack.c.l.b16 %v1726
        %v2015 = vunpack.c.l.b16 %v1727
        %v2016 = vunpack.c.l.b16 %v1728
        %v2017 = vunpack.c.l.b16 %v1729
        %v2018 = vunpack.c.l.b16 %v1730
        %v2019 = vunpack.c.l.b16 %v1731
        %v2020 = vunpack.c.l.b16 %v1732
        %v2021 = vunpack.c.l.b16 %v1733
        %v2022 = vunpack.c.l.b16 %v1734
        %v2023 = vunpack.c.l.b16 %v1735
        %v2024 = vunpack.c.l.b16 %v1736
        %v2025 = vunpack.c.l.b16 %v1737
        %v2026 = vunpack.c.l.b16 %v1738
        %v2027 = vunpack.c.l.b16 %v1739
        %v2028 = vunpack.c.l.b16 %v1740
        %v2029 = vunpack.c.l.b16 %v1741
        %v2030 = vunpack.c.l.b16 %v1742
        %v2031 = vunpack.c.l.b16 %v1743
        %v2032 = vunpack.c.l.b16 %v1744
        %v2033 = vunpack.c.l.b16 %v1745
        %v2034 = vunpack.c.l.b16 %v1746
        %v2035 = vunpack.c.l.b16 %v1747
        %v2036 = vunpack.c.l.b16 %v1748
        %v2037 = vunpack.c.l.b16 %v1749
        %v2038 = vunpack.c.l.b16 %v1750
        %v2039 = vunpack.c.l.b16 %v1751
        %v2040 = vunpack.c.l.b16 %v1752
        %v2041 = vunpack.c.l.b16 %v1753
        %v2042 = vunpack.c.l.b16 %v1754
        %v2043 = vunpack.c.l.b16 %v1755
        %v2044 = vunpack.c.l.b16 %v1756
        %v2045 = vunpack.c.l.b16 %v1757
        %v2046 = vunpack.c.l.b16 %v1758
        %v2047 = vunpack.c.l.b16 %v1759
        %v2048 = vunpack.c.l.b16 %v1760
        %v2049 = vunpack.c.l.b16 %v1761
        %v2050 = vunpack.c.l.b16 %v1762
        %v2051 = vunpack.c.l.b16 %v1763
        %v2052 = vunpack.c.l.b16 %v1764
        %v2053 = vunpack.c.l.b16 %v1765
        %v2054 = vunpack.c.l.b16 %v1766
        %v2055 = vunpack.c.l.b16 %v1767
        %v2056 = vunpack.c.l.b16 %v1768
        %v2057 = vunpack.c.l.b16 %v1769
        %v2058 = vunpack.c.l.b16 %v1770
        %v2059 = vunpack.c.l.b16 %v1771
        %v2060 = vunpack.c.l.b16 %v1772
        %v2061 = vunpack.c.l.b16 %v1773
        %v2062 = vunpack.c.l.b16 %v1774
        %v2063 = vunpack.c.l.b16 %v1775
        %v2064 = vunpack.c.l.b16 %v1776
        %v2065 = vunpack.c.l.b16 %v1777
        %v2066 = vunpack.c.l.b16 %v1778
        %v2067 = vunpack.c.l.b16 %v1779
        %v2068 = vunpack.c.l.b16 %v1780
        %v2069 = vunpack.c.l.b16 %v1781
        %v2070 = vunpack.c.l.b16 %v1782
        %v2071 = vunpack.c.l.b16 %v1783
        %v2072 = vunpack.c.l.b16 %v1784
        %v2073 = vunpack.c.l.b16 %v1785
        %v2074 = vunpack.c.l.b16 %v1786
        %v2075 = vunpack.c.l.b16 %v1787
        %v2076 = vunpack.c.l.b16 %v1788
        %v2077 = vunpack.c.l.b16 %v1789
        %v2078 = vunpack.c.l.b16 %v1790
        %v2079 = vunpack.c.l.b16 %v1791
        %v2080 = vunpack.c.l.b16 %v1792
        %v2081 = vunpack.c.l.b16 %v1793
        %v2082 = vunpack.c.l.b16 %v1794
        %v2083 = vunpack.c.l.b16 %v1795
        %v2084 = vunpack.c.l.b16 %v1796
        %v2085 = vunpack.c.l.b16 %v1797
        %v2086 = vunpack.c.l.b16 %v1798
        %v2087 = vunpack.c.l.b16 %v1799
        %v2088 = vunpack.c.l.b16 %v1800
        %v2089 = vunpack.c.l.b16 %v1801
        %v2090 = vunpack.c.l.b16 %v1802
        %v2091 = vunpack.c.l.b16 %v1803
        %v2092 = vunpack.c.l.b16 %v1804
        %v2093 = vunpack.c.l.b16 %v1805
        %v2094 = vunpack.c.l.b16 %v1806
        %v2095 = vunpack.c.l.b16 %v1807
        %v2096 = vunpack.c.l.b16 %v1808
        %v2097 = vunpack.c.l.b16 %v1809
        %v2098 = vunpack.c.l.b16 %v1810
        %v2099 = vunpack.c.l.b16 %v1811
        %v2100 = vunpack.c.l.b16 %v1812
        %v2101 = vunpack.c.l.b16 %v1813
        %v2102 = vunpack.c.l.b16 %v1814
        %v2103 = vunpack.c.l.b16 %v1815
        %v2104 = vunpack.c.l.b16 %v1816
        %v2105 = vunpack.c.l.b16 %v1817
        %v2106 = vunpack.c.l.b16 %v1818
        %v2107 = vunpack.c.l.b16 %v1819
        %v2108 = vunpack.c.l.b16 %v1820
        %v2109 = vunpack.c.l.b16 %v1821
        %v2110 = vunpack.c.l.b16 %v1822
        %v2111 = vunpack.c.l.b16 %v1823
        %v2112 = vunpack.c.l.b16 %v1824
        %v2113 = vunpack.c.l.b16 %v1825
        %v2114 = vunpack.c.l.b16 %v1826
        %v2115 = vunpack.c.l.b16 %v1827
        %v2116 = vunpack.c.l.b16 %v1828
        %v2117 = vunpack.c.l.b16 %v1829
        %v2118 = vunpack.c.l.b16 %v1830
        %v2119 = vunpack.c.l.b16 %v1831
        %v2120 = vunpack.c.l.b16 %v1832
        %v2121 = vunpack.c.l.b16 %v1833
        %v2122 = vunpack.c.l.b16 %v1834
        %v2123 = vunpack.c.l.b16 %v1835
        %v2124 = vpack.c.b16 %v1981, %v1980
        %v2125 = vpack.c.b16 %v1983, %v1982
        %v2126 = vpack.c.b16 %v1985, %v1984
        %v2127 = vpack.c.b16 %v1987, %v1986
        %v2128 = vpack.c.b16 %v1989, %v1988
        %v2129 = vpack.c.b16 %v1991, %v1990
        %v2130 = vpack.c.b16 %v1993, %v1992
        %v2131 = vpack.c.b16 %v1995, %v1994
        %v2132 = vpack.c.b16 %v1997, %v1996
        %v2133 = vpack.c.b16 %v1999, %v1998
        %v2134 = vpack.c.b16 %v2001, %v2000
        %v2135 = vpack.c.b16 %v2003, %v2002
        %v2136 = vpack.c.b16 %v2005, %v2004
        %v2137 = vpack.c.b16 %v2007, %v2006
        %v2138 = vpack.c.b16 %v2009, %v2008
        %v2139 = vpack.c.b16 %v2011, %v2010
        %v2140 = vpack.c.b16 %v2013, %v2012
        %v2141 = vpack.c.b16 %v2015, %v2014
        %v2142 = vpack.c.b16 %v2017, %v2016
        %v2143 = vpack.c.b16 %v2019, %v2018
        %v2144 = vpack.c.b16 %v2021, %v2020
        %v2145 = vpack.c.b16 %v2023, %v2022
        %v2146 = vpack.c.b16 %v2025, %v2024
        %v2147 = vpack.c.b16 %v2027, %v2026
        %v2148 = vpack.c.b16 %v2029, %v2028
        %v2149 = vpack.c.b16 %v2031, %v2030
        %v2150 = vpack.c.b16 %v2033, %v2032
        %v2151 = vpack.c.b16 %v2035, %v2034
        %v2152 = vpack.c.b16 %v2037, %v2036
        %v2153 = vpack.c.b16 %v2039, %v2038
        %v2154 = vpack.c.b16 %v2041, %v2040
        %v2155 = vpack.c.b16 %v2043, %v2042
        %v2156 = vpack.c.b16 %v2045, %v2044
        %v2157 = vpack.c.b16 %v2047, %v2046
        %v2158 = vpack.c.b16 %v2049, %v2048
        %v2159 = vpack.c.b16 %v2051, %v2050
        %v2160 = vpack.c.b16 %v2053, %v2052
        %v2161 = vpack.c.b16 %v2055, %v2054
        %v2162 = vpack.c.b16 %v2057, %v2056
        %v2163 = vpack.c.b16 %v2059, %v2058
        %v2164 = vpack.c.b16 %v2061, %v2060
        %v2165 = vpack.c.b16 %v2063, %v2062
        %v2166 = vpack.c.b16 %v2065, %v2064
        %v2167 = vpack.c.b16 %v2067, %v2066
        %v2168 = vpack.c.b16 %v2069, %v2068
        %v2169 = vpack.c.b16 %v2071, %v2070
        %v2170 = vpack.c.b16 %v2073, %v2072
        %v2171 = vpack.c.b16 %v2075, %v2074
        %v2172 = vpack.c.b16 %v2077, %v2076
        %v2173 = vpack.c.b16 %v2079, %v2078
        %v2174 = vpack.c.b16 %v2081, %v2080
        %v2175 = vpack.c.b16 %v2083, %v2082
        %v2176 = vpack.c.b16 %v2085, %v2084
        %v2177 = vpack.c.b16 %v2087, %v2086
        %v2178 = vpack.c.b16 %v2089, %v2088
        %v2179 = vpack.c.b16 %v2091, %v2090
        %v2180 = vpack.c.b16 %v2093, %v2092
        %v2181 = vpack.c.b16 %v2095, %v2094
        %v2182 = vpack.c.b16 %v2097, %v2096
        %v2183 = vpack.c.b16 %v2099, %v2098
        %v2184 = vpack.c.b16 %v2101, %v2100
        %v2185 = vpack.c.b16 %v2103, %v2102
        %v2186 = vpack.c.b16 %v2105, %v2104
        %v2187 = vpack.c.b16 %v2107, %v2106
        %v2188 = vpack.c.b16 %v2109, %v2108
        %v2189 = vpack.c.b16 %v2111, %v2110
        %v2190 = vpack.c.b16 %v2113, %v2112
        %v2191 = vpack.c.b16 %v2115, %v2114
        %v2192 = vpack.c.b16 %v2117, %v2116
        %v2193 = vpack.c.b16 %v2119, %v2118
        %v2194 = vpack.c.b16 %v2121, %v2120
        %v2195 = vpack.c.b16 %v2123, %v2122
        %2268 = vmatpush.bf16.msra.mxu0 %v2131
        %2269 = vmatpush.bf16.msra.mxu0 %v2130
        %2270 = vmatpush.bf16.msra.mxu0 %v2129
        %2271 = vmatpush.bf16.msra.mxu0 %v2128
        %2272 = vmatpush.bf16.msra.mxu0 %v2127
        %2273 = vmatpush.bf16.msra.mxu0 %v2126
        %2274 = vmatpush.bf16.msra.mxu0 %v2125
        %2275 = vmatpush.bf16.msra.mxu0 %v2124
        %2276 = vmatmul.bf16.gmra.mxu0 %v1680
        %v2277 = vpop.f32.mrf.mxu0
        %v2278 = vadd.f32 0.0, %v2277
        %v2279 = vpop.f32.mrf.mxu0
        %v2280 = vadd.f32 0.0, %v2279
        %2281 = vdwg.mxu0
        %2282 = vmatpush.bf16.msra.mxu0 %v2139
        %2283 = vmatpush.bf16.msra.mxu0 %v2138
        %2284 = vmatpush.bf16.msra.mxu0 %v2137
        %2285 = vmatpush.bf16.msra.mxu0 %v2136
        %2286 = vmatpush.bf16.msra.mxu0 %v2135
        %2287 = vmatpush.bf16.msra.mxu0 %v2134
        %2288 = vmatpush.bf16.msra.mxu0 %v2133
        %2289 = vmatpush.bf16.msra.mxu0 %v2132
        %2290 = vmatmul.bf16.gmra.mxu0 %v1681
        %v2291 = vpop.f32.mrf.mxu0
        %v2292 = vadd.f32 %v2278, %v2291
        %v2293 = vpop.f32.mrf.mxu0
        %v2294 = vadd.f32 %v2280, %v2293
        %2295 = vdwg.mxu0
        %2296 = vmatpush.bf16.msra.mxu0 %v2147
        %2297 = vmatpush.bf16.msra.mxu0 %v2146
        %2298 = vmatpush.bf16.msra.mxu0 %v2145
        %2299 = vmatpush.bf16.msra.mxu0 %v2144
        %2300 = vmatpush.bf16.msra.mxu0 %v2143
        %2301 = vmatpush.bf16.msra.mxu0 %v2142
        %2302 = vmatpush.bf16.msra.mxu0 %v2141
        %2303 = vmatpush.bf16.msra.mxu0 %v2140
        %2304 = vmatmul.bf16.gmra.mxu0 %v1682
        %v2305 = vpop.f32.mrf.mxu0
        %v2306 = vadd.f32 %v2292, %v2305
        %v2307 = vpop.f32.mrf.mxu0
        %v2308 = vadd.f32 %v2294, %v2307
        %2309 = vdwg.mxu0
        %2310 = vmatpush.bf16.msra.mxu0 %v2155
        %2311 = vmatpush.bf16.msra.mxu0 %v2154
        %2312 = vmatpush.bf16.msra.mxu0 %v2153
        %2313 = vmatpush.bf16.msra.mxu0 %v2152
        %2314 = vmatpush.bf16.msra.mxu0 %v2151
        %2315 = vmatpush.bf16.msra.mxu0 %v2150
        %2316 = vmatpush.bf16.msra.mxu0 %v2149
        %2317 = vmatpush.bf16.msra.mxu0 %v2148
        %2318 = vmatmul.bf16.gmra.mxu0 %v1683
        %v2319 = vpop.f32.mrf.mxu0
        %v2320 = vadd.f32 %v2306, %v2319
        %v2321 = vpop.f32.mrf.mxu0
        %v2322 = vadd.f32 %v2308, %v2321
        %2323 = vdwg.mxu0
        %2324 = vmatpush.bf16.msra.mxu0 %v2163
        %2325 = vmatpush.bf16.msra.mxu0 %v2162
        %2326 = vmatpush.bf16.msra.mxu0 %v2161
        %2327 = vmatpush.bf16.msra.mxu0 %v2160
        %2328 = vmatpush.bf16.msra.mxu0 %v2159
        %2329 = vmatpush.bf16.msra.mxu0 %v2158
        %2330 = vmatpush.bf16.msra.mxu0 %v2157
        %2331 = vmatpush.bf16.msra.mxu0 %v2156
        %2332 = vmatmul.bf16.gmra.mxu0 %v1684
        %v2333 = vpop.f32.mrf.mxu0
        %v2334 = vadd.f32 %v2320, %v2333
        %v2335 = vpop.f32.mrf.mxu0
        %v2336 = vadd.f32 %v2322, %v2335
        %2337 = vdwg.mxu0
        %2338 = vmatpush.bf16.msra.mxu0 %v2171
        %2339 = vmatpush.bf16.msra.mxu0 %v2170
        %2340 = vmatpush.bf16.msra.mxu0 %v2169
        %2341 = vmatpush.bf16.msra.mxu0 %v2168
        %2342 = vmatpush.bf16.msra.mxu0 %v2167
        %2343 = vmatpush.bf16.msra.mxu0 %v2166
        %2344 = vmatpush.bf16.msra.mxu0 %v2165
        %2345 = vmatpush.bf16.msra.mxu0 %v2164
        %2346 = vmatmul.bf16.gmra.mxu0 %v1685
        %v2347 = vpop.f32.mrf.mxu0
        %v2348 = vadd.f32 %v2334, %v2347
        %v2349 = vpop.f32.mrf.mxu0
        %v2350 = vadd.f32 %v2336, %v2349
        %2351 = vdwg.mxu0
        %2352 = vmatpush.bf16.msra.mxu0 %v2179
        %2353 = vmatpush.bf16.msra.mxu0 %v2178
        %2354 = vmatpush.bf16.msra.mxu0 %v2177
        %2355 = vmatpush.bf16.msra.mxu0 %v2176
        %2356 = vmatpush.bf16.msra.mxu0 %v2175
        %2357 = vmatpush.bf16.msra.mxu0 %v2174
        %2358 = vmatpush.bf16.msra.mxu0 %v2173
        %2359 = vmatpush.bf16.msra.mxu0 %v2172
        %2360 = vmatmul.bf16.gmra.mxu0 %v1686
        %v2361 = vpop.f32.mrf.mxu0
        %v2362 = vadd.f32 %v2348, %v2361
        %v2363 = vpop.f32.mrf.mxu0
        %v2364 = vadd.f32 %v2350, %v2363
        %2365 = vdwg.mxu0
        %2366 = vmatpush.bf16.msra.mxu0 %v2187
        %2367 = vmatpush.bf16.msra.mxu0 %v2186
        %2368 = vmatpush.bf16.msra.mxu0 %v2185
        %2369 = vmatpush.bf16.msra.mxu0 %v2184
        %2370 = vmatpush.bf16.msra.mxu0 %v2183
        %2371 = vmatpush.bf16.msra.mxu0 %v2182
        %2372 = vmatpush.bf16.msra.mxu0 %v2181
        %2373 = vmatpush.bf16.msra.mxu0 %v2180
        %2374 = vmatmul.bf16.gmra.mxu0 %v1687
        %v2375 = vpop.f32.mrf.mxu0
        %v2376 = vadd.f32 %v2362, %v2375
        %v2377 = vpop.f32.mrf.mxu0
        %v2378 = vadd.f32 %v2364, %v2377
        %2379 = vdwg.mxu0
        %2380 = vmatpush.bf16.msra.mxu0 %v2195
        %2381 = vmatpush.bf16.msra.mxu0 %v2194
        %2382 = vmatpush.bf16.msra.mxu0 %v2193
        %2383 = vmatpush.bf16.msra.mxu0 %v2192
        %2384 = vmatpush.bf16.msra.mxu0 %v2191
        %2385 = vmatpush.bf16.msra.mxu0 %v2190
        %2386 = vmatpush.bf16.msra.mxu0 %v2189
        %2387 = vmatpush.bf16.msra.mxu0 %v2188
        %2388 = vmatmul.bf16.gmra.mxu0 %v1688
        %v2389 = vpop.f32.mrf.mxu0
        %v2390 = vadd.f32 %v2376, %v2389
        %v2391 = vpop.f32.mrf.mxu0
        %v2392 = vadd.f32 %v2378, %v2391
        %2393 = vdwg.mxu0
        %v2394 = vadd.f32 %v1689, %v2390
        %v2395 = vadd.f32 %v1690, %v2392
        %2396 = vst [vmem:[%s471] sm:$0xff] %v2394
        %2397 = vst [vmem:[%s471 + $0x8] sm:$0xff] %v2395
      $region56: #{preact_bottleneck.6} parent=47 // pred_fallthru
        _
      %s2398 = sadd.s32 %s26, 2
      %p2399 = scmp.ge.s32.totalorder %s2398, 1
      %p2400 = scmp.le.s32.totalorder %s2398, 4
      %p2401 = pnand %p2399, %p2400
      %p2402 = pneg %p2401
      // Predicated region
      $region57: #{preact_bottleneck.6} parent=47 // pred_check
        _
      $region58: #{preact_bottleneck.6} parent=47 // pred_check_branch
        %2404 = sbr.rel (%p2401) target = $region60
      $region59: #{preact_bottleneck.6} parent=47 // pred_region
        %v2405 = vld [vmem:[%s461] sm:$0x3f]
        %v2406 = vld [vmem:[%s461 + $0x8] sm:$0x3f]
        %v2407 = vld [vmem:[%s461 + $0x10] sm:$0x3f]
        %v2408 = vld [vmem:[%s461 + $0x18] sm:$0x3f]
        %v2409 = vld [vmem:[%s461 + $0x20] sm:$0x3f]
        %v2410 = vld [vmem:[%s461 + $0x28] sm:$0x3f]
        %v2412 = vperm.slane %v544, 0
        %v2414 = vmul.f32 %v2405, %v2412
        %v2415 = vmul.f32 %v2406, %v2412
        %v2416 = vmul.f32 %v2407, %v2412
        %v2417 = vmul.f32 %v2408, %v2412
        %v2418 = vmul.f32 %v2409, %v2412
        %v2419 = vmul.f32 %v2410, %v2412
        %v2421 = vperm.slane %v545, 0
        %v2423 = vadd.f32 %v2414, %v2421
        %v2424 = vadd.f32 %v2415, %v2421
        %v2425 = vadd.f32 %v2416, %v2421
        %v2426 = vadd.f32 %v2417, %v2421
        %v2427 = vadd.f32 %v2418, %v2421
        %v2428 = vadd.f32 %v2419, %v2421
        %v2429 = vmax.f32 %v2423, 0.0
        %v2430 = vmax.f32 %v2424, 0.0
        %v2431 = vmax.f32 %v2425, 0.0
        %v2432 = vmax.f32 %v2426, 0.0
        %v2433 = vmax.f32 %v2427, 0.0
        %v2434 = vmax.f32 %v2428, 0.0
        %v2435 = vmul.f32 %v2429, %v508
        %v2436 = vmul.f32 %v2430, %v515
        %v2437 = vmul.f32 %v2431, %v522
        %v2438 = vmul.f32 %v2432, %v529
        %v2439 = vmul.f32 %v2433, %v536
        %v2440 = vmul.f32 %v2434, %v543
        %v2445 = vrot.slane %v2435, 4
        %v2446 = vrot.slane %v2436, 4
        %v2447 = vrot.slane %v2437, 4
        %v2448 = vrot.slane %v2438, 4
        %vm2449 = vcmask 1042432
        %vm2450 = vcmask 1046532
        %vm2451 = vmor %vm2449, %vm2450
        %v2452 = vrot.slane %v2435, 5
        %v2453 = vrot.slane %v2452, 4
        %v2454 = vrot.slane %v2445, 5
        %v2455 = vsel %vm2451, %v2453, %v2454
        %v2456 = vrot.slane %v2436, 5
        %v2457 = vrot.slane %v2456, 4
        %v2458 = vrot.slane %v2446, 5
        %v2459 = vsel %vm2451, %v2457, %v2458
        %v2460 = vrot.slane %v2437, 5
        %v2461 = vrot.slane %v2460, 4
        %v2462 = vrot.slane %v2447, 5
        %v2463 = vsel %vm2451, %v2461, %v2462
        %v2464 = vrot.slane %v2438, 5
        %v2465 = vrot.slane %v2464, 4
        %v2466 = vrot.slane %v2448, 5
        %v2467 = vsel %vm2451, %v2465, %v2466
        %vm2468 = vcmask 1041408
        %vm2469 = vcmask 1045508
        %vm2470 = vmor %vm2468, %vm2469
        %v2471 = vrot.slane %v2435, 6
        %v2472 = vrot.slane %v2471, 4
        %v2473 = vrot.slane %v2445, 6
        %v2474 = vsel %vm2470, %v2472, %v2473
        %v2475 = vrot.slane %v2436, 6
        %v2476 = vrot.slane %v2475, 4
        %v2477 = vrot.slane %v2446, 6
        %v2478 = vsel %vm2470, %v2476, %v2477
        %v2479 = vrot.slane %v2437, 6
        %v2480 = vrot.slane %v2479, 4
        %v2481 = vrot.slane %v2447, 6
        %v2482 = vsel %vm2470, %v2480, %v2481
        %v2483 = vrot.slane %v2438, 6
        %v2484 = vrot.slane %v2483, 4
        %v2485 = vrot.slane %v2448, 6
        %v2486 = vsel %vm2470, %v2484, %v2485
        %v2488 = vrot.slane %v2439, 4
        %v2489 = vrot.slane %v2439, 5
        %v2490 = vrot.slane %v2489, 4
        %v2491 = vrot.slane %v2488, 5
        %v2492 = vsel %vm2451, %v2490, %v2491
        %v2493 = vrot.slane %v2439, 6
        %v2494 = vrot.slane %v2493, 4
        %v2495 = vrot.slane %v2488, 6
        %v2496 = vsel %vm2470, %v2494, %v2495
        %v2498 = vrot.slane %v2440, 4
        %v2499 = vrot.slane %v2440, 5
        %v2500 = vrot.slane %v2499, 4
        %v2501 = vrot.slane %v2498, 5
        %v2502 = vsel %vm2451, %v2500, %v2501
        %v2503 = vrot.slane %v2440, 6
        %v2504 = vrot.slane %v2503, 4
        %v2505 = vrot.slane %v2498, 6
        %v2506 = vsel %vm2470, %v2504, %v2505
        %2507 = vst [vmem:[#allocation1] ss:$2 sm:$0xff] %v2435
        %s2508 = scalar_lea.vmem [#allocation1], 1
        %2509 = vst [vmem:[%s2508] ss:$2 sm:$0xff] %v2436
        %s2510 = scalar_lea.vmem [#allocation1], 16
        %2511 = vst [vmem:[%s2510] ss:$2 sm:$0xff] %v2437
        %s2512 = scalar_lea.vmem [#allocation1], 17
        %2513 = vst [vmem:[%s2512] ss:$2 sm:$0xff] %v2438
        %v2514 = vld.sshfl [vmem:[#allocation1] sm:$0xff pattern:$0x75316420]
        %v2515 = vld.sshfl [vmem:[#allocation1 + $0x10] sm:$0xff pattern:$0x75316420]
        %2518 = vst [vmem:[#allocation1] ss:$2 sm:$0xff] %v2455
        %s2519 = scalar_lea.vmem [#allocation1], 1
        %2520 = vst [vmem:[%s2519] ss:$2 sm:$0xff] %v2459
        %s2521 = scalar_lea.vmem [#allocation1], 16
        %2522 = vst [vmem:[%s2521] ss:$2 sm:$0xff] %v2463
        %s2523 = scalar_lea.vmem [#allocation1], 17
        %2524 = vst [vmem:[%s2523] ss:$2 sm:$0xff] %v2467
        %v2525 = vld.sshfl [vmem:[#allocation1] sm:$0xff pattern:$0x75316420]
        %v2526 = vld.sshfl [vmem:[#allocation1 + $0x10] sm:$0xff pattern:$0x75316420]
        %2529 = vst [vmem:[#allocation1] ss:$2 sm:$0xff] %v2474
        %s2530 = scalar_lea.vmem [#allocation1], 1
        %2531 = vst [vmem:[%s2530] ss:$2 sm:$0xff] %v2478
        %s2532 = scalar_lea.vmem [#allocation1], 16
        %2533 = vst [vmem:[%s2532] ss:$2 sm:$0xff] %v2482
        %s2534 = scalar_lea.vmem [#allocation1], 17
        %2535 = vst [vmem:[%s2534] ss:$2 sm:$0xff] %v2486
        %v2536 = vld.sshfl [vmem:[#allocation1] sm:$0xff pattern:$0x75316420]
        %v2537 = vld.sshfl [vmem:[#allocation1 + $0x10] sm:$0xff pattern:$0x75316420]
        %2540 = vst [vmem:[#allocation1] ss:$2 sm:$0xff] %v2436
        %s2541 = scalar_lea.vmem [#allocation1], 1
        %2542 = vst [vmem:[%s2541] ss:$2 sm:$0xff] %v2437
        %s2543 = scalar_lea.vmem [#allocation1], 16
        %2544 = vst [vmem:[%s2543] ss:$2 sm:$0xff] %v2438
        %s2545 = scalar_lea.vmem [#allocation1], 17
        %2546 = vst [vmem:[%s2545] ss:$2 sm:$0xff] %v2439
        %v2547 = vld.sshfl [vmem:[#allocation1] sm:$0xff pattern:$0x75316420]
        %v2548 = vld.sshfl [vmem:[#allocation1 + $0x10] sm:$0xff pattern:$0x75316420]
        %2551 = vst [vmem:[#allocation1] ss:$2 sm:$0xff] %v2459
        %s2552 = scalar_lea.vmem [#allocation1], 1
        %2553 = vst [vmem:[%s2552] ss:$2 sm:$0xff] %v2463
        %s2554 = scalar_lea.vmem [#allocation1], 16
        %2555 = vst [vmem:[%s2554] ss:$2 sm:$0xff] %v2467
        %s2556 = scalar_lea.vmem [#allocation1], 17
        %2557 = vst [vmem:[%s2556] ss:$2 sm:$0xff] %v2492
        %v2558 = vld.sshfl [vmem:[#allocation1] sm:$0xff pattern:$0x75316420]
        %v2559 = vld.sshfl [vmem:[#allocation1 + $0x10] sm:$0xff pattern:$0x75316420]
        %2562 = vst [vmem:[#allocation1] ss:$2 sm:$0xff] %v2478
        %s2563 = scalar_lea.vmem [#allocation1], 1
        %2564 = vst [vmem:[%s2563] ss:$2 sm:$0xff] %v2482
        %s2565 = scalar_lea.vmem [#allocation1], 16
        %2566 = vst [vmem:[%s2565] ss:$2 sm:$0xff] %v2486
        %s2567 = scalar_lea.vmem [#allocation1], 17
        %2568 = vst [vmem:[%s2567] ss:$2 sm:$0xff] %v2496
        %v2569 = vld.sshfl [vmem:[#allocation1] sm:$0xff pattern:$0x75316420]
        %v2570 = vld.sshfl [vmem:[#allocation1 + $0x10] sm:$0xff pattern:$0x75316420]
        %2573 = vst [vmem:[#allocation1] ss:$2 sm:$0xff] %v2437
        %s2574 = scalar_lea.vmem [#allocation1], 1
        %2575 = vst [vmem:[%s2574] ss:$2 sm:$0xff] %v2438
        %s2576 = scalar_lea.vmem [#allocation1], 16
        %2577 = vst [vmem:[%s2576] ss:$2 sm:$0xff] %v2439
        %s2578 = scalar_lea.vmem [#allocation1], 17
        %2579 = vst [vmem:[%s2578] ss:$2 sm:$0xff] %v2440
        %v2580 = vld.sshfl [vmem:[#allocation1] sm:$0xff pattern:$0x75316420]
        %v2581 = vld.sshfl [vmem:[#allocation1 + $0x10] sm:$0xff pattern:$0x75316420]
        %2584 = vst [vmem:[#allocation1] ss:$2 sm:$0xff] %v2463
        %s2585 = scalar_lea.vmem [#allocation1], 1
        %2586 = vst [vmem:[%s2585] ss:$2 sm:$0xff] %v2467
        %s2587 = scalar_lea.vmem [#allocation1], 16
        %2588 = vst [vmem:[%s2587] ss:$2 sm:$0xff] %v2492
        %s2589 = scalar_lea.vmem [#allocation1], 17
        %2590 = vst [vmem:[%s2589] ss:$2 sm:$0xff] %v2502
        %v2591 = vld.sshfl [vmem:[#allocation1] sm:$0xff pattern:$0x75316420]
        %v2592 = vld.sshfl [vmem:[#allocation1 + $0x10] sm:$0xff pattern:$0x75316420]
        %2595 = vst [vmem:[#allocation1] ss:$2 sm:$0xff] %v2482
        %s2596 = scalar_lea.vmem [#allocation1], 1
        %2597 = vst [vmem:[%s2596] ss:$2 sm:$0xff] %v2486
        %s2598 = scalar_lea.vmem [#allocation1], 16
        %2599 = vst [vmem:[%s2598] ss:$2 sm:$0xff] %v2496
        %s2600 = scalar_lea.vmem [#allocation1], 17
        %2601 = vst [vmem:[%s2600] ss:$2 sm:$0xff] %v2506
        %v2602 = vld.sshfl [vmem:[#allocation1] sm:$0xff pattern:$0x75316420]
        %v2603 = vld.sshfl [vmem:[#allocation1 + $0x10] sm:$0xff pattern:$0x75316420]
        %v2606 = vpack.c.bf16 %v2515, %v2514
        %v2607 = vpack.c.bf16 %v2526, %v2525
        %v2608 = vpack.c.bf16 %v2537, %v2536
        %v2609 = vpack.c.bf16 %v2548, %v2547
        %v2610 = vpack.c.bf16 %v2559, %v2558
        %v2611 = vpack.c.bf16 %v2570, %v2569
        %v2612 = vpack.c.bf16 %v2581, %v2580
        %v2613 = vpack.c.bf16 %v2592, %v2591
        %v2614 = vpack.c.bf16 %v2603, %v2602
        %v2615 = vld [vmem:[%s471] sm:$0xff]
        %v2616 = vld [vmem:[%s471 + $0x8] sm:$0xff]
        %s2617 = scalar_lea.vmem %s5, 1152
        %v2618 = vld [vmem:[%s2617] sm:$0xf]
        %v2619 = vld [vmem:[%s2617 + $0x4] sm:$0xf]
        %v2620 = vld [vmem:[%s2617 + $0x8] sm:$0xf]
        %v2621 = vld [vmem:[%s2617 + $0xc] sm:$0xf]
        %v2622 = vld [vmem:[%s2617 + $0x10] sm:$0xf]
        %v2623 = vld [vmem:[%s2617 + $0x14] sm:$0xf]
        %v2624 = vld [vmem:[%s2617 + $0x18] sm:$0xf]
        %v2625 = vld [vmem:[%s2617 + $0x1c] sm:$0xf]
        %v2626 = vld [vmem:[%s2617 + $0x20] sm:$0xf]
        %v2627 = vld [vmem:[%s2617 + $0x24] sm:$0xf]
        %v2628 = vld [vmem:[%s2617 + $0x28] sm:$0xf]
        %v2629 = vld [vmem:[%s2617 + $0x2c] sm:$0xf]
        %v2630 = vld [vmem:[%s2617 + $0x30] sm:$0xf]
        %v2631 = vld [vmem:[%s2617 + $0x34] sm:$0xf]
        %v2632 = vld [vmem:[%s2617 + $0x38] sm:$0xf]
        %v2633 = vld [vmem:[%s2617 + $0x3c] sm:$0xf]
        %v2634 = vld [vmem:[%s2617 + $0x40] sm:$0xf]
        %v2635 = vld [vmem:[%s2617 + $0x44] sm:$0xf]
        %v2636 = vld [vmem:[%s2617 + $0x48] sm:$0xf]
        %v2637 = vld [vmem:[%s2617 + $0x4c] sm:$0xf]
        %v2638 = vld [vmem:[%s2617 + $0x50] sm:$0xf]
        %v2639 = vld [vmem:[%s2617 + $0x54] sm:$0xf]
        %v2640 = vld [vmem:[%s2617 + $0x58] sm:$0xf]
        %v2641 = vld [vmem:[%s2617 + $0x5c] sm:$0xf]
        %v2642 = vld [vmem:[%s2617 + $0x60] sm:$0xf]
        %v2643 = vld [vmem:[%s2617 + $0x64] sm:$0xf]
        %v2644 = vld [vmem:[%s2617 + $0x68] sm:$0xf]
        %v2645 = vld [vmem:[%s2617 + $0x6c] sm:$0xf]
        %v2646 = vld [vmem:[%s2617 + $0x70] sm:$0xf]
        %v2647 = vld [vmem:[%s2617 + $0x74] sm:$0xf]
        %v2648 = vld [vmem:[%s2617 + $0x78] sm:$0xf]
        %v2649 = vld [vmem:[%s2617 + $0x7c] sm:$0xf]
        %v2650 = vld [vmem:[%s2617 + $0x80] sm:$0xf]
        %v2651 = vld [vmem:[%s2617 + $0x84] sm:$0xf]
        %v2652 = vld [vmem:[%s2617 + $0x88] sm:$0xf]
        %v2653 = vld [vmem:[%s2617 + $0x8c] sm:$0xf]
        %v2654 = vld [vmem:[%s2617 + $0x90] sm:$0xf]
        %v2655 = vld [vmem:[%s2617 + $0x94] sm:$0xf]
        %v2656 = vld [vmem:[%s2617 + $0x98] sm:$0xf]
        %v2657 = vld [vmem:[%s2617 + $0x9c] sm:$0xf]
        %v2658 = vld [vmem:[%s2617 + $0xa0] sm:$0xf]
        %v2659 = vld [vmem:[%s2617 + $0xa4] sm:$0xf]
        %v2660 = vld [vmem:[%s2617 + $0xa8] sm:$0xf]
        %v2661 = vld [vmem:[%s2617 + $0xac] sm:$0xf]
        %v2662 = vld [vmem:[%s2617 + $0xb0] sm:$0xf]
        %v2663 = vld [vmem:[%s2617 + $0xb4] sm:$0xf]
        %v2664 = vld [vmem:[%s2617 + $0xb8] sm:$0xf]
        %v2665 = vld [vmem:[%s2617 + $0xbc] sm:$0xf]
        %v2666 = vld [vmem:[%s2617 + $0xc0] sm:$0xf]
        %v2667 = vld [vmem:[%s2617 + $0xc4] sm:$0xf]
        %v2668 = vld [vmem:[%s2617 + $0xc8] sm:$0xf]
        %v2669 = vld [vmem:[%s2617 + $0xcc] sm:$0xf]
        %v2670 = vld [vmem:[%s2617 + $0xd0] sm:$0xf]
        %v2671 = vld [vmem:[%s2617 + $0xd4] sm:$0xf]
        %v2672 = vld [vmem:[%s2617 + $0xd8] sm:$0xf]
        %v2673 = vld [vmem:[%s2617 + $0xdc] sm:$0xf]
        %v2674 = vld [vmem:[%s2617 + $0xe0] sm:$0xf]
        %v2675 = vld [vmem:[%s2617 + $0xe4] sm:$0xf]
        %v2676 = vld [vmem:[%s2617 + $0xe8] sm:$0xf]
        %v2677 = vld [vmem:[%s2617 + $0xec] sm:$0xf]
        %v2678 = vld [vmem:[%s2617 + $0xf0] sm:$0xf]
        %v2679 = vld [vmem:[%s2617 + $0xf4] sm:$0xf]
        %v2680 = vld [vmem:[%s2617 + $0xf8] sm:$0xf]
        %v2681 = vld [vmem:[%s2617 + $0xfc] sm:$0xf]
        %v2682 = vld [vmem:[%s2617 + $0x100] sm:$0xf]
        %v2683 = vld [vmem:[%s2617 + $0x104] sm:$0xf]
        %v2684 = vld [vmem:[%s2617 + $0x108] sm:$0xf]
        %v2685 = vld [vmem:[%s2617 + $0x10c] sm:$0xf]
        %v2686 = vld [vmem:[%s2617 + $0x110] sm:$0xf]
        %v2687 = vld [vmem:[%s2617 + $0x114] sm:$0xf]
        %v2688 = vld [vmem:[%s2617 + $0x118] sm:$0xf]
        %v2689 = vld [vmem:[%s2617 + $0x11c] sm:$0xf]
        %v2690 = vld [vmem:[%s2617 + $0x120] sm:$0xf]
        %v2691 = vld [vmem:[%s2617 + $0x124] sm:$0xf]
        %v2692 = vld [vmem:[%s2617 + $0x128] sm:$0xf]
        %v2693 = vld [vmem:[%s2617 + $0x12c] sm:$0xf]
        %v2694 = vld [vmem:[%s2617 + $0x130] sm:$0xf]
        %v2695 = vld [vmem:[%s2617 + $0x134] sm:$0xf]
        %v2696 = vld [vmem:[%s2617 + $0x138] sm:$0xf]
        %v2697 = vld [vmem:[%s2617 + $0x13c] sm:$0xf]
        %v2698 = vld [vmem:[%s2617 + $0x140] sm:$0xf]
        %v2699 = vld [vmem:[%s2617 + $0x144] sm:$0xf]
        %v2700 = vld [vmem:[%s2617 + $0x148] sm:$0xf]
        %v2701 = vld [vmem:[%s2617 + $0x14c] sm:$0xf]
        %v2702 = vld [vmem:[%s2617 + $0x150] sm:$0xf]
        %v2703 = vld [vmem:[%s2617 + $0x154] sm:$0xf]
        %v2704 = vld [vmem:[%s2617 + $0x158] sm:$0xf]
        %v2705 = vld [vmem:[%s2617 + $0x15c] sm:$0xf]
        %v2706 = vld [vmem:[%s2617 + $0x160] sm:$0xf]
        %v2707 = vld [vmem:[%s2617 + $0x164] sm:$0xf]
        %v2708 = vld [vmem:[%s2617 + $0x168] sm:$0xf]
        %v2709 = vld [vmem:[%s2617 + $0x16c] sm:$0xf]
        %v2710 = vld [vmem:[%s2617 + $0x170] sm:$0xf]
        %v2711 = vld [vmem:[%s2617 + $0x174] sm:$0xf]
        %v2712 = vld [vmem:[%s2617 + $0x178] sm:$0xf]
        %v2713 = vld [vmem:[%s2617 + $0x17c] sm:$0xf]
        %v2714 = vld [vmem:[%s2617 + $0x180] sm:$0xf]
        %v2715 = vld [vmem:[%s2617 + $0x184] sm:$0xf]
        %v2716 = vld [vmem:[%s2617 + $0x188] sm:$0xf]
        %v2717 = vld [vmem:[%s2617 + $0x18c] sm:$0xf]
        %v2718 = vld [vmem:[%s2617 + $0x190] sm:$0xf]
        %v2719 = vld [vmem:[%s2617 + $0x194] sm:$0xf]
        %v2720 = vld [vmem:[%s2617 + $0x198] sm:$0xf]
        %v2721 = vld [vmem:[%s2617 + $0x19c] sm:$0xf]
        %v2722 = vld [vmem:[%s2617 + $0x1a0] sm:$0xf]
        %v2723 = vld [vmem:[%s2617 + $0x1a4] sm:$0xf]
        %v2724 = vld [vmem:[%s2617 + $0x1a8] sm:$0xf]
        %v2725 = vld [vmem:[%s2617 + $0x1ac] sm:$0xf]
        %v2726 = vld [vmem:[%s2617 + $0x1b0] sm:$0xf]
        %v2727 = vld [vmem:[%s2617 + $0x1b4] sm:$0xf]
        %v2728 = vld [vmem:[%s2617 + $0x1b8] sm:$0xf]
        %v2729 = vld [vmem:[%s2617 + $0x1bc] sm:$0xf]
        %v2730 = vld [vmem:[%s2617 + $0x1c0] sm:$0xf]
        %v2731 = vld [vmem:[%s2617 + $0x1c4] sm:$0xf]
        %v2732 = vld [vmem:[%s2617 + $0x1c8] sm:$0xf]
        %v2733 = vld [vmem:[%s2617 + $0x1cc] sm:$0xf]
        %v2734 = vld [vmem:[%s2617 + $0x1d0] sm:$0xf]
        %v2735 = vld [vmem:[%s2617 + $0x1d4] sm:$0xf]
        %v2736 = vld [vmem:[%s2617 + $0x1d8] sm:$0xf]
        %v2737 = vld [vmem:[%s2617 + $0x1dc] sm:$0xf]
        %v2738 = vld [vmem:[%s2617 + $0x1e0] sm:$0xf]
        %v2739 = vld [vmem:[%s2617 + $0x1e4] sm:$0xf]
        %v2740 = vld [vmem:[%s2617 + $0x1e8] sm:$0xf]
        %v2741 = vld [vmem:[%s2617 + $0x1ec] sm:$0xf]
        %v2742 = vld [vmem:[%s2617 + $0x1f0] sm:$0xf]
        %v2743 = vld [vmem:[%s2617 + $0x1f4] sm:$0xf]
        %v2744 = vld [vmem:[%s2617 + $0x1f8] sm:$0xf]
        %v2745 = vld [vmem:[%s2617 + $0x1fc] sm:$0xf]
        %v2746 = vld [vmem:[%s2617 + $0x200] sm:$0xf]
        %v2747 = vld [vmem:[%s2617 + $0x204] sm:$0xf]
        %v2748 = vld [vmem:[%s2617 + $0x208] sm:$0xf]
        %v2749 = vld [vmem:[%s2617 + $0x20c] sm:$0xf]
        %v2750 = vld [vmem:[%s2617 + $0x210] sm:$0xf]
        %v2751 = vld [vmem:[%s2617 + $0x214] sm:$0xf]
        %v2752 = vld [vmem:[%s2617 + $0x218] sm:$0xf]
        %v2753 = vld [vmem:[%s2617 + $0x21c] sm:$0xf]
        %v2754 = vld [vmem:[%s2617 + $0x220] sm:$0xf]
        %v2755 = vld [vmem:[%s2617 + $0x224] sm:$0xf]
        %v2756 = vld [vmem:[%s2617 + $0x228] sm:$0xf]
        %v2757 = vld [vmem:[%s2617 + $0x22c] sm:$0xf]
        %v2758 = vld [vmem:[%s2617 + $0x230] sm:$0xf]
        %v2759 = vld [vmem:[%s2617 + $0x234] sm:$0xf]
        %v2760 = vld [vmem:[%s2617 + $0x238] sm:$0xf]
        %v2761 = vld [vmem:[%s2617 + $0x23c] sm:$0xf]
        %v2906 = vunpack.c.l.b16 %v2618
        %v2907 = vunpack.c.l.b16 %v2619
        %v2908 = vunpack.c.l.b16 %v2620
        %v2909 = vunpack.c.l.b16 %v2621
        %v2910 = vunpack.c.l.b16 %v2622
        %v2911 = vunpack.c.l.b16 %v2623
        %v2912 = vunpack.c.l.b16 %v2624
        %v2913 = vunpack.c.l.b16 %v2625
        %v2914 = vunpack.c.l.b16 %v2626
        %v2915 = vunpack.c.l.b16 %v2627
        %v2916 = vunpack.c.l.b16 %v2628
        %v2917 = vunpack.c.l.b16 %v2629
        %v2918 = vunpack.c.l.b16 %v2630
        %v2919 = vunpack.c.l.b16 %v2631
        %v2920 = vunpack.c.l.b16 %v2632
        %v2921 = vunpack.c.l.b16 %v2633
        %v2922 = vunpack.c.l.b16 %v2634
        %v2923 = vunpack.c.l.b16 %v2635
        %v2924 = vunpack.c.l.b16 %v2636
        %v2925 = vunpack.c.l.b16 %v2637
        %v2926 = vunpack.c.l.b16 %v2638
        %v2927 = vunpack.c.l.b16 %v2639
        %v2928 = vunpack.c.l.b16 %v2640
        %v2929 = vunpack.c.l.b16 %v2641
        %v2930 = vunpack.c.l.b16 %v2642
        %v2931 = vunpack.c.l.b16 %v2643
        %v2932 = vunpack.c.l.b16 %v2644
        %v2933 = vunpack.c.l.b16 %v2645
        %v2934 = vunpack.c.l.b16 %v2646
        %v2935 = vunpack.c.l.b16 %v2647
        %v2936 = vunpack.c.l.b16 %v2648
        %v2937 = vunpack.c.l.b16 %v2649
        %v2938 = vunpack.c.l.b16 %v2650
        %v2939 = vunpack.c.l.b16 %v2651
        %v2940 = vunpack.c.l.b16 %v2652
        %v2941 = vunpack.c.l.b16 %v2653
        %v2942 = vunpack.c.l.b16 %v2654
        %v2943 = vunpack.c.l.b16 %v2655
        %v2944 = vunpack.c.l.b16 %v2656
        %v2945 = vunpack.c.l.b16 %v2657
        %v2946 = vunpack.c.l.b16 %v2658
        %v2947 = vunpack.c.l.b16 %v2659
        %v2948 = vunpack.c.l.b16 %v2660
        %v2949 = vunpack.c.l.b16 %v2661
        %v2950 = vunpack.c.l.b16 %v2662
        %v2951 = vunpack.c.l.b16 %v2663
        %v2952 = vunpack.c.l.b16 %v2664
        %v2953 = vunpack.c.l.b16 %v2665
        %v2954 = vunpack.c.l.b16 %v2666
        %v2955 = vunpack.c.l.b16 %v2667
        %v2956 = vunpack.c.l.b16 %v2668
        %v2957 = vunpack.c.l.b16 %v2669
        %v2958 = vunpack.c.l.b16 %v2670
        %v2959 = vunpack.c.l.b16 %v2671
        %v2960 = vunpack.c.l.b16 %v2672
        %v2961 = vunpack.c.l.b16 %v2673
        %v2962 = vunpack.c.l.b16 %v2674
        %v2963 = vunpack.c.l.b16 %v2675
        %v2964 = vunpack.c.l.b16 %v2676
        %v2965 = vunpack.c.l.b16 %v2677
        %v2966 = vunpack.c.l.b16 %v2678
        %v2967 = vunpack.c.l.b16 %v2679
        %v2968 = vunpack.c.l.b16 %v2680
        %v2969 = vunpack.c.l.b16 %v2681
        %v2970 = vunpack.c.l.b16 %v2682
        %v2971 = vunpack.c.l.b16 %v2683
        %v2972 = vunpack.c.l.b16 %v2684
        %v2973 = vunpack.c.l.b16 %v2685
        %v2974 = vunpack.c.l.b16 %v2686
        %v2975 = vunpack.c.l.b16 %v2687
        %v2976 = vunpack.c.l.b16 %v2688
        %v2977 = vunpack.c.l.b16 %v2689
        %v2978 = vunpack.c.l.b16 %v2690
        %v2979 = vunpack.c.l.b16 %v2691
        %v2980 = vunpack.c.l.b16 %v2692
        %v2981 = vunpack.c.l.b16 %v2693
        %v2982 = vunpack.c.l.b16 %v2694
        %v2983 = vunpack.c.l.b16 %v2695
        %v2984 = vunpack.c.l.b16 %v2696
        %v2985 = vunpack.c.l.b16 %v2697
        %v2986 = vunpack.c.l.b16 %v2698
        %v2987 = vunpack.c.l.b16 %v2699
        %v2988 = vunpack.c.l.b16 %v2700
        %v2989 = vunpack.c.l.b16 %v2701
        %v2990 = vunpack.c.l.b16 %v2702
        %v2991 = vunpack.c.l.b16 %v2703
        %v2992 = vunpack.c.l.b16 %v2704
        %v2993 = vunpack.c.l.b16 %v2705
        %v2994 = vunpack.c.l.b16 %v2706
        %v2995 = vunpack.c.l.b16 %v2707
        %v2996 = vunpack.c.l.b16 %v2708
        %v2997 = vunpack.c.l.b16 %v2709
        %v2998 = vunpack.c.l.b16 %v2710
        %v2999 = vunpack.c.l.b16 %v2711
        %v3000 = vunpack.c.l.b16 %v2712
        %v3001 = vunpack.c.l.b16 %v2713
        %v3002 = vunpack.c.l.b16 %v2714
        %v3003 = vunpack.c.l.b16 %v2715
        %v3004 = vunpack.c.l.b16 %v2716
        %v3005 = vunpack.c.l.b16 %v2717
        %v3006 = vunpack.c.l.b16 %v2718
        %v3007 = vunpack.c.l.b16 %v2719
        %v3008 = vunpack.c.l.b16 %v2720
        %v3009 = vunpack.c.l.b16 %v2721
        %v3010 = vunpack.c.l.b16 %v2722
        %v3011 = vunpack.c.l.b16 %v2723
        %v3012 = vunpack.c.l.b16 %v2724
        %v3013 = vunpack.c.l.b16 %v2725
        %v3014 = vunpack.c.l.b16 %v2726
        %v3015 = vunpack.c.l.b16 %v2727
        %v3016 = vunpack.c.l.b16 %v2728
        %v3017 = vunpack.c.l.b16 %v2729
        %v3018 = vunpack.c.l.b16 %v2730
        %v3019 = vunpack.c.l.b16 %v2731
        %v3020 = vunpack.c.l.b16 %v2732
        %v3021 = vunpack.c.l.b16 %v2733
        %v3022 = vunpack.c.l.b16 %v2734
        %v3023 = vunpack.c.l.b16 %v2735
        %v3024 = vunpack.c.l.b16 %v2736
        %v3025 = vunpack.c.l.b16 %v2737
        %v3026 = vunpack.c.l.b16 %v2738
        %v3027 = vunpack.c.l.b16 %v2739
        %v3028 = vunpack.c.l.b16 %v2740
        %v3029 = vunpack.c.l.b16 %v2741
        %v3030 = vunpack.c.l.b16 %v2742
        %v3031 = vunpack.c.l.b16 %v2743
        %v3032 = vunpack.c.l.b16 %v2744
        %v3033 = vunpack.c.l.b16 %v2745
        %v3034 = vunpack.c.l.b16 %v2746
        %v3035 = vunpack.c.l.b16 %v2747
        %v3036 = vunpack.c.l.b16 %v2748
        %v3037 = vunpack.c.l.b16 %v2749
        %v3038 = vunpack.c.l.b16 %v2750
        %v3039 = vunpack.c.l.b16 %v2751
        %v3040 = vunpack.c.l.b16 %v2752
        %v3041 = vunpack.c.l.b16 %v2753
        %v3042 = vunpack.c.l.b16 %v2754
        %v3043 = vunpack.c.l.b16 %v2755
        %v3044 = vunpack.c.l.b16 %v2756
        %v3045 = vunpack.c.l.b16 %v2757
        %v3046 = vunpack.c.l.b16 %v2758
        %v3047 = vunpack.c.l.b16 %v2759
        %v3048 = vunpack.c.l.b16 %v2760
        %v3049 = vunpack.c.l.b16 %v2761
        %v3050 = vpack.c.b16 %v2907, %v2906
        %v3051 = vpack.c.b16 %v2909, %v2908
        %v3052 = vpack.c.b16 %v2911, %v2910
        %v3053 = vpack.c.b16 %v2913, %v2912
        %v3054 = vpack.c.b16 %v2915, %v2914
        %v3055 = vpack.c.b16 %v2917, %v2916
        %v3056 = vpack.c.b16 %v2919, %v2918
        %v3057 = vpack.c.b16 %v2921, %v2920
        %v3058 = vpack.c.b16 %v2923, %v2922
        %v3059 = vpack.c.b16 %v2925, %v2924
        %v3060 = vpack.c.b16 %v2927, %v2926
        %v3061 = vpack.c.b16 %v2929, %v2928
        %v3062 = vpack.c.b16 %v2931, %v2930
        %v3063 = vpack.c.b16 %v2933, %v2932
        %v3064 = vpack.c.b16 %v2935, %v2934
        %v3065 = vpack.c.b16 %v2937, %v2936
        %v3066 = vpack.c.b16 %v2939, %v2938
        %v3067 = vpack.c.b16 %v2941, %v2940
        %v3068 = vpack.c.b16 %v2943, %v2942
        %v3069 = vpack.c.b16 %v2945, %v2944
        %v3070 = vpack.c.b16 %v2947, %v2946
        %v3071 = vpack.c.b16 %v2949, %v2948
        %v3072 = vpack.c.b16 %v2951, %v2950
        %v3073 = vpack.c.b16 %v2953, %v2952
        %v3074 = vpack.c.b16 %v2955, %v2954
        %v3075 = vpack.c.b16 %v2957, %v2956
        %v3076 = vpack.c.b16 %v2959, %v2958
        %v3077 = vpack.c.b16 %v2961, %v2960
        %v3078 = vpack.c.b16 %v2963, %v2962
        %v3079 = vpack.c.b16 %v2965, %v2964
        %v3080 = vpack.c.b16 %v2967, %v2966
        %v3081 = vpack.c.b16 %v2969, %v2968
        %v3082 = vpack.c.b16 %v2971, %v2970
        %v3083 = vpack.c.b16 %v2973, %v2972
        %v3084 = vpack.c.b16 %v2975, %v2974
        %v3085 = vpack.c.b16 %v2977, %v2976
        %v3086 = vpack.c.b16 %v2979, %v2978
        %v3087 = vpack.c.b16 %v2981, %v2980
        %v3088 = vpack.c.b16 %v2983, %v2982
        %v3089 = vpack.c.b16 %v2985, %v2984
        %v3090 = vpack.c.b16 %v2987, %v2986
        %v3091 = vpack.c.b16 %v2989, %v2988
        %v3092 = vpack.c.b16 %v2991, %v2990
        %v3093 = vpack.c.b16 %v2993, %v2992
        %v3094 = vpack.c.b16 %v2995, %v2994
        %v3095 = vpack.c.b16 %v2997, %v2996
        %v3096 = vpack.c.b16 %v2999, %v2998
        %v3097 = vpack.c.b16 %v3001, %v3000
        %v3098 = vpack.c.b16 %v3003, %v3002
        %v3099 = vpack.c.b16 %v3005, %v3004
        %v3100 = vpack.c.b16 %v3007, %v3006
        %v3101 = vpack.c.b16 %v3009, %v3008
        %v3102 = vpack.c.b16 %v3011, %v3010
        %v3103 = vpack.c.b16 %v3013, %v3012
        %v3104 = vpack.c.b16 %v3015, %v3014
        %v3105 = vpack.c.b16 %v3017, %v3016
        %v3106 = vpack.c.b16 %v3019, %v3018
        %v3107 = vpack.c.b16 %v3021, %v3020
        %v3108 = vpack.c.b16 %v3023, %v3022
        %v3109 = vpack.c.b16 %v3025, %v3024
        %v3110 = vpack.c.b16 %v3027, %v3026
        %v3111 = vpack.c.b16 %v3029, %v3028
        %v3112 = vpack.c.b16 %v3031, %v3030
        %v3113 = vpack.c.b16 %v3033, %v3032
        %v3114 = vpack.c.b16 %v3035, %v3034
        %v3115 = vpack.c.b16 %v3037, %v3036
        %v3116 = vpack.c.b16 %v3039, %v3038
        %v3117 = vpack.c.b16 %v3041, %v3040
        %v3118 = vpack.c.b16 %v3043, %v3042
        %v3119 = vpack.c.b16 %v3045, %v3044
        %v3120 = vpack.c.b16 %v3047, %v3046
        %v3121 = vpack.c.b16 %v3049, %v3048
        %3194 = vmatpush.bf16.msra.mxu0 %v3057
        %3195 = vmatpush.bf16.msra.mxu0 %v3056
        %3196 = vmatpush.bf16.msra.mxu0 %v3055
        %3197 = vmatpush.bf16.msra.mxu0 %v3054
        %3198 = vmatpush.bf16.msra.mxu0 %v3053
        %3199 = vmatpush.bf16.msra.mxu0 %v3052
        %3200 = vmatpush.bf16.msra.mxu0 %v3051
        %3201 = vmatpush.bf16.msra.mxu0 %v3050
        %3202 = vmatmul.bf16.gmra.mxu0 %v2606
        %v3203 = vpop.f32.mrf.mxu0
        %v3204 = vadd.f32 0.0, %v3203
        %v3205 = vpop.f32.mrf.mxu0
        %v3206 = vadd.f32 0.0, %v3205
        %3207 = vdwg.mxu0
        %3208 = vmatpush.bf16.msra.mxu0 %v3065
        %3209 = vmatpush.bf16.msra.mxu0 %v3064
        %3210 = vmatpush.bf16.msra.mxu0 %v3063
        %3211 = vmatpush.bf16.msra.mxu0 %v3062
        %3212 = vmatpush.bf16.msra.mxu0 %v3061
        %3213 = vmatpush.bf16.msra.mxu0 %v3060
        %3214 = vmatpush.bf16.msra.mxu0 %v3059
        %3215 = vmatpush.bf16.msra.mxu0 %v3058
        %3216 = vmatmul.bf16.gmra.mxu0 %v2607
        %v3217 = vpop.f32.mrf.mxu0
        %v3218 = vadd.f32 %v3204, %v3217
        %v3219 = vpop.f32.mrf.mxu0
        %v3220 = vadd.f32 %v3206, %v3219
        %3221 = vdwg.mxu0
        %3222 = vmatpush.bf16.msra.mxu0 %v3073
        %3223 = vmatpush.bf16.msra.mxu0 %v3072
        %3224 = vmatpush.bf16.msra.mxu0 %v3071
        %3225 = vmatpush.bf16.msra.mxu0 %v3070
        %3226 = vmatpush.bf16.msra.mxu0 %v3069
        %3227 = vmatpush.bf16.msra.mxu0 %v3068
        %3228 = vmatpush.bf16.msra.mxu0 %v3067
        %3229 = vmatpush.bf16.msra.mxu0 %v3066
        %3230 = vmatmul.bf16.gmra.mxu0 %v2608
        %v3231 = vpop.f32.mrf.mxu0
        %v3232 = vadd.f32 %v3218, %v3231
        %v3233 = vpop.f32.mrf.mxu0
        %v3234 = vadd.f32 %v3220, %v3233
        %3235 = vdwg.mxu0
        %3236 = vmatpush.bf16.msra.mxu0 %v3081
        %3237 = vmatpush.bf16.msra.mxu0 %v3080
        %3238 = vmatpush.bf16.msra.mxu0 %v3079
        %3239 = vmatpush.bf16.msra.mxu0 %v3078
        %3240 = vmatpush.bf16.msra.mxu0 %v3077
        %3241 = vmatpush.bf16.msra.mxu0 %v3076
        %3242 = vmatpush.bf16.msra.mxu0 %v3075
        %3243 = vmatpush.bf16.msra.mxu0 %v3074
        %3244 = vmatmul.bf16.gmra.mxu0 %v2609
        %v3245 = vpop.f32.mrf.mxu0
        %v3246 = vadd.f32 %v3232, %v3245
        %v3247 = vpop.f32.mrf.mxu0
        %v3248 = vadd.f32 %v3234, %v3247
        %3249 = vdwg.mxu0
        %3250 = vmatpush.bf16.msra.mxu0 %v3089
        %3251 = vmatpush.bf16.msra.mxu0 %v3088
        %3252 = vmatpush.bf16.msra.mxu0 %v3087
        %3253 = vmatpush.bf16.msra.mxu0 %v3086
        %3254 = vmatpush.bf16.msra.mxu0 %v3085
        %3255 = vmatpush.bf16.msra.mxu0 %v3084
        %3256 = vmatpush.bf16.msra.mxu0 %v3083
        %3257 = vmatpush.bf16.msra.mxu0 %v3082
        %3258 = vmatmul.bf16.gmra.mxu0 %v2610
        %v3259 = vpop.f32.mrf.mxu0
        %v3260 = vadd.f32 %v3246, %v3259
        %v3261 = vpop.f32.mrf.mxu0
        %v3262 = vadd.f32 %v3248, %v3261
        %3263 = vdwg.mxu0
        %3264 = vmatpush.bf16.msra.mxu0 %v3097
        %3265 = vmatpush.bf16.msra.mxu0 %v3096
        %3266 = vmatpush.bf16.msra.mxu0 %v3095
        %3267 = vmatpush.bf16.msra.mxu0 %v3094
        %3268 = vmatpush.bf16.msra.mxu0 %v3093
        %3269 = vmatpush.bf16.msra.mxu0 %v3092
        %3270 = vmatpush.bf16.msra.mxu0 %v3091
        %3271 = vmatpush.bf16.msra.mxu0 %v3090
        %3272 = vmatmul.bf16.gmra.mxu0 %v2611
        %v3273 = vpop.f32.mrf.mxu0
        %v3274 = vadd.f32 %v3260, %v3273
        %v3275 = vpop.f32.mrf.mxu0
        %v3276 = vadd.f32 %v3262, %v3275
        %3277 = vdwg.mxu0
        %3278 = vmatpush.bf16.msra.mxu0 %v3105
        %3279 = vmatpush.bf16.msra.mxu0 %v3104
        %3280 = vmatpush.bf16.msra.mxu0 %v3103
        %3281 = vmatpush.bf16.msra.mxu0 %v3102
        %3282 = vmatpush.bf16.msra.mxu0 %v3101
        %3283 = vmatpush.bf16.msra.mxu0 %v3100
        %3284 = vmatpush.bf16.msra.mxu0 %v3099
        %3285 = vmatpush.bf16.msra.mxu0 %v3098
        %3286 = vmatmul.bf16.gmra.mxu0 %v2612
        %v3287 = vpop.f32.mrf.mxu0
        %v3288 = vadd.f32 %v3274, %v3287
        %v3289 = vpop.f32.mrf.mxu0
        %v3290 = vadd.f32 %v3276, %v3289
        %3291 = vdwg.mxu0
        %3292 = vmatpush.bf16.msra.mxu0 %v3113
        %3293 = vmatpush.bf16.msra.mxu0 %v3112
        %3294 = vmatpush.bf16.msra.mxu0 %v3111
        %3295 = vmatpush.bf16.msra.mxu0 %v3110
        %3296 = vmatpush.bf16.msra.mxu0 %v3109
        %3297 = vmatpush.bf16.msra.mxu0 %v3108
        %3298 = vmatpush.bf16.msra.mxu0 %v3107
        %3299 = vmatpush.bf16.msra.mxu0 %v3106
        %3300 = vmatmul.bf16.gmra.mxu0 %v2613
        %v3301 = vpop.f32.mrf.mxu0
        %v3302 = vadd.f32 %v3288, %v3301
        %v3303 = vpop.f32.mrf.mxu0
        %v3304 = vadd.f32 %v3290, %v3303
        %3305 = vdwg.mxu0
        %3306 = vmatpush.bf16.msra.mxu0 %v3121
        %3307 = vmatpush.bf16.msra.mxu0 %v3120
        %3308 = vmatpush.bf16.msra.mxu0 %v3119
        %3309 = vmatpush.bf16.msra.mxu0 %v3118
        %3310 = vmatpush.bf16.msra.mxu0 %v3117
        %3311 = vmatpush.bf16.msra.mxu0 %v3116
        %3312 = vmatpush.bf16.msra.mxu0 %v3115
        %3313 = vmatpush.bf16.msra.mxu0 %v3114
        %3314 = vmatmul.bf16.gmra.mxu0 %v2614
        %v3315 = vpop.f32.mrf.mxu0
        %v3316 = vadd.f32 %v3302, %v3315
        %v3317 = vpop.f32.mrf.mxu0
        %v3318 = vadd.f32 %v3304, %v3317
        %3319 = vdwg.mxu0
        %v3320 = vadd.f32 %v2615, %v3316
        %v3321 = vadd.f32 %v2616, %v3318
        %3322 = vst [vmem:[%s471] sm:$0xff] %v3320
        %3323 = vst [vmem:[%s471 + $0x8] sm:$0xff] %v3321
      $region60: #{preact_bottleneck.6} parent=47 // pred_fallthru
        _
      %v3324 = vld [vmem:[%s471] sm:$0xff]
      %v3325 = vld [vmem:[%s471 + $0x8] sm:$0xff]
      %v3326 = vld [vmem:[%s6] sm:$0x1]
      %v3328 = vperm.slane %v3326, 0
      %v3330 = vadd.f32 %v3324, %v3328
      %v3331 = vadd.f32 %v3325, %v3328
      %3332 = vst [vmem:[%s471] sm:$0xff] %v3330
      %3333 = vst [vmem:[%s471 + $0x8] sm:$0xff] %v3331
      %v3334 = vadd.f32 %v3330, %v3331
      %v3335 = vrot.slane %v3334, 4
      %v3336 = vadd.f32 %v3334, %v3335
      %v3337 = vrot.slane %v3336, 2
      %v3338 = vadd.f32 %v3336, %v3337
      %v3339 = vrot.slane %v3338, 1
      %v3340 = vadd.f32 %v3338, %v3339
      %3341 = vst [vmem:[%s479] sm:$0x1] %v3340
      %v3342 = vmul.f32 %v3330, %v3330
      %v3343 = vmul.f32 %v3331, %v3331
      %v3344 = vadd.f32 %v3342, %v3343
      %v3345 = vrot.slane %v3344, 4
      %v3346 = vadd.f32 %v3344, %v3345
      %v3347 = vrot.slane %v3346, 2
      %v3348 = vadd.f32 %v3346, %v3347
      %v3349 = vrot.slane %v3348, 1
      %v3350 = vadd.f32 %v3348, %v3349
      %3351 = vst [vmem:[%s486] sm:$0x1] %v3350
      %s3352 = smul.u32 %s25, 4
      %s3353 = sadd.s32 %s3352, %s26
      %s3354 = smul.u32 2, %s3353
      %p3355 = scmp.lt.s32.totalorder %s3354, 15
      %s3356 = scalar_select %p3355, %s3354, 15
      %s3357 = smul.addr %s3356, 8
      %s3358 = scalar_lea.vmem %s7, %s3357
      %s3359 = smul.u32 %s25, 4
      %s3360 = sadd.s32 %s3359, %s26
      %p3361 = scmp.lt.s32.totalorder %s3360, 7
      %s3362 = scalar_select %p3361, %s3360, 7
      %s3363 = scalar_lea.vmem %s8, %s3362
      %s3364 = smul.u32 %s25, 4
      %s3365 = sadd.s32 %s3364, %s26
      %p3366 = scmp.lt.s32.totalorder %s3365, 7
      %s3367 = scalar_select %p3366, %s3365, 7
      %s3368 = scalar_lea.vmem %s9, %s3367
      // Predicated region
      $region61: #{preact_bottleneck.6} parent=47 // pred_check
        %p3369 = pneg %p233
      $region62: #{preact_bottleneck.6} parent=47 // pred_check_branch
        %3371 = sbr.rel (%p3369) target = $region64
      $region63: #{preact_bottleneck.6} parent=47 // pred_region
        %s3372 = smul.u32 %s25, 4
        %s3373 = sadd.s32 %s3372, %s26
        %s3374 = smul.u32 2, %s3373
      $region64: #{preact_bottleneck.6} parent=47 // pred_fallthru
        _
      // Predicated region
      $region65: #{preact_bottleneck.6} parent=47 // pred_check
        %p3375 = pneg %p263
      $region66: #{preact_bottleneck.6} parent=47 // pred_check_branch
        %3377 = sbr.rel (%p3375) target = $region68
      $region67: #{preact_bottleneck.6} parent=47 // pred_region
        %s3378 = smul.u32 %s25, 4
        %s3379 = sadd.s32 %s3378, %s26
      $region68: #{preact_bottleneck.6} parent=47 // pred_fallthru
        _
      // Predicated region
      $region69: #{preact_bottleneck.6} parent=47 // pred_check
        %p3380 = pneg %p293
      $region70: #{preact_bottleneck.6} parent=47 // pred_check_branch
        %3382 = sbr.rel (%p3380) target = $region72
      $region71: #{preact_bottleneck.6} parent=47 // pred_region
        %s3383 = smul.u32 %s25, 4
        %s3384 = sadd.s32 %s3383, %s26
      $region72: #{preact_bottleneck.6} parent=47 // pred_fallthru
        _
    $region48: #{preact_bottleneck.6} parent=5 // pred_fallthru
      _
    %p3385 = scmp.le.s32.totalorder 2, %s16
    // Predicated region
    $region73: #{preact_bottleneck.6} parent=5 // pred_check
      %p3386 = pneg %p3385
    $region74: #{preact_bottleneck.6} parent=5 // pred_check_branch
      %3388 = sbr.rel (%p3386) target = $region76
    $region75: #{preact_bottleneck.6} parent=5 // pred_region
      %s3389 = ssub.s32 %s16, 2
      // Predicated region
      $region77: #{preact_bottleneck.6} parent=75 // pred_check
        %p3390 = pneg %p239
      $region78: #{preact_bottleneck.6} parent=75 // pred_check_branch
        %3392 = sbr.rel (%p3390) target = $region80
      $region79: #{preact_bottleneck.6} parent=75 // pred_region
        %s3393 = smul.u32 %s27, 4
        %s3394 = sadd.s32 %s3393, %s28
        %s3395 = smul.u32 2, %s3394
        %p3396 = scmp.lt.s32.totalorder %s3395, 15
        %s3397 = scalar_select %p3396, %s3395, 15
        %s3398 = smul.addr %s3397, 8
        %s3399 = scalar_lea.vmem %s7, %s3398
      $region80: #{preact_bottleneck.6} parent=75 // pred_fallthru
        _
      // Predicated region
      $region81: #{preact_bottleneck.6} parent=75 // pred_check
        %p3400 = pneg %p269
      $region82: #{preact_bottleneck.6} parent=75 // pred_check_branch
        %3402 = sbr.rel (%p3400) target = $region84
      $region83: #{preact_bottleneck.6} parent=75 // pred_region
        %s3403 = smul.u32 %s27, 4
        %s3404 = sadd.s32 %s3403, %s28
        %p3405 = scmp.lt.s32.totalorder %s3404, 7
        %s3406 = scalar_select %p3405, %s3404, 7
        %s3407 = scalar_lea.vmem %s8, %s3406
      $region84: #{preact_bottleneck.6} parent=75 // pred_fallthru
        _
      // Predicated region
      $region85: #{preact_bottleneck.6} parent=75 // pred_check
        %p3408 = pneg %p299
      $region86: #{preact_bottleneck.6} parent=75 // pred_check_branch
        %3410 = sbr.rel (%p3408) target = $region88
      $region87: #{preact_bottleneck.6} parent=75 // pred_region
        %s3411 = smul.u32 %s27, 4
        %s3412 = sadd.s32 %s3411, %s28
        %p3413 = scmp.lt.s32.totalorder %s3412, 7
        %s3414 = scalar_select %p3413, %s3412, 7
        %s3415 = scalar_lea.vmem %s9, %s3414
      $region88: #{preact_bottleneck.6} parent=75 // pred_fallthru
        _
    $region76: #{preact_bottleneck.6} parent=5 // pred_fallthru
      _
  $region6: #{preact_bottleneck.6} parent=0 // loop_footer
    %s20 = sadd.s32 1, %s16
  $region7: #{preact_bottleneck.6} parent=0 // loop_footer_branch
    %15 = sbr.rel target = $region3
  $region8: #{preact_bottleneck.6} parent=0 // loop_exit
    _

</llo_original>
